<compile_context>
chip_gen: v6e
topology: v6e:2x2x1
jax: 0.10.0
libtpu: 0.0.40
codegen_flags: <defaults>
</compile_context>

<pallas_src>
import functools

import numpy as np
import jax
import jax.numpy as jnp
from jax.experimental import pallas as pl
from jax.experimental.pallas import tpu as pltpu

EPS = 1e-5  # BatchNorm2d default eps


# --------------------------------------------------------------------------
# Fused Pallas kernel: one grid step = one batch image, everything in VMEM.
# --------------------------------------------------------------------------
def _residual_block_kernel(*refs, H, W, Ho, Wo, Ci, Co, stride, has_sc_conv):
    it = iter(refs)
    x_ref = next(it)        # (H+2, W+2, Ci)   spatially zero-padded input
    w1_ref = next(it)       # (9, Ci, Co)      conv1 weights, BN1 scale folded
    b1_ref = next(it)       # (1, Co)          BN1 folded bias
    w2_ref = next(it)       # (9, Co, Co)      conv2 weights, BN2 scale folded
    b2_ref = next(it)       # (1, Co)          BN2 folded bias
    sel_ref = next(it) if stride != 1 else None   # (Ho*Wo, H*W) 0/1 subsample
    if has_sc_conv:
        wsc_ref = next(it)  # (Ci, Co)         1x1 shortcut weights (scaled)
        bsc_ref = next(it)  # (1, Co)          shortcut BN folded bias
    o_ref = next(it)        # (Ho, Wo, Co)     block output
    pad_ref = next(it)      # (Ho+2, Wo+2, Co) VMEM scratch: conv2 halo tile

    f32 = jnp.float32

    # ---- conv1 (3x3, pad 1) at stride 1; BN1 scale is pre-folded into w1 ----
    acc1 = jnp.zeros((H * W, Co), f32)
    for kh in range(3):
        for kw in range(3):
            t = x_ref[kh:kh + H, kw:kw + W, :].reshape(H * W, Ci)
            acc1 = acc1 + jnp.dot(t, w1_ref[kh * 3 + kw],
                                  preferred_element_type=f32)
    out1 = jnp.maximum(acc1 + b1_ref[...], 0.0)         # BN1 bias + ReLU

    # ---- stride-s subsample via one 0/1 selection matmul (BN/ReLU commute
    #      with subsampling; avoids strided slices in-kernel). ----
    if stride != 1:
        sel = sel_ref[...]                              # (Ho*Wo, H*W)
        out1 = jnp.dot(sel, out1, preferred_element_type=f32)

    # ---- conv2 input: zero halo + conv1 output, kept entirely in VMEM ----
    pad_ref[...] = jnp.zeros_like(pad_ref)
    pad_ref[1:Ho + 1, 1:Wo + 1, :] = out1.reshape(Ho, Wo, Co)

    # ---- conv2 (3x3, stride 1, pad 1); BN2 scale pre-folded into w2 ----
    acc2 = jnp.zeros((Ho * Wo, Co), f32)
    for kh in range(3):
        for kw in range(3):
            t = pad_ref[kh:kh + Ho, kw:kw + Wo, :].reshape(Ho * Wo, Co)
            acc2 = acc2 + jnp.dot(t, w2_ref[kh * 3 + kw],
                                  preferred_element_type=f32)
    y = acc2 + b2_ref[...]

    # ---- shortcut (identity, or 1x1 conv + BN), from the same in-VMEM
    #      input block: no extra HBM stream, no lane padding ----
    res = x_ref[1:H + 1, 1:W + 1, :].reshape(H * W, Ci)
    if stride != 1:
        res = jnp.dot(sel, res, preferred_element_type=f32)
    if has_sc_conv:
        res = jnp.dot(res, wsc_ref[...],
                      preferred_element_type=f32) + bsc_ref[...]
    y = y + res

    # ---- residual add + final ReLU ----
    o_ref[...] = jnp.maximum(y, 0.0).reshape(Ho, Wo, Co).astype(o_ref.dtype)


# --------------------------------------------------------------------------
# JAX glue: BN folding (f32, before any matmul), layout prep, pallas_call
# --------------------------------------------------------------------------
def _fold_conv_bn(w_oihw, bn):
    """Fold eval-mode BN scale into conv weights (f32).

    Returns per-tap weight matrices (KH*KW, I, O) matching the kernel's
    tap order, and the remaining additive bias (1, O)."""
    gamma, beta, mean, var = bn
    scale = gamma / jnp.sqrt(var + EPS)                  # (O,)
    bias = (beta - mean * scale).reshape(1, -1)          # (1, O)
    o, i, kh, kw = w_oihw.shape
    wm = jnp.transpose(w_oihw, (2, 3, 1, 0)).reshape(kh * kw, i, o)
    wm = wm * scale[None, None, :]                       # fold BEFORE any cast
    return wm.astype(jnp.float32), bias.astype(jnp.float32)


@functools.partial(jax.jit, static_argnames=("stride",))
def residual_block_forward(x_nchw, params, stride):
    n, ci, h, w = x_nchw.shape
    co = params["w1"].shape[0]
    ho = (h + 2 - 3) // stride + 1
    wo = (w + 2 - 3) // stride + 1
    has_sc_conv = (stride != 1) or (ci != co)

    # NCHW -> NHWC plus a 1-pixel spatial zero halo for conv1.  This is the
    # only wrapper-side data movement (no im2col materialization).
    x = jnp.transpose(x_nchw, (0, 2, 3, 1)).astype(jnp.float32)
    xp = jnp.pad(x, ((0, 0), (1, 1), (1, 1), (0, 0)))

    w1, b1 = _fold_conv_bn(params["w1"], params["bn1"])   # (9,ci,co), (1,co)
    w2, b2 = _fold_conv_bn(params["w2"], params["bn2"])   # (9,co,co), (1,co)

    args = [xp, w1, b1, w2, b2]
    in_specs = [
        pl.BlockSpec((None, h + 2, w + 2, ci), lambda b: (b, 0, 0, 0)),
        pl.BlockSpec((9, ci, co), lambda b: (0, 0, 0)),
        pl.BlockSpec((1, co), lambda b: (0, 0)),
        pl.BlockSpec((9, co, co), lambda b: (0, 0, 0)),
        pl.BlockSpec((1, co), lambda b: (0, 0)),
    ]
    flops = n * (2 * h * w * 9 * ci * co + 2 * ho * wo * 9 * co * co)

    if stride != 1:
        # 0/1 row-selection matrix mapping the stride-1 conv1 output rows (and
        # the shortcut input rows) onto the strided output grid.  Tiny and
        # batch-invariant -> stays resident in VMEM across grid steps.
        src = (jnp.arange(ho)[:, None] * (stride * w)
               + jnp.arange(wo)[None, :] * stride).reshape(-1)        # (ho*wo,)
        sel = (src[:, None] == jnp.arange(h * w)[None, :]).astype(jnp.float32)
        args.append(sel)
        in_specs.append(pl.BlockSpec((ho * wo, h * w), lambda b: (0, 0)))
        flops += n * 2 * ho * wo * h * w * (co + (ci if has_sc_conv else 0))

    if has_sc_conv:
        wsc, bsc = _fold_conv_bn(params["wsc"], params["bnsc"])  # (1,ci,co)
        args += [wsc.reshape(ci, co), bsc]
        in_specs += [
            pl.BlockSpec((ci, co), lambda b: (0, 0)),
            pl.BlockSpec((1, co), lambda b: (0, 0)),
        ]
        flops += n * 2 * ho * wo * ci * co

    kernel = functools.partial(
        _residual_block_kernel, H=h, W=w, Ho=ho, Wo=wo, Ci=ci, Co=co,
        stride=stride, has_sc_conv=has_sc_conv)

    bytes_accessed = sum(int(a.size) * a.dtype.itemsize for a in args)
    bytes_accessed += n * ho * wo * co * 4  # f32 output

    out = pl.pallas_call(
        kernel,
        out_shape=jax.ShapeDtypeStruct((n, ho, wo, co), jnp.float32),
        grid=(n,),                                    # >= 2 steps for batch>=2
        in_specs=in_specs,
        out_specs=pl.BlockSpec((None, ho, wo, co), lambda b: (b, 0, 0, 0)),
        scratch_shapes=[pltpu.VMEM((ho + 2, wo + 2, co), jnp.float32)],
        compiler_params=pltpu.CompilerParams(
            dimension_semantics=("parallel",)),
        cost_estimate=pl.CostEstimate(flops=flops, transcendentals=0,
                                      bytes_accessed=bytes_accessed),
    )(*args)
    return jnp.transpose(out, (0, 3, 1, 2))           # NHWC -> NCHW


# --------------------------------------------------------------------------
# Deterministic parameter init (synthetic; shapes from the module __init__)
# --------------------------------------------------------------------------
def init_params(key, inchannel, outchannel, stride):
    ks = jax.random.split(key, 6)

    def bn_params(k):
        k1, k2, k3, k4 = jax.random.split(k, 4)
        gamma = jax.random.uniform(k1, (outchannel,), jnp.float32, 0.5, 1.5)
        beta = jax.random.normal(k2, (outchannel,), jnp.float32) * 0.1
        mean = jax.random.normal(k3, (outchannel,), jnp.float32) * 0.1
        var = jax.random.uniform(k4, (outchannel,), jnp.float32, 0.5, 1.5)
        return (gamma, beta, mean, var)

    params = {
        "w1": jax.random.normal(ks[0], (outchannel, inchannel, 3, 3),
                                jnp.float32) * 0.2,
        "bn1": bn_params(ks[1]),
        "w2": jax.random.normal(ks[2], (outchannel, outchannel, 3, 3),
                                jnp.float32) * 0.2,
        "bn2": bn_params(ks[3]),
    }
    if stride != 1 or inchannel != outchannel:
        params["wsc"] = jax.random.normal(ks[4], (outchannel, inchannel, 1, 1),
                                          jnp.float32) * 0.2
        params["bnsc"] = bn_params(ks[5])
    return params


# --------------------------------------------------------------------------
# Pure-JAX reference (lax.conv, f32) for correctness check
# --------------------------------------------------------------------------
def ref_forward(x, params, stride):
    def conv(x, w, s, p):
        return jax.lax.conv_general_dilated(
            x, w, (s, s), ((p, p), (p, p)),
            dimension_numbers=("NCHW", "OIHW", "NCHW"))

    def bn(x, bnp):
        g, b, m, v = bnp
        s = g / jnp.sqrt(v + EPS)
        return x * s[None, :, None, None] + (b - m * s)[None, :, None, None]

    out = jnp.maximum(bn(conv(x, params["w1"], stride, 1), params["bn1"]), 0.0)
    out = bn(conv(out, params["w2"], 1, 1), params["bn2"])
    inch, outch = x.shape[1], params["w1"].shape[0]
    if stride != 1 or inch != outch:
        sc = bn(conv(x, params["wsc"], stride, 0), params["bnsc"])
    else:
        sc = x
    return jnp.maximum(out + sc, 0.0)


if __name__ == "__main__":
    key = jax.random.PRNGKey(0)

    # Config A: downsampling block (stride=2, 4 -> 8 channels) -> conv shortcut
    kx, kp, key = jax.random.split(key, 3)
    x_a = jax.random.normal(kx, (2, 4, 16, 16), jnp.float32)   # NCHW
    params_a = init_params(kp, inchannel=4, outchannel=8, stride=2)
    out_a = jax.block_until_ready(residual_block_forward(x_a, params_a, stride=2))
    ref_a = ref_forward(x_a, params_a, 2)
    np.testing.assert_allclose(np.asarray(out_a), np.asarray(ref_a),
                               rtol=2e-2, atol=5e-2)

    # Config B: identity shortcut (stride=1, same channels)
    kx, kp = jax.random.split(key, 2)
    x_b = jax.random.normal(kx, (2, 8, 16, 16), jnp.float32)   # NCHW
    params_b = init_params(kp, inchannel=8, outchannel=8, stride=1)
    out_b = jax.block_until_ready(residual_block_forward(x_b, params_b, stride=1))
    ref_b = ref_forward(x_b, params_b, 1)
    np.testing.assert_allclose(np.asarray(out_b), np.asarray(ref_b),
                               rtol=2e-2, atol=5e-2)

    assert out_a.shape == (2, 8, 8, 8) and out_b.shape == (2, 8, 16, 16)
    print("KERNEL_OK")
</pallas_src>

<mosaic_0001>
module attributes {stable_mosaic.version = 11 : i64} {
  func.func @_residual_block_kernel(%arg0: i32, %arg1: memref<1x18x18x4xf32, #tpu.memory_space<vmem>>, %arg2: memref<9x4x8xf32, #tpu.memory_space<vmem>>, %arg3: memref<1x8xf32, #tpu.memory_space<vmem>>, %arg4: memref<9x8x8xf32, #tpu.memory_space<vmem>>, %arg5: memref<1x8xf32, #tpu.memory_space<vmem>>, %arg6: memref<64x256xf32, #tpu.memory_space<vmem>>, %arg7: memref<4x8xf32, #tpu.memory_space<vmem>>, %arg8: memref<1x8xf32, #tpu.memory_space<vmem>>, %arg9: memref<1x8x8x8xf32, #tpu.memory_space<vmem>>, %arg10: memref<10x10x8xf32, #tpu.memory_space<vmem>>) attributes {dimension_semantics = [#tpu.dimension_semantics<parallel>], iteration_bounds = array<i64: 2>, scalar_prefetch = 0 : i64, scratch_operands = 1 : i64, tpu.core_type = #tpu.core_type<tc>, window_params = [{transform_indices = @transform_0, window_bounds = array<i64: 1, 18, 18, 4>}, {pipeline_mode = #tpu.pipeline_mode<synchronous>, transform_indices = @transform_1, window_bounds = array<i64: 9, 4, 8>}, {pipeline_mode = #tpu.pipeline_mode<synchronous>, transform_indices = @transform_2, window_bounds = array<i64: 1, 8>}, {pipeline_mode = #tpu.pipeline_mode<synchronous>, transform_indices = @transform_3, window_bounds = array<i64: 9, 8, 8>}, {pipeline_mode = #tpu.pipeline_mode<synchronous>, transform_indices = @transform_4, window_bounds = array<i64: 1, 8>}, {pipeline_mode = #tpu.pipeline_mode<synchronous>, transform_indices = @transform_5, window_bounds = array<i64: 64, 256>}, {pipeline_mode = #tpu.pipeline_mode<synchronous>, transform_indices = @transform_6, window_bounds = array<i64: 4, 8>}, {pipeline_mode = #tpu.pipeline_mode<synchronous>, transform_indices = @transform_7, window_bounds = array<i64: 1, 8>}, {transform_indices = @transform_8, window_bounds = array<i64: 1, 8, 8, 8>}]} {
    %cst = arith.constant 0.000000e+00 : f32
    %0 = vector.broadcast %cst : f32 to vector<256x8xf32>
    %c0 = arith.constant 0 : index
    %c0_0 = arith.constant 0 : index
    %c0_1 = arith.constant 0 : index
    %c0_2 = arith.constant 0 : index
    %1 = vector.load %arg1[%c0, %c0_0, %c0_1, %c0_2] : memref<1x18x18x4xf32, #tpu.memory_space<vmem>>, vector<1x16x16x4xf32>
    %2 = vector.shape_cast %1 : vector<1x16x16x4xf32> to vector<16x16x4xf32>
    %3 = vector.shape_cast %2 : vector<16x16x4xf32> to vector<256x4xf32>
    %c0_3 = arith.constant 0 : index
    %c0_4 = arith.constant 0 : index
    %c0_5 = arith.constant 0 : index
    %4 = vector.load %arg2[%c0_3, %c0_4, %c0_5] : memref<9x4x8xf32, #tpu.memory_space<vmem>>, vector<1x4x8xf32>
    %5 = vector.shape_cast %4 : vector<1x4x8xf32> to vector<4x8xf32>
    %cst_6 = arith.constant dense<0.000000e+00> : vector<256x8xf32>
    %6 = tpu.matmul %3, %5, %cst_6 {dimension_numbers = #tpu.dot_dimension_numbers<[1], [0], [0], [1], [0, 0, 1, 1], [], []>} : vector<256x4xf32>, vector<4x8xf32>, vector<256x8xf32> -> vector<256x8xf32>
    %7 = arith.addf %0, %6 : vector<256x8xf32>
    %c0_7 = arith.constant 0 : index
    %c0_8 = arith.constant 0 : index
    %c1 = arith.constant 1 : index
    %c0_9 = arith.constant 0 : index
    %8 = vector.load %arg1[%c0_7, %c0_8, %c1, %c0_9] : memref<1x18x18x4xf32, #tpu.memory_space<vmem>>, vector<1x16x16x4xf32>
    %9 = vector.shape_cast %8 : vector<1x16x16x4xf32> to vector<16x16x4xf32>
    %10 = vector.shape_cast %9 : vector<16x16x4xf32> to vector<256x4xf32>
    %c1_10 = arith.constant 1 : index
    %c0_11 = arith.constant 0 : index
    %c0_12 = arith.constant 0 : index
    %11 = vector.load %arg2[%c1_10, %c0_11, %c0_12] : memref<9x4x8xf32, #tpu.memory_space<vmem>>, vector<1x4x8xf32>
    %12 = vector.shape_cast %11 : vector<1x4x8xf32> to vector<4x8xf32>
    %cst_13 = arith.constant dense<0.000000e+00> : vector<256x8xf32>
    %13 = tpu.matmul %10, %12, %cst_13 {dimension_numbers = #tpu.dot_dimension_numbers<[1], [0], [0], [1], [0, 0, 1, 1], [], []>} : vector<256x4xf32>, vector<4x8xf32>, vector<256x8xf32> -> vector<256x8xf32>
    %14 = arith.addf %7, %13 : vector<256x8xf32>
    %c0_14 = arith.constant 0 : index
    %c0_15 = arith.constant 0 : index
    %c2 = arith.constant 2 : index
    %c0_16 = arith.constant 0 : index
    %15 = vector.load %arg1[%c0_14, %c0_15, %c2, %c0_16] : memref<1x18x18x4xf32, #tpu.memory_space<vmem>>, vector<1x16x16x4xf32>
    %16 = vector.shape_cast %15 : vector<1x16x16x4xf32> to vector<16x16x4xf32>
    %17 = vector.shape_cast %16 : vector<16x16x4xf32> to vector<256x4xf32>
    %c2_17 = arith.constant 2 : index
    %c0_18 = arith.constant 0 : index
    %c0_19 = arith.constant 0 : index
    %18 = vector.load %arg2[%c2_17, %c0_18, %c0_19] : memref<9x4x8xf32, #tpu.memory_space<vmem>>, vector<1x4x8xf32>
    %19 = vector.shape_cast %18 : vector<1x4x8xf32> to vector<4x8xf32>
    %cst_20 = arith.constant dense<0.000000e+00> : vector<256x8xf32>
    %20 = tpu.matmul %17, %19, %cst_20 {dimension_numbers = #tpu.dot_dimension_numbers<[1], [0], [0], [1], [0, 0, 1, 1], [], []>} : vector<256x4xf32>, vector<4x8xf32>, vector<256x8xf32> -> vector<256x8xf32>
    %21 = arith.addf %14, %20 : vector<256x8xf32>
    %c0_21 = arith.constant 0 : index
    %c1_22 = arith.constant 1 : index
    %c0_23 = arith.constant 0 : index
    %c0_24 = arith.constant 0 : index
    %22 = vector.load %arg1[%c0_21, %c1_22, %c0_23, %c0_24] : memref<1x18x18x4xf32, #tpu.memory_space<vmem>>, vector<1x16x16x4xf32>
    %23 = vector.shape_cast %22 : vector<1x16x16x4xf32> to vector<16x16x4xf32>
    %24 = vector.shape_cast %23 : vector<16x16x4xf32> to vector<256x4xf32>
    %c3 = arith.constant 3 : index
    %c0_25 = arith.constant 0 : index
    %c0_26 = arith.constant 0 : index
    %25 = vector.load %arg2[%c3, %c0_25, %c0_26] : memref<9x4x8xf32, #tpu.memory_space<vmem>>, vector<1x4x8xf32>
    %26 = vector.shape_cast %25 : vector<1x4x8xf32> to vector<4x8xf32>
    %cst_27 = arith.constant dense<0.000000e+00> : vector<256x8xf32>
    %27 = tpu.matmul %24, %26, %cst_27 {dimension_numbers = #tpu.dot_dimension_numbers<[1], [0], [0], [1], [0, 0, 1, 1], [], []>} : vector<256x4xf32>, vector<4x8xf32>, vector<256x8xf32> -> vector<256x8xf32>
    %28 = arith.addf %21, %27 : vector<256x8xf32>
    %c0_28 = arith.constant 0 : index
    %c1_29 = arith.constant 1 : index
    %c1_30 = arith.constant 1 : index
    %c0_31 = arith.constant 0 : index
    %29 = vector.load %arg1[%c0_28, %c1_29, %c1_30, %c0_31] : memref<1x18x18x4xf32, #tpu.memory_space<vmem>>, vector<1x16x16x4xf32>
    %30 = vector.shape_cast %29 : vector<1x16x16x4xf32> to vector<16x16x4xf32>
    %31 = vector.shape_cast %30 : vector<16x16x4xf32> to vector<256x4xf32>
    %c4 = arith.constant 4 : index
    %c0_32 = arith.constant 0 : index
    %c0_33 = arith.constant 0 : index
    %32 = vector.load %arg2[%c4, %c0_32, %c0_33] : memref<9x4x8xf32, #tpu.memory_space<vmem>>, vector<1x4x8xf32>
    %33 = vector.shape_cast %32 : vector<1x4x8xf32> to vector<4x8xf32>
    %cst_34 = arith.constant dense<0.000000e+00> : vector<256x8xf32>
    %34 = tpu.matmul %31, %33, %cst_34 {dimension_numbers = #tpu.dot_dimension_numbers<[1], [0], [0], [1], [0, 0, 1, 1], [], []>} : vector<256x4xf32>, vector<4x8xf32>, vector<256x8xf32> -> vector<256x8xf32>
    %35 = arith.addf %28, %34 : vector<256x8xf32>
    %c0_35 = arith.constant 0 : index
    %c1_36 = arith.constant 1 : index
    %c2_37 = arith.constant 2 : index
    %c0_38 = arith.constant 0 : index
    %36 = vector.load %arg1[%c0_35, %c1_36, %c2_37, %c0_38] : memref<1x18x18x4xf32, #tpu.memory_space<vmem>>, vector<1x16x16x4xf32>
    %37 = vector.shape_cast %36 : vector<1x16x16x4xf32> to vector<16x16x4xf32>
    %38 = vector.shape_cast %37 : vector<16x16x4xf32> to vector<256x4xf32>
    %c5 = arith.constant 5 : index
    %c0_39 = arith.constant 0 : index
    %c0_40 = arith.constant 0 : index
    %39 = vector.load %arg2[%c5, %c0_39, %c0_40] : memref<9x4x8xf32, #tpu.memory_space<vmem>>, vector<1x4x8xf32>
    %40 = vector.shape_cast %39 : vector<1x4x8xf32> to vector<4x8xf32>
    %cst_41 = arith.constant dense<0.000000e+00> : vector<256x8xf32>
    %41 = tpu.matmul %38, %40, %cst_41 {dimension_numbers = #tpu.dot_dimension_numbers<[1], [0], [0], [1], [0, 0, 1, 1], [], []>} : vector<256x4xf32>, vector<4x8xf32>, vector<256x8xf32> -> vector<256x8xf32>
    %42 = arith.addf %35, %41 : vector<256x8xf32>
    %c0_42 = arith.constant 0 : index
    %c2_43 = arith.constant 2 : index
    %c0_44 = arith.constant 0 : index
    %c0_45 = arith.constant 0 : index
    %43 = vector.load %arg1[%c0_42, %c2_43, %c0_44, %c0_45] : memref<1x18x18x4xf32, #tpu.memory_space<vmem>>, vector<1x16x16x4xf32>
    %44 = vector.shape_cast %43 : vector<1x16x16x4xf32> to vector<16x16x4xf32>
    %45 = vector.shape_cast %44 : vector<16x16x4xf32> to vector<256x4xf32>
    %c6 = arith.constant 6 : index
    %c0_46 = arith.constant 0 : index
    %c0_47 = arith.constant 0 : index
    %46 = vector.load %arg2[%c6, %c0_46, %c0_47] : memref<9x4x8xf32, #tpu.memory_space<vmem>>, vector<1x4x8xf32>
    %47 = vector.shape_cast %46 : vector<1x4x8xf32> to vector<4x8xf32>
    %cst_48 = arith.constant dense<0.000000e+00> : vector<256x8xf32>
    %48 = tpu.matmul %45, %47, %cst_48 {dimension_numbers = #tpu.dot_dimension_numbers<[1], [0], [0], [1], [0, 0, 1, 1], [], []>} : vector<256x4xf32>, vector<4x8xf32>, vector<256x8xf32> -> vector<256x8xf32>
    %49 = arith.addf %42, %48 : vector<256x8xf32>
    %c0_49 = arith.constant 0 : index
    %c2_50 = arith.constant 2 : index
    %c1_51 = arith.constant 1 : index
    %c0_52 = arith.constant 0 : index
    %50 = vector.load %arg1[%c0_49, %c2_50, %c1_51, %c0_52] : memref<1x18x18x4xf32, #tpu.memory_space<vmem>>, vector<1x16x16x4xf32>
    %51 = vector.shape_cast %50 : vector<1x16x16x4xf32> to vector<16x16x4xf32>
    %52 = vector.shape_cast %51 : vector<16x16x4xf32> to vector<256x4xf32>
    %c7 = arith.constant 7 : index
    %c0_53 = arith.constant 0 : index
    %c0_54 = arith.constant 0 : index
    %53 = vector.load %arg2[%c7, %c0_53, %c0_54] : memref<9x4x8xf32, #tpu.memory_space<vmem>>, vector<1x4x8xf32>
    %54 = vector.shape_cast %53 : vector<1x4x8xf32> to vector<4x8xf32>
    %cst_55 = arith.constant dense<0.000000e+00> : vector<256x8xf32>
    %55 = tpu.matmul %52, %54, %cst_55 {dimension_numbers = #tpu.dot_dimension_numbers<[1], [0], [0], [1], [0, 0, 1, 1], [], []>} : vector<256x4xf32>, vector<4x8xf32>, vector<256x8xf32> -> vector<256x8xf32>
    %56 = arith.addf %49, %55 : vector<256x8xf32>
    %c0_56 = arith.constant 0 : index
    %c2_57 = arith.constant 2 : index
    %c2_58 = arith.constant 2 : index
    %c0_59 = arith.constant 0 : index
    %57 = vector.load %arg1[%c0_56, %c2_57, %c2_58, %c0_59] : memref<1x18x18x4xf32, #tpu.memory_space<vmem>>, vector<1x16x16x4xf32>
    %58 = vector.shape_cast %57 : vector<1x16x16x4xf32> to vector<16x16x4xf32>
    %59 = vector.shape_cast %58 : vector<16x16x4xf32> to vector<256x4xf32>
    %c8 = arith.constant 8 : index
    %c0_60 = arith.constant 0 : index
    %c0_61 = arith.constant 0 : index
    %60 = vector.load %arg2[%c8, %c0_60, %c0_61] : memref<9x4x8xf32, #tpu.memory_space<vmem>>, vector<1x4x8xf32>
    %61 = vector.shape_cast %60 : vector<1x4x8xf32> to vector<4x8xf32>
    %cst_62 = arith.constant dense<0.000000e+00> : vector<256x8xf32>
    %62 = tpu.matmul %59, %61, %cst_62 {dimension_numbers = #tpu.dot_dimension_numbers<[1], [0], [0], [1], [0, 0, 1, 1], [], []>} : vector<256x4xf32>, vector<4x8xf32>, vector<256x8xf32> -> vector<256x8xf32>
    %63 = arith.addf %56, %62 : vector<256x8xf32>
    %c0_63 = arith.constant 0 : index
    %c0_64 = arith.constant 0 : index
    %64 = vector.load %arg3[%c0_63, %c0_64] : memref<1x8xf32, #tpu.memory_space<vmem>>, vector<1x8xf32>
    %65 = vector.broadcast %64 : vector<1x8xf32> to vector<256x8xf32>
    %66 = arith.addf %63, %65 : vector<256x8xf32>
    %cst_65 = arith.constant 0.000000e+00 : f32
    %67 = vector.broadcast %cst_65 : f32 to vector<256x8xf32>
    %68 = arith.maximumf %66, %67 : vector<256x8xf32>
    %c0_66 = arith.constant 0 : index
    %c0_67 = arith.constant 0 : index
    %69 = vector.load %arg6[%c0_66, %c0_67] : memref<64x256xf32, #tpu.memory_space<vmem>>, vector<64x256xf32>
    %cst_68 = arith.constant dense<0.000000e+00> : vector<64x8xf32>
    %70 = tpu.matmul %69, %68, %cst_68 {dimension_numbers = #tpu.dot_dimension_numbers<[1], [0], [0], [1], [0, 0, 1, 1], [], []>} : vector<64x256xf32>, vector<256x8xf32>, vector<64x8xf32> -> vector<64x8xf32>
    %cst_69 = arith.constant 0.000000e+00 : f32
    %71 = vector.broadcast %cst_69 : f32 to vector<10x10x8xf32>
    %c0_70 = arith.constant 0 : index
    %c0_71 = arith.constant 0 : index
    %c0_72 = arith.constant 0 : index
    %72 = vector.load %arg10[%c0_70, %c0_71, %c0_72] : memref<10x10x8xf32, #tpu.memory_space<vmem>>, vector<10x10x8xf32>
    tpu.vector_store %arg10[%c0_70, %c0_71, %c0_72], %71 {strides = array<i32>} : memref<10x10x8xf32, #tpu.memory_space<vmem>>, vector<10x10x8xf32>,
    %73 = vector.shape_cast %70 : vector<64x8xf32> to vector<8x8x8xf32>
    %c1_73 = arith.constant 1 : index
    %c1_74 = arith.constant 1 : index
    %c0_75 = arith.constant 0 : index
    %74 = vector.load %arg10[%c1_73, %c1_74, %c0_75] : memref<10x10x8xf32, #tpu.memory_space<vmem>>, vector<8x8x8xf32>
    tpu.vector_store %arg10[%c1_73, %c1_74, %c0_75], %73 {strides = array<i32>} : memref<10x10x8xf32, #tpu.memory_space<vmem>>, vector<8x8x8xf32>,
    %cst_76 = arith.constant 0.000000e+00 : f32
    %75 = vector.broadcast %cst_76 : f32 to vector<64x8xf32>
    %c0_77 = arith.constant 0 : index
    %c0_78 = arith.constant 0 : index
    %c0_79 = arith.constant 0 : index
    %76 = vector.load %arg10[%c0_77, %c0_78, %c0_79] : memref<10x10x8xf32, #tpu.memory_space<vmem>>, vector<8x8x8xf32>
    %77 = vector.shape_cast %76 : vector<8x8x8xf32> to vector<64x8xf32>
    %c0_80 = arith.constant 0 : index
    %c0_81 = arith.constant 0 : index
    %c0_82 = arith.constant 0 : index
    %78 = vector.load %arg4[%c0_80, %c0_81, %c0_82] : memref<9x8x8xf32, #tpu.memory_space<vmem>>, vector<1x8x8xf32>
    %79 = vector.shape_cast %78 : vector<1x8x8xf32> to vector<8x8xf32>
    %cst_83 = arith.constant dense<0.000000e+00> : vector<64x8xf32>
    %80 = tpu.matmul %77, %79, %cst_83 {dimension_numbers = #tpu.dot_dimension_numbers<[1], [0], [0], [1], [0, 0, 1, 1], [], []>} : vector<64x8xf32>, vector<8x8xf32>, vector<64x8xf32> -> vector<64x8xf32>
    %81 = arith.addf %75, %80 : vector<64x8xf32>
    %c0_84 = arith.constant 0 : index
    %c1_85 = arith.constant 1 : index
    %c0_86 = arith.constant 0 : index
    %82 = vector.load %arg10[%c0_84, %c1_85, %c0_86] : memref<10x10x8xf32, #tpu.memory_space<vmem>>, vector<8x8x8xf32>
    %83 = vector.shape_cast %82 : vector<8x8x8xf32> to vector<64x8xf32>
    %c1_87 = arith.constant 1 : index
    %c0_88 = arith.constant 0 : index
    %c0_89 = arith.constant 0 : index
    %84 = vector.load %arg4[%c1_87, %c0_88, %c0_89] : memref<9x8x8xf32, #tpu.memory_space<vmem>>, vector<1x8x8xf32>
    %85 = vector.shape_cast %84 : vector<1x8x8xf32> to vector<8x8xf32>
    %cst_90 = arith.constant dense<0.000000e+00> : vector<64x8xf32>
    %86 = tpu.matmul %83, %85, %cst_90 {dimension_numbers = #tpu.dot_dimension_numbers<[1], [0], [0], [1], [0, 0, 1, 1], [], []>} : vector<64x8xf32>, vector<8x8xf32>, vector<64x8xf32> -> vector<64x8xf32>
    %87 = arith.addf %81, %86 : vector<64x8xf32>
    %c0_91 = arith.constant 0 : index
    %c2_92 = arith.constant 2 : index
    %c0_93 = arith.constant 0 : index
    %88 = vector.load %arg10[%c0_91, %c2_92, %c0_93] : memref<10x10x8xf32, #tpu.memory_space<vmem>>, vector<8x8x8xf32>
    %89 = vector.shape_cast %88 : vector<8x8x8xf32> to vector<64x8xf32>
    %c2_94 = arith.constant 2 : index
    %c0_95 = arith.constant 0 : index
    %c0_96 = arith.constant 0 : index
    %90 = vector.load %arg4[%c2_94, %c0_95, %c0_96] : memref<9x8x8xf32, #tpu.memory_space<vmem>>, vector<1x8x8xf32>
    %91 = vector.shape_cast %90 : vector<1x8x8xf32> to vector<8x8xf32>
    %cst_97 = arith.constant dense<0.000000e+00> : vector<64x8xf32>
    %92 = tpu.matmul %89, %91, %cst_97 {dimension_numbers = #tpu.dot_dimension_numbers<[1], [0], [0], [1], [0, 0, 1, 1], [], []>} : vector<64x8xf32>, vector<8x8xf32>, vector<64x8xf32> -> vector<64x8xf32>
    %93 = arith.addf %87, %92 : vector<64x8xf32>
    %c1_98 = arith.constant 1 : index
    %c0_99 = arith.constant 0 : index
    %c0_100 = arith.constant 0 : index
    %94 = vector.load %arg10[%c1_98, %c0_99, %c0_100] : memref<10x10x8xf32, #tpu.memory_space<vmem>>, vector<8x8x8xf32>
    %95 = vector.shape_cast %94 : vector<8x8x8xf32> to vector<64x8xf32>
    %c3_101 = arith.constant 3 : index
    %c0_102 = arith.constant 0 : index
    %c0_103 = arith.constant 0 : index
    %96 = vector.load %arg4[%c3_101, %c0_102, %c0_103] : memref<9x8x8xf32, #tpu.memory_space<vmem>>, vector<1x8x8xf32>
    %97 = vector.shape_cast %96 : vector<1x8x8xf32> to vector<8x8xf32>
    %cst_104 = arith.constant dense<0.000000e+00> : vector<64x8xf32>
    %98 = tpu.matmul %95, %97, %cst_104 {dimension_numbers = #tpu.dot_dimension_numbers<[1], [0], [0], [1], [0, 0, 1, 1], [], []>} : vector<64x8xf32>, vector<8x8xf32>, vector<64x8xf32> -> vector<64x8xf32>
    %99 = arith.addf %93, %98 : vector<64x8xf32>
    %c1_105 = arith.constant 1 : index
    %c1_106 = arith.constant 1 : index
    %c0_107 = arith.constant 0 : index
    %100 = vector.load %arg10[%c1_105, %c1_106, %c0_107] : memref<10x10x8xf32, #tpu.memory_space<vmem>>, vector<8x8x8xf32>
    %101 = vector.shape_cast %100 : vector<8x8x8xf32> to vector<64x8xf32>
    %c4_108 = arith.constant 4 : index
    %c0_109 = arith.constant 0 : index
    %c0_110 = arith.constant 0 : index
    %102 = vector.load %arg4[%c4_108, %c0_109, %c0_110] : memref<9x8x8xf32, #tpu.memory_space<vmem>>, vector<1x8x8xf32>
    %103 = vector.shape_cast %102 : vector<1x8x8xf32> to vector<8x8xf32>
    %cst_111 = arith.constant dense<0.000000e+00> : vector<64x8xf32>
    %104 = tpu.matmul %101, %103, %cst_111 {dimension_numbers = #tpu.dot_dimension_numbers<[1], [0], [0], [1], [0, 0, 1, 1], [], []>} : vector<64x8xf32>, vector<8x8xf32>, vector<64x8xf32> -> vector<64x8xf32>
    %105 = arith.addf %99, %104 : vector<64x8xf32>
    %c1_112 = arith.constant 1 : index
    %c2_113 = arith.constant 2 : index
    %c0_114 = arith.constant 0 : index
    %106 = vector.load %arg10[%c1_112, %c2_113, %c0_114] : memref<10x10x8xf32, #tpu.memory_space<vmem>>, vector<8x8x8xf32>
    %107 = vector.shape_cast %106 : vector<8x8x8xf32> to vector<64x8xf32>
    %c5_115 = arith.constant 5 : index
    %c0_116 = arith.constant 0 : index
    %c0_117 = arith.constant 0 : index
    %108 = vector.load %arg4[%c5_115, %c0_116, %c0_117] : memref<9x8x8xf32, #tpu.memory_space<vmem>>, vector<1x8x8xf32>
    %109 = vector.shape_cast %108 : vector<1x8x8xf32> to vector<8x8xf32>
    %cst_118 = arith.constant dense<0.000000e+00> : vector<64x8xf32>
    %110 = tpu.matmul %107, %109, %cst_118 {dimension_numbers = #tpu.dot_dimension_numbers<[1], [0], [0], [1], [0, 0, 1, 1], [], []>} : vector<64x8xf32>, vector<8x8xf32>, vector<64x8xf32> -> vector<64x8xf32>
    %111 = arith.addf %105, %110 : vector<64x8xf32>
    %c2_119 = arith.constant 2 : index
    %c0_120 = arith.constant 0 : index
    %c0_121 = arith.constant 0 : index
    %112 = vector.load %arg10[%c2_119, %c0_120, %c0_121] : memref<10x10x8xf32, #tpu.memory_space<vmem>>, vector<8x8x8xf32>
    %113 = vector.shape_cast %112 : vector<8x8x8xf32> to vector<64x8xf32>
    %c6_122 = arith.constant 6 : index
    %c0_123 = arith.constant 0 : index
    %c0_124 = arith.constant 0 : index
    %114 = vector.load %arg4[%c6_122, %c0_123, %c0_124] : memref<9x8x8xf32, #tpu.memory_space<vmem>>, vector<1x8x8xf32>
    %115 = vector.shape_cast %114 : vector<1x8x8xf32> to vector<8x8xf32>
    %cst_125 = arith.constant dense<0.000000e+00> : vector<64x8xf32>
    %116 = tpu.matmul %113, %115, %cst_125 {dimension_numbers = #tpu.dot_dimension_numbers<[1], [0], [0], [1], [0, 0, 1, 1], [], []>} : vector<64x8xf32>, vector<8x8xf32>, vector<64x8xf32> -> vector<64x8xf32>
    %117 = arith.addf %111, %116 : vector<64x8xf32>
    %c2_126 = arith.constant 2 : index
    %c1_127 = arith.constant 1 : index
    %c0_128 = arith.constant 0 : index
    %118 = vector.load %arg10[%c2_126, %c1_127, %c0_128] : memref<10x10x8xf32, #tpu.memory_space<vmem>>, vector<8x8x8xf32>
    %119 = vector.shape_cast %118 : vector<8x8x8xf32> to vector<64x8xf32>
    %c7_129 = arith.constant 7 : index
    %c0_130 = arith.constant 0 : index
    %c0_131 = arith.constant 0 : index
    %120 = vector.load %arg4[%c7_129, %c0_130, %c0_131] : memref<9x8x8xf32, #tpu.memory_space<vmem>>, vector<1x8x8xf32>
    %121 = vector.shape_cast %120 : vector<1x8x8xf32> to vector<8x8xf32>
    %cst_132 = arith.constant dense<0.000000e+00> : vector<64x8xf32>
    %122 = tpu.matmul %119, %121, %cst_132 {dimension_numbers = #tpu.dot_dimension_numbers<[1], [0], [0], [1], [0, 0, 1, 1], [], []>} : vector<64x8xf32>, vector<8x8xf32>, vector<64x8xf32> -> vector<64x8xf32>
    %123 = arith.addf %117, %122 : vector<64x8xf32>
    %c2_133 = arith.constant 2 : index
    %c2_134 = arith.constant 2 : index
    %c0_135 = arith.constant 0 : index
    %124 = vector.load %arg10[%c2_133, %c2_134, %c0_135] : memref<10x10x8xf32, #tpu.memory_space<vmem>>, vector<8x8x8xf32>
    %125 = vector.shape_cast %124 : vector<8x8x8xf32> to vector<64x8xf32>
    %c8_136 = arith.constant 8 : index
    %c0_137 = arith.constant 0 : index
    %c0_138 = arith.constant 0 : index
    %126 = vector.load %arg4[%c8_136, %c0_137, %c0_138] : memref<9x8x8xf32, #tpu.memory_space<vmem>>, vector<1x8x8xf32>
    %127 = vector.shape_cast %126 : vector<1x8x8xf32> to vector<8x8xf32>
    %cst_139 = arith.constant dense<0.000000e+00> : vector<64x8xf32>
    %128 = tpu.matmul %125, %127, %cst_139 {dimension_numbers = #tpu.dot_dimension_numbers<[1], [0], [0], [1], [0, 0, 1, 1], [], []>} : vector<64x8xf32>, vector<8x8xf32>, vector<64x8xf32> -> vector<64x8xf32>
    %129 = arith.addf %123, %128 : vector<64x8xf32>
    %c0_140 = arith.constant 0 : index
    %c0_141 = arith.constant 0 : index
    %130 = vector.load %arg5[%c0_140, %c0_141] : memref<1x8xf32, #tpu.memory_space<vmem>>, vector<1x8xf32>
    %131 = vector.broadcast %130 : vector<1x8xf32> to vector<64x8xf32>
    %132 = arith.addf %129, %131 : vector<64x8xf32>
    %c0_142 = arith.constant 0 : index
    %c1_143 = arith.constant 1 : index
    %c1_144 = arith.constant 1 : index
    %c0_145 = arith.constant 0 : index
    %133 = vector.load %arg1[%c0_142, %c1_143, %c1_144, %c0_145] : memref<1x18x18x4xf32, #tpu.memory_space<vmem>>, vector<1x16x16x4xf32>
    %134 = vector.shape_cast %133 : vector<1x16x16x4xf32> to vector<16x16x4xf32>
    %135 = vector.shape_cast %134 : vector<16x16x4xf32> to vector<256x4xf32>
    %cst_146 = arith.constant dense<0.000000e+00> : vector<64x4xf32>
    %136 = tpu.matmul %69, %135, %cst_146 {dimension_numbers = #tpu.dot_dimension_numbers<[1], [0], [0], [1], [0, 0, 1, 1], [], []>} : vector<64x256xf32>, vector<256x4xf32>, vector<64x4xf32> -> vector<64x4xf32>
    %c0_147 = arith.constant 0 : index
    %c0_148 = arith.constant 0 : index
    %137 = vector.load %arg7[%c0_147, %c0_148] : memref<4x8xf32, #tpu.memory_space<vmem>>, vector<4x8xf32>
    %cst_149 = arith.constant dense<0.000000e+00> : vector<64x8xf32>
    %138 = tpu.matmul %136, %137, %cst_149 {dimension_numbers = #tpu.dot_dimension_numbers<[1], [0], [0], [1], [0, 0, 1, 1], [], []>} : vector<64x4xf32>, vector<4x8xf32>, vector<64x8xf32> -> vector<64x8xf32>
    %c0_150 = arith.constant 0 : index
    %c0_151 = arith.constant 0 : index
    %139 = vector.load %arg8[%c0_150, %c0_151] : memref<1x8xf32, #tpu.memory_space<vmem>>, vector<1x8xf32>
    %140 = vector.broadcast %139 : vector<1x8xf32> to vector<64x8xf32>
    %141 = arith.addf %138, %140 : vector<64x8xf32>
    %142 = arith.addf %132, %141 : vector<64x8xf32>
    %cst_152 = arith.constant 0.000000e+00 : f32
    %143 = vector.broadcast %cst_152 : f32 to vector<64x8xf32>
    %144 = arith.maximumf %142, %143 : vector<64x8xf32>
    %145 = vector.shape_cast %144 : vector<64x8xf32> to vector<8x8x8xf32>
    %c0_153 = arith.constant 0 : index
    %c0_154 = arith.constant 0 : index
    %c0_155 = arith.constant 0 : index
    %c0_156 = arith.constant 0 : index
    %146 = vector.load %arg9[%c0_153, %c0_154, %c0_155, %c0_156] : memref<1x8x8x8xf32, #tpu.memory_space<vmem>>, vector<1x8x8x8xf32>
    %147 = vector.shape_cast %146 : vector<1x8x8x8xf32> to vector<8x8x8xf32>
    %148 = vector.shape_cast %145 : vector<8x8x8xf32> to vector<1x8x8x8xf32>
    tpu.vector_store %arg9[%c0_153, %c0_154, %c0_155, %c0_156], %148 {strides = array<i32>} : memref<1x8x8x8xf32, #tpu.memory_space<vmem>>, vector<1x8x8x8xf32>,
    return
  }
  func.func @transform_0(%arg0: i32) -> (i32, i32, i32, i32) {
    %c0_i32 = arith.constant 0 : i32
    %c0_i32_0 = arith.constant 0 : i32
    %c0_i32_1 = arith.constant 0 : i32
    %c0_i32_2 = arith.constant 0 : i32
    return %arg0, %c0_i32, %c0_i32_0, %c0_i32_1 : i32, i32, i32, i32
  }
  func.func @transform_1(%arg0: i32) -> (i32, i32, i32) {
    %c0_i32 = arith.constant 0 : i32
    %c0_i32_0 = arith.constant 0 : i32
    %c0_i32_1 = arith.constant 0 : i32
    %c0_i32_2 = arith.constant 0 : i32
    return %c0_i32, %c0_i32_0, %c0_i32_1 : i32, i32, i32
  }
  func.func @transform_2(%arg0: i32) -> (i32, i32) {
    %c0_i32 = arith.constant 0 : i32
    %c0_i32_0 = arith.constant 0 : i32
    %c0_i32_1 = arith.constant 0 : i32
    return %c0_i32, %c0_i32_0 : i32, i32
  }
  func.func @transform_3(%arg0: i32) -> (i32, i32, i32) {
    %c0_i32 = arith.constant 0 : i32
    %c0_i32_0 = arith.constant 0 : i32
    %c0_i32_1 = arith.constant 0 : i32
    %c0_i32_2 = arith.constant 0 : i32
    return %c0_i32, %c0_i32_0, %c0_i32_1 : i32, i32, i32
  }
  func.func @transform_4(%arg0: i32) -> (i32, i32) {
    %c0_i32 = arith.constant 0 : i32
    %c0_i32_0 = arith.constant 0 : i32
    %c0_i32_1 = arith.constant 0 : i32
    return %c0_i32, %c0_i32_0 : i32, i32
  }
  func.func @transform_5(%arg0: i32) -> (i32, i32) {
    %c0_i32 = arith.constant 0 : i32
    %c0_i32_0 = arith.constant 0 : i32
    %c0_i32_1 = arith.constant 0 : i32
    return %c0_i32, %c0_i32_0 : i32, i32
  }
  func.func @transform_6(%arg0: i32) -> (i32, i32) {
    %c0_i32 = arith.constant 0 : i32
    %c0_i32_0 = arith.constant 0 : i32
    %c0_i32_1 = arith.constant 0 : i32
    return %c0_i32, %c0_i32_0 : i32, i32
  }
  func.func @transform_7(%arg0: i32) -> (i32, i32) {
    %c0_i32 = arith.constant 0 : i32
    %c0_i32_0 = arith.constant 0 : i32
    %c0_i32_1 = arith.constant 0 : i32
    return %c0_i32, %c0_i32_0 : i32, i32
  }
  func.func @transform_8(%arg0: i32) -> (i32, i32, i32, i32) {
    %c0_i32 = arith.constant 0 : i32
    %c0_i32_0 = arith.constant 0 : i32
    %c0_i32_1 = arith.constant 0 : i32
    %c0_i32_2 = arith.constant 0 : i32
    return %arg0, %c0_i32, %c0_i32_0, %c0_i32_1 : i32, i32, i32, i32
  }
}

</mosaic_0001>

<llo_original>
// kernel: residual_block_forward.1
$region0: #{residual_block_forward.1}
  #allocation0 [shape = 'u32[]', space=smem, size = 0x4, offset = 0x4, fixed_abs, tag = 'smem constant byte address 0x4 - core index']
  #allocation1 [shape = 'u32[144,128]{1,0:T(1,128)}', space=vmem, size = 0x12000, scoped, tag = 'internal scratch']
  #allocation2 [shape = 'f32[10,10,8]{2,1,0:T(8,128)}', space=vmem, size = 0x14000, scoped, tag = 'scratch operand']
  %s0 = inlined_call_operand.vmem [shape: f32[2,18,18,4], index: 0, kind: input, shape index: {}]
  %s1 = inlined_call_operand.vmem [shape: f32[9,4,8], index: 1, kind: input, shape index: {}]
  %s2 = inlined_call_operand.vmem [shape: f32[1,8], index: 2, kind: input, shape index: {}]
  %s3 = inlined_call_operand.vmem [shape: f32[9,8,8], index: 3, kind: input, shape index: {}]
  %s4 = inlined_call_operand.vmem [shape: f32[1,8], index: 4, kind: input, shape index: {}]
  %s5 = inlined_call_operand.vmem [shape: f32[64,256], index: 5, kind: input, shape index: {}]
  %s6 = inlined_call_operand.vmem [shape: f32[4,8], index: 6, kind: input, shape index: {}]
  %s7 = inlined_call_operand.vmem [shape: f32[1,8], index: 7, kind: input, shape index: {}]
  %s8 = inlined_call_operand.vmem [shape: f32[2,8,8,8], index: 8, kind: output, shape index: {}]
  %s9 = sld [smem:[#allocation0]]
  $region65: #{residual_block_forward.1} parent=0
    _
  %s11 = ssub.s32 1, %s9
  %s12 = scalar_select 0, %s11, %s9
  loop: start=0, step=1, limit=4
  $region2: #{residual_block_forward.1} parent=0 // loop_pre_header
    _
  $region3: #{residual_block_forward.1} parent=0 // loop_header
    %s14 = sphi 0, %s18
    %p15 = scmp.ge.s32.totalorder %s14, 4
    %s24 = sphi 0, %s26
    %s27 = sphi 0, %s24
    %s28 = sphi 0, %s27
    %s44 = sphi 0, %s28
    %s48 = sphi 0, %s48
    %s50 = sphi 0, %s48
    %s51 = sphi 0, %s50
    %s65 = sphi 0, %s51
    %s69 = sphi 0, %s69
    %s71 = sphi 0, %s69
    %s72 = sphi 0, %s71
    %s86 = sphi 0, %s72
    %s90 = sphi 0, %s90
    %s92 = sphi 0, %s90
    %s93 = sphi 0, %s92
    %s107 = sphi 0, %s93
    %s111 = sphi 0, %s111
    %s113 = sphi 0, %s111
    %s114 = sphi 0, %s113
    %s128 = sphi 0, %s114
    %s132 = sphi 0, %s132
    %s134 = sphi 0, %s132
    %s135 = sphi 0, %s134
    %s149 = sphi 0, %s135
    %s153 = sphi 0, %s153
    %s155 = sphi 0, %s153
    %s156 = sphi 0, %s155
    %s170 = sphi 0, %s156
    %s174 = sphi 0, %s174
    %s176 = sphi 0, %s174
    %s177 = sphi 0, %s176
    %s191 = sphi 0, %s177
    %s197 = sphi 0, %s199
    %s200 = sphi 0, %s197
    %s201 = sphi 0, %s200
    %s217 = sphi 0, %s201
  $region4: #{residual_block_forward.1} parent=0 // loop_header_branch
    %17 = sbr.rel (%p15) target = $region8
  $region5: #{residual_block_forward.1} parent=0 // loop_body
    %s19 = ssub.s32 %s14, 1
    %s20 = ssub.s32 %s14, 2
    %s21 = sadd.s32 %s14, 1
    %s22 = ssub.s32 %s14, %s21
    %p23 = scmp.eq.s32.totalorder %s22, 0
    %s25 = sadd.s32 %s24, 1
    %s26 = scalar_select %p23, %s24, %s25
    %p29 = pneg %p23
    %p30 = scmp.eq.s32.totalorder %s14, 1
    %p31 = por %p29, %p30
    %p32 = scmp.ne.s32.totalorder %s24, %s27
    %p33 = scmp.eq.s32.totalorder %s14, 0
    %p34 = por %p32, %p33
    %p35 = scmp.ne.s32.totalorder %s24, %s27
    %p36 = scmp.eq.s32.totalorder %s19, 1
    %p37 = por %p35, %p36
    %p38 = scmp.ne.s32.totalorder %s27, %s28
    %p39 = scmp.eq.s32.totalorder %s19, 0
    %p40 = por %p38, %p39
    %p41 = scmp.ne.s32.totalorder %s27, %s28
    %p42 = scmp.eq.s32.totalorder %s20, 1
    %p43 = por %p41, %p42
    %p45 = scmp.ne.s32.totalorder %s28, %s44
    %p46 = scmp.eq.s32.totalorder %s20, 0
    %p47 = por %p45, %p46
    %s49 = sadd.s32 %s48, 1
    %p52 = scmp.eq.s32.totalorder %s14, 1
    %p53 = scmp.ne.s32.totalorder %s48, %s50
    %p54 = scmp.eq.s32.totalorder %s14, 0
    %p55 = por %p53, %p54
    %p56 = scmp.ne.s32.totalorder %s48, %s50
    %p57 = scmp.eq.s32.totalorder %s19, 1
    %p58 = por %p56, %p57
    %p59 = scmp.ne.s32.totalorder %s50, %s51
    %p60 = scmp.eq.s32.totalorder %s19, 0
    %p61 = por %p59, %p60
    %p62 = scmp.ne.s32.totalorder %s50, %s51
    %p63 = scmp.eq.s32.totalorder %s20, 1
    %p64 = por %p62, %p63
    %p66 = scmp.ne.s32.totalorder %s51, %s65
    %p67 = scmp.eq.s32.totalorder %s20, 0
    %p68 = por %p66, %p67
    %s70 = sadd.s32 %s69, 1
    %p73 = scmp.eq.s32.totalorder %s14, 1
    %p74 = scmp.ne.s32.totalorder %s69, %s71
    %p75 = scmp.eq.s32.totalorder %s14, 0
    %p76 = por %p74, %p75
    %p77 = scmp.ne.s32.totalorder %s69, %s71
    %p78 = scmp.eq.s32.totalorder %s19, 1
    %p79 = por %p77, %p78
    %p80 = scmp.ne.s32.totalorder %s71, %s72
    %p81 = scmp.eq.s32.totalorder %s19, 0
    %p82 = por %p80, %p81
    %p83 = scmp.ne.s32.totalorder %s71, %s72
    %p84 = scmp.eq.s32.totalorder %s20, 1
    %p85 = por %p83, %p84
    %p87 = scmp.ne.s32.totalorder %s72, %s86
    %p88 = scmp.eq.s32.totalorder %s20, 0
    %p89 = por %p87, %p88
    %s91 = sadd.s32 %s90, 1
    %p94 = scmp.eq.s32.totalorder %s14, 1
    %p95 = scmp.ne.s32.totalorder %s90, %s92
    %p96 = scmp.eq.s32.totalorder %s14, 0
    %p97 = por %p95, %p96
    %p98 = scmp.ne.s32.totalorder %s90, %s92
    %p99 = scmp.eq.s32.totalorder %s19, 1
    %p100 = por %p98, %p99
    %p101 = scmp.ne.s32.totalorder %s92, %s93
    %p102 = scmp.eq.s32.totalorder %s19, 0
    %p103 = por %p101, %p102
    %p104 = scmp.ne.s32.totalorder %s92, %s93
    %p105 = scmp.eq.s32.totalorder %s20, 1
    %p106 = por %p104, %p105
    %p108 = scmp.ne.s32.totalorder %s93, %s107
    %p109 = scmp.eq.s32.totalorder %s20, 0
    %p110 = por %p108, %p109
    %s112 = sadd.s32 %s111, 1
    %p115 = scmp.eq.s32.totalorder %s14, 1
    %p116 = scmp.ne.s32.totalorder %s111, %s113
    %p117 = scmp.eq.s32.totalorder %s14, 0
    %p118 = por %p116, %p117
    %p119 = scmp.ne.s32.totalorder %s111, %s113
    %p120 = scmp.eq.s32.totalorder %s19, 1
    %p121 = por %p119, %p120
    %p122 = scmp.ne.s32.totalorder %s113, %s114
    %p123 = scmp.eq.s32.totalorder %s19, 0
    %p124 = por %p122, %p123
    %p125 = scmp.ne.s32.totalorder %s113, %s114
    %p126 = scmp.eq.s32.totalorder %s20, 1
    %p127 = por %p125, %p126
    %p129 = scmp.ne.s32.totalorder %s114, %s128
    %p130 = scmp.eq.s32.totalorder %s20, 0
    %p131 = por %p129, %p130
    %s133 = sadd.s32 %s132, 1
    %p136 = scmp.eq.s32.totalorder %s14, 1
    %p137 = scmp.ne.s32.totalorder %s132, %s134
    %p138 = scmp.eq.s32.totalorder %s14, 0
    %p139 = por %p137, %p138
    %p140 = scmp.ne.s32.totalorder %s132, %s134
    %p141 = scmp.eq.s32.totalorder %s19, 1
    %p142 = por %p140, %p141
    %p143 = scmp.ne.s32.totalorder %s134, %s135
    %p144 = scmp.eq.s32.totalorder %s19, 0
    %p145 = por %p143, %p144
    %p146 = scmp.ne.s32.totalorder %s134, %s135
    %p147 = scmp.eq.s32.totalorder %s20, 1
    %p148 = por %p146, %p147
    %p150 = scmp.ne.s32.totalorder %s135, %s149
    %p151 = scmp.eq.s32.totalorder %s20, 0
    %p152 = por %p150, %p151
    %s154 = sadd.s32 %s153, 1
    %p157 = scmp.eq.s32.totalorder %s14, 1
    %p158 = scmp.ne.s32.totalorder %s153, %s155
    %p159 = scmp.eq.s32.totalorder %s14, 0
    %p160 = por %p158, %p159
    %p161 = scmp.ne.s32.totalorder %s153, %s155
    %p162 = scmp.eq.s32.totalorder %s19, 1
    %p163 = por %p161, %p162
    %p164 = scmp.ne.s32.totalorder %s155, %s156
    %p165 = scmp.eq.s32.totalorder %s19, 0
    %p166 = por %p164, %p165
    %p167 = scmp.ne.s32.totalorder %s155, %s156
    %p168 = scmp.eq.s32.totalorder %s20, 1
    %p169 = por %p167, %p168
    %p171 = scmp.ne.s32.totalorder %s156, %s170
    %p172 = scmp.eq.s32.totalorder %s20, 0
    %p173 = por %p171, %p172
    %s175 = sadd.s32 %s174, 1
    %p178 = scmp.eq.s32.totalorder %s14, 1
    %p179 = scmp.ne.s32.totalorder %s174, %s176
    %p180 = scmp.eq.s32.totalorder %s14, 0
    %p181 = por %p179, %p180
    %p182 = scmp.ne.s32.totalorder %s174, %s176
    %p183 = scmp.eq.s32.totalorder %s19, 1
    %p184 = por %p182, %p183
    %p185 = scmp.ne.s32.totalorder %s176, %s177
    %p186 = scmp.eq.s32.totalorder %s19, 0
    %p187 = por %p185, %p186
    %p188 = scmp.ne.s32.totalorder %s176, %s177
    %p189 = scmp.eq.s32.totalorder %s20, 1
    %p190 = por %p188, %p189
    %p192 = scmp.ne.s32.totalorder %s177, %s191
    %p193 = scmp.eq.s32.totalorder %s20, 0
    %p194 = por %p192, %p193
    %s195 = ssub.s32 %s14, %s21
    %p196 = scmp.eq.s32.totalorder %s195, 0
    %s198 = sadd.s32 %s197, 1
    %s199 = scalar_select %p196, %s197, %s198
    %p202 = pneg %p196
    %p203 = scmp.eq.s32.totalorder %s14, 1
    %p204 = por %p202, %p203
    %p205 = scmp.ne.s32.totalorder %s197, %s200
    %p206 = scmp.eq.s32.totalorder %s14, 0
    %p207 = por %p205, %p206
    %p208 = scmp.ne.s32.totalorder %s197, %s200
    %p209 = scmp.eq.s32.totalorder %s19, 1
    %p210 = por %p208, %p209
    %p211 = scmp.ne.s32.totalorder %s200, %s201
    %p212 = scmp.eq.s32.totalorder %s19, 0
    %p213 = por %p211, %p212
    %p214 = scmp.ne.s32.totalorder %s200, %s201
    %p215 = scmp.eq.s32.totalorder %s20, 1
    %p216 = por %p214, %p215
    %p218 = scmp.ne.s32.totalorder %s201, %s217
    %p219 = scmp.eq.s32.totalorder %s20, 0
    %p220 = por %p218, %p219
    %p221 = scmp.le.s32.totalorder 1, %s14
    %p222 = scmp.lt.s32.totalorder %s14, 3
    %p223 = pnand %p221, %p222
    %p224 = pneg %p223
    // Predicated region
    $region9: #{residual_block_forward.1} parent=5 // pred_check
      _
    $region10: #{residual_block_forward.1} parent=5 // pred_check_branch
      %226 = sbr.rel (%p223) target = $region12
    $region11: #{residual_block_forward.1} parent=5 // pred_region
      %s227 = ssub.s32 %s14, 1
      // Predicated region
      $region13: #{residual_block_forward.1} parent=11 // pred_check
        %p228 = pneg %p61
      $region14: #{residual_block_forward.1} parent=11 // pred_check_branch
        %230 = sbr.rel (%p228) target = $region16
      $region15: #{residual_block_forward.1} parent=11 // pred_region
        _
      $region16: #{residual_block_forward.1} parent=11 // pred_fallthru
        _
      // Predicated region
      $region17: #{residual_block_forward.1} parent=11 // pred_check
        %p231 = pneg %p82
      $region18: #{residual_block_forward.1} parent=11 // pred_check_branch
        %233 = sbr.rel (%p231) target = $region20
      $region19: #{residual_block_forward.1} parent=11 // pred_region
        _
      $region20: #{residual_block_forward.1} parent=11 // pred_fallthru
        _
      // Predicated region
      $region21: #{residual_block_forward.1} parent=11 // pred_check
        %p234 = pneg %p103
      $region22: #{residual_block_forward.1} parent=11 // pred_check_branch
        %236 = sbr.rel (%p234) target = $region24
      $region23: #{residual_block_forward.1} parent=11 // pred_region
        _
      $region24: #{residual_block_forward.1} parent=11 // pred_fallthru
        _
      // Predicated region
      $region25: #{residual_block_forward.1} parent=11 // pred_check
        %p237 = pneg %p124
      $region26: #{residual_block_forward.1} parent=11 // pred_check_branch
        %239 = sbr.rel (%p237) target = $region28
      $region27: #{residual_block_forward.1} parent=11 // pred_region
        _
      $region28: #{residual_block_forward.1} parent=11 // pred_fallthru
        _
      // Predicated region
      $region29: #{residual_block_forward.1} parent=11 // pred_check
        %p240 = pneg %p145
      $region30: #{residual_block_forward.1} parent=11 // pred_check_branch
        %242 = sbr.rel (%p240) target = $region32
      $region31: #{residual_block_forward.1} parent=11 // pred_region
        _
      $region32: #{residual_block_forward.1} parent=11 // pred_fallthru
        _
      // Predicated region
      $region33: #{residual_block_forward.1} parent=11 // pred_check
        %p243 = pneg %p166
      $region34: #{residual_block_forward.1} parent=11 // pred_check_branch
        %245 = sbr.rel (%p243) target = $region36
      $region35: #{residual_block_forward.1} parent=11 // pred_region
        _
      $region36: #{residual_block_forward.1} parent=11 // pred_fallthru
        _
      // Predicated region
      $region37: #{residual_block_forward.1} parent=11 // pred_check
        %p246 = pneg %p187
      $region38: #{residual_block_forward.1} parent=11 // pred_check_branch
        %248 = sbr.rel (%p246) target = $region40
      $region39: #{residual_block_forward.1} parent=11 // pred_region
        _
      $region40: #{residual_block_forward.1} parent=11 // pred_fallthru
        _
    $region12: #{residual_block_forward.1} parent=5 // pred_fallthru
      _
    %p249 = scmp.lt.s32.totalorder %s14, 2
    // Predicated region
    $region41: #{residual_block_forward.1} parent=5 // pred_check
      %p250 = pneg %p249
    $region42: #{residual_block_forward.1} parent=5 // pred_check_branch
      %252 = sbr.rel (%p250) target = $region44
    $region43: #{residual_block_forward.1} parent=5 // pred_region
      // Predicated region
      $region45: #{residual_block_forward.1} parent=43 // pred_check
        %p253 = pneg %p34
      $region46: #{residual_block_forward.1} parent=43 // pred_check_branch
        %255 = sbr.rel (%p253) target = $region48
      $region47: #{residual_block_forward.1} parent=43 // pred_region
        %p256 = scmp.lt.s32.totalorder %s14, 1
        %s257 = scalar_select %p256, %s14, 1
        %s258 = smul.addr %s257, 54
        %s259 = smul.addr %s258, 8
        %s260 = scalar_lea.vmem %s0, %s259
      $region48: #{residual_block_forward.1} parent=43 // pred_fallthru
        _
    $region44: #{residual_block_forward.1} parent=5 // pred_fallthru
      _
    %p261 = scmp.le.s32.totalorder 1, %s14
    %p262 = scmp.lt.s32.totalorder %s14, 3
    %p263 = pnand %p261, %p262
    %p264 = pneg %p263
    // Predicated region
    $region49: #{residual_block_forward.1} parent=5 // pred_check
      _
    $region50: #{residual_block_forward.1} parent=5 // pred_check_branch
      %266 = sbr.rel (%p263) target = $region52
    $region51: #{residual_block_forward.1} parent=5 // pred_region
      %s267 = ssub.s32 %s14, 1
      %p268 = scmp.lt.s32.totalorder %s19, 1
      %s269 = scalar_select %p268, %s19, 1
      %s270 = smul.addr %s269, 54
      %s271 = smul.addr %s270, 8
      %s272 = scalar_lea.vmem %s0, %s271
      %p273 = pneg %p40
      %p274 = pneg %p37
      %p275 = pneg %p61
      %p276 = pneg %p58
      %p277 = pneg %p82
      %p278 = pneg %p79
      %p279 = pneg %p103
      %p280 = pneg %p100
      %p281 = pneg %p124
      %p282 = pneg %p121
      %p283 = pneg %p145
      %p284 = pneg %p142
      %p285 = pneg %p166
      %p286 = pneg %p163
      %p287 = pneg %p187
      %p288 = pneg %p184
      %p289 = pneg %p213
      %p290 = pneg %p210
      %p291 = scmp.lt.s32.totalorder %s19, 1
      %s292 = scalar_select %p291, %s19, 1
      %s293 = smul.addr %s292, 8
      %s294 = smul.addr %s293, 8
      %s295 = scalar_lea.vmem %s8, %s294
      %p296 = scmp.lt.s32.totalorder %s19, 1
      %s297 = scalar_select %p296, %s19, 1
      %s298 = smul.addr %s297, 54
      %s299 = smul.addr %s298, 8
      %s300 = scalar_lea.vmem %s0, %s299
      %p301 = scmp.lt.s32.totalorder %s19, 1
      %s302 = scalar_select %p301, %s19, 1
      %s303 = smul.addr %s302, 8
      %s304 = smul.addr %s303, 8
      %s305 = scalar_lea.vmem %s8, %s304
      %v306 = vld [vmem:[%s300] sm:$0xff]
      %v307 = vld [vmem:[%s300 + $0x8] sm:$0xff]
      %v308 = vld [vmem:[%s300 + $0x18] sm:$0xff]
      %v309 = vld [vmem:[%s300 + $0x20] sm:$0xff]
      %v310 = vld [vmem:[%s300 + $0x30] sm:$0xff]
      %v311 = vld [vmem:[%s300 + $0x38] sm:$0xff]
      %v312 = vld [vmem:[%s300 + $0x48] sm:$0xff]
      %v313 = vld [vmem:[%s300 + $0x50] sm:$0xff]
      %v314 = vld [vmem:[%s300 + $0x60] sm:$0xff]
      %v315 = vld [vmem:[%s300 + $0x68] sm:$0xff]
      %v316 = vld [vmem:[%s300 + $0x78] sm:$0xff]
      %v317 = vld [vmem:[%s300 + $0x80] sm:$0xff]
      %v318 = vld [vmem:[%s300 + $0x90] sm:$0xff]
      %v319 = vld [vmem:[%s300 + $0x98] sm:$0xff]
      %v320 = vld [vmem:[%s300 + $0xa8] sm:$0xff]
      %v321 = vld [vmem:[%s300 + $0xb0] sm:$0xff]
      %v322 = vld [vmem:[%s300 + $0xc0] sm:$0xff]
      %v323 = vld [vmem:[%s300 + $0xc8] sm:$0xff]
      %v324 = vld [vmem:[%s300 + $0xd8] sm:$0xff]
      %v325 = vld [vmem:[%s300 + $0xe0] sm:$0xff]
      %v326 = vld [vmem:[%s300 + $0xf0] sm:$0xff]
      %v327 = vld [vmem:[%s300 + $0xf8] sm:$0xff]
      %v328 = vld [vmem:[%s300 + $0x108] sm:$0xff]
      %v329 = vld [vmem:[%s300 + $0x110] sm:$0xff]
      %v330 = vld [vmem:[%s300 + $0x120] sm:$0xff]
      %v331 = vld [vmem:[%s300 + $0x128] sm:$0xff]
      %v332 = vld [vmem:[%s300 + $0x138] sm:$0xff]
      %v333 = vld [vmem:[%s300 + $0x140] sm:$0xff]
      %v334 = vld [vmem:[%s300 + $0x150] sm:$0xff]
      %v335 = vld [vmem:[%s300 + $0x158] sm:$0xff]
      %v336 = vld [vmem:[%s300 + $0x168] sm:$0xff]
      %v337 = vld [vmem:[%s300 + $0x170] sm:$0xff]
      %v338 = vld [vmem:[%s1] sm:$0xf]
      %v339 = vld [vmem:[%s300 + $0x1] sm:$0xff]
      %v340 = vld [vmem:[%s300 + $0x9] sm:$0xff]
      %v341 = vld [vmem:[%s300 + $0x19] sm:$0xff]
      %v342 = vld [vmem:[%s300 + $0x21] sm:$0xff]
      %v343 = vld [vmem:[%s300 + $0x31] sm:$0xff]
      %v344 = vld [vmem:[%s300 + $0x39] sm:$0xff]
      %v345 = vld [vmem:[%s300 + $0x49] sm:$0xff]
      %v346 = vld [vmem:[%s300 + $0x51] sm:$0xff]
      %v347 = vld [vmem:[%s300 + $0x61] sm:$0xff]
      %v348 = vld [vmem:[%s300 + $0x69] sm:$0xff]
      %v349 = vld [vmem:[%s300 + $0x79] sm:$0xff]
      %v350 = vld [vmem:[%s300 + $0x81] sm:$0xff]
      %v351 = vld [vmem:[%s300 + $0x91] sm:$0xff]
      %v352 = vld [vmem:[%s300 + $0x99] sm:$0xff]
      %v353 = vld [vmem:[%s300 + $0xa9] sm:$0xff]
      %v354 = vld [vmem:[%s300 + $0xb1] sm:$0xff]
      %v355 = vld [vmem:[%s300 + $0xc1] sm:$0xff]
      %v356 = vld [vmem:[%s300 + $0xc9] sm:$0xff]
      %v357 = vld [vmem:[%s300 + $0xd9] sm:$0xff]
      %v358 = vld [vmem:[%s300 + $0xe1] sm:$0xff]
      %v359 = vld [vmem:[%s300 + $0xf1] sm:$0xff]
      %v360 = vld [vmem:[%s300 + $0xf9] sm:$0xff]
      %v361 = vld [vmem:[%s300 + $0x109] sm:$0xff]
      %v362 = vld [vmem:[%s300 + $0x111] sm:$0xff]
      %v363 = vld [vmem:[%s300 + $0x121] sm:$0xff]
      %v364 = vld [vmem:[%s300 + $0x129] sm:$0xff]
      %v365 = vld [vmem:[%s300 + $0x139] sm:$0xff]
      %v366 = vld [vmem:[%s300 + $0x141] sm:$0xff]
      %v367 = vld [vmem:[%s300 + $0x151] sm:$0xff]
      %v368 = vld [vmem:[%s300 + $0x159] sm:$0xff]
      %v369 = vld [vmem:[%s300 + $0x169] sm:$0xff]
      %v370 = vld [vmem:[%s300 + $0x171] sm:$0xff]
      %s371 = scalar_lea.vmem %s1, 4
      %v372 = vld [vmem:[%s371] sm:$0xf]
      %vm373 = vcmask 31744
      %v375 = vsel %vm373, %v339, 0
      %v378 = vsel %vm373, %v340, 0
      %v381 = vsel %vm373, %v341, 0
      %v384 = vsel %vm373, %v342, 0
      %v387 = vsel %vm373, %v343, 0
      %v390 = vsel %vm373, %v344, 0
      %v393 = vsel %vm373, %v345, 0
      %v396 = vsel %vm373, %v346, 0
      %v399 = vsel %vm373, %v347, 0
      %v402 = vsel %vm373, %v348, 0
      %v405 = vsel %vm373, %v349, 0
      %v408 = vsel %vm373, %v350, 0
      %v411 = vsel %vm373, %v351, 0
      %v414 = vsel %vm373, %v352, 0
      %v417 = vsel %vm373, %v353, 0
      %v420 = vsel %vm373, %v354, 0
      %v423 = vsel %vm373, %v355, 0
      %v426 = vsel %vm373, %v356, 0
      %v429 = vsel %vm373, %v357, 0
      %v432 = vsel %vm373, %v358, 0
      %v435 = vsel %vm373, %v359, 0
      %v438 = vsel %vm373, %v360, 0
      %v441 = vsel %vm373, %v361, 0
      %v444 = vsel %vm373, %v362, 0
      %v447 = vsel %vm373, %v363, 0
      %v450 = vsel %vm373, %v364, 0
      %v453 = vsel %vm373, %v365, 0
      %v456 = vsel %vm373, %v366, 0
      %v459 = vsel %vm373, %v367, 0
      %v462 = vsel %vm373, %v368, 0
      %v465 = vsel %vm373, %v369, 0
      %v468 = vsel %vm373, %v370, 0
      %vm470 = vcmask 1043456
      %v472 = vsel %vm470, %v372, 0
      %474 = vmatprep.subr.mxu0 0.0
      %475 = vmatpush1.msra.mxu0 0.0
      %476 = vmatprep.subr.mxu0 0.0
      %477 = vmatpush1.msra.mxu0 0.0
      %478 = vmatprep.subr.mxu0 0.0
      %479 = vmatpush1.msra.mxu0 0.0
      %480 = vmatprep.subr.mxu0 0.0
      %481 = vmatpush1.msra.mxu0 0.0
      %482 = vmatprep.subr.mxu0 0.0
      %483 = vmatpush1.msra.mxu0 0.0
      %484 = vmatprep.subr.mxu0 0.0
      %485 = vmatpush1.msra.mxu0 0.0
      %486 = vmatprep.subr.mxu0 0.0
      %487 = vmatpush1.msra.mxu0 0.0
      %488 = vmatprep.subr.mxu0 0.0
      %489 = vmatpush1.msra.mxu0 0.0
      %490 = vmatprep.subr.mxu0 0.0
      %491 = vmatpush1.msra.mxu0 0.0
      %492 = vmatprep.subr.mxu0 0.0
      %493 = vmatpush1.msra.mxu0 0.0
      %494 = vmatprep.subr.mxu0 0.0
      %495 = vmatpush1.msra.mxu0 0.0
      %496 = vmatprep.subr.mxu0 0.0
      %497 = vmatpush1.msra.mxu0 0.0
      %498 = vmatprep.subr.mxu0 0.0
      %499 = vmatpush1.msra.mxu0 0.0
      %500 = vmatprep.subr.mxu0 0.0
      %501 = vmatpush1.msra.mxu0 0.0
      %502 = vmatprep.subr.mxu0 0.0
      %503 = vmatpush1.msra.mxu0 0.0
      %504 = vmatprep.subr.mxu0 0.0
      %505 = vmatpush1.msra.mxu0 %v472
      %506 = vmatprep.subr.mxu0 0.0
      %507 = vmatpush2.msra.mxu0 0.0
      %508 = vmatprep.subr.mxu0 0.0
      %509 = vmatpush2.msra.mxu0 0.0
      %510 = vmatprep.subr.mxu0 0.0
      %511 = vmatpush2.msra.mxu0 0.0
      %512 = vmatprep.subr.mxu0 0.0
      %513 = vmatpush2.msra.mxu0 0.0
      %514 = vmatprep.subr.mxu0 0.0
      %515 = vmatpush2.msra.mxu0 0.0
      %516 = vmatprep.subr.mxu0 0.0
      %517 = vmatpush2.msra.mxu0 0.0
      %518 = vmatprep.subr.mxu0 0.0
      %519 = vmatpush2.msra.mxu0 0.0
      %520 = vmatprep.subr.mxu0 0.0
      %521 = vmatpush2.msra.mxu0 0.0
      %522 = vmatprep.subr.mxu0 0.0
      %523 = vmatpush2.msra.mxu0 0.0
      %524 = vmatprep.subr.mxu0 0.0
      %525 = vmatpush2.msra.mxu0 0.0
      %526 = vmatprep.subr.mxu0 0.0
      %527 = vmatpush2.msra.mxu0 0.0
      %528 = vmatprep.subr.mxu0 0.0
      %529 = vmatpush2.msra.mxu0 0.0
      %530 = vmatprep.subr.mxu0 0.0
      %531 = vmatpush2.msra.mxu0 0.0
      %532 = vmatprep.subr.mxu0 0.0
      %533 = vmatpush2.msra.mxu0 0.0
      %534 = vmatprep.subr.mxu0 0.0
      %535 = vmatpush2.msra.mxu0 0.0
      %536 = vmatprep.subr.mxu0 0.0
      %537 = vmatpush2.msra.mxu0 0.0
      %538 = vmatprep.mubr.f32.mxu0 0.0
      %539 = vmatmul.mubr.f32.gmra.mxu0 %v375
      %v540 = vpop.f32.mrf.mxu0
      %v541 = vadd.f32 0.0, %v540
      %v542 = vpop.f32.mrf.mxu0
      %543 = vmatprep.mubr.f32.mxu0 0.0
      %544 = vmatmul.mubr.f32.gmra.mxu0 %v378
      %v545 = vpop.f32.mrf.mxu0
      %v546 = vadd.f32 0.0, %v545
      %v547 = vpop.f32.mrf.mxu0
      %548 = vmatprep.mubr.f32.mxu0 0.0
      %549 = vmatmul.mubr.f32.gmra.mxu0 %v381
      %v550 = vpop.f32.mrf.mxu0
      %v551 = vadd.f32 0.0, %v550
      %v552 = vpop.f32.mrf.mxu0
      %553 = vmatprep.mubr.f32.mxu0 0.0
      %554 = vmatmul.mubr.f32.gmra.mxu0 %v384
      %v555 = vpop.f32.mrf.mxu0
      %v556 = vadd.f32 0.0, %v555
      %v557 = vpop.f32.mrf.mxu0
      %558 = vmatprep.mubr.f32.mxu0 0.0
      %559 = vmatmul.mubr.f32.gmra.mxu0 %v387
      %v560 = vpop.f32.mrf.mxu0
      %v561 = vadd.f32 0.0, %v560
      %v562 = vpop.f32.mrf.mxu0
      %563 = vmatprep.mubr.f32.mxu0 0.0
      %564 = vmatmul.mubr.f32.gmra.mxu0 %v390
      %v565 = vpop.f32.mrf.mxu0
      %v566 = vadd.f32 0.0, %v565
      %v567 = vpop.f32.mrf.mxu0
      %568 = vmatprep.mubr.f32.mxu0 0.0
      %569 = vmatmul.mubr.f32.gmra.mxu0 %v393
      %v570 = vpop.f32.mrf.mxu0
      %v571 = vadd.f32 0.0, %v570
      %v572 = vpop.f32.mrf.mxu0
      %573 = vmatprep.mubr.f32.mxu0 0.0
      %574 = vmatmul.mubr.f32.gmra.mxu0 %v396
      %v575 = vpop.f32.mrf.mxu0
      %v576 = vadd.f32 0.0, %v575
      %v577 = vpop.f32.mrf.mxu0
      %578 = vmatprep.mubr.f32.mxu0 0.0
      %579 = vmatmul.mubr.f32.gmra.mxu0 %v399
      %v580 = vpop.f32.mrf.mxu0
      %v581 = vadd.f32 0.0, %v580
      %v582 = vpop.f32.mrf.mxu0
      %583 = vmatprep.mubr.f32.mxu0 0.0
      %584 = vmatmul.mubr.f32.gmra.mxu0 %v402
      %v585 = vpop.f32.mrf.mxu0
      %v586 = vadd.f32 0.0, %v585
      %v587 = vpop.f32.mrf.mxu0
      %588 = vmatprep.mubr.f32.mxu0 0.0
      %589 = vmatmul.mubr.f32.gmra.mxu0 %v405
      %v590 = vpop.f32.mrf.mxu0
      %v591 = vadd.f32 0.0, %v590
      %v592 = vpop.f32.mrf.mxu0
      %593 = vmatprep.mubr.f32.mxu0 0.0
      %594 = vmatmul.mubr.f32.gmra.mxu0 %v408
      %v595 = vpop.f32.mrf.mxu0
      %v596 = vadd.f32 0.0, %v595
      %v597 = vpop.f32.mrf.mxu0
      %598 = vmatprep.mubr.f32.mxu0 0.0
      %599 = vmatmul.mubr.f32.gmra.mxu0 %v411
      %v600 = vpop.f32.mrf.mxu0
      %v601 = vadd.f32 0.0, %v600
      %v602 = vpop.f32.mrf.mxu0
      %603 = vmatprep.mubr.f32.mxu0 0.0
      %604 = vmatmul.mubr.f32.gmra.mxu0 %v414
      %v605 = vpop.f32.mrf.mxu0
      %v606 = vadd.f32 0.0, %v605
      %v607 = vpop.f32.mrf.mxu0
      %608 = vmatprep.mubr.f32.mxu0 0.0
      %609 = vmatmul.mubr.f32.gmra.mxu0 %v417
      %v610 = vpop.f32.mrf.mxu0
      %v611 = vadd.f32 0.0, %v610
      %v612 = vpop.f32.mrf.mxu0
      %613 = vmatprep.mubr.f32.mxu0 0.0
      %614 = vmatmul.mubr.f32.gmra.mxu0 %v420
      %v615 = vpop.f32.mrf.mxu0
      %v616 = vadd.f32 0.0, %v615
      %v617 = vpop.f32.mrf.mxu0
      %618 = vmatprep.mubr.f32.mxu0 0.0
      %619 = vmatmul.mubr.f32.gmra.mxu0 %v423
      %v620 = vpop.f32.mrf.mxu0
      %v621 = vadd.f32 0.0, %v620
      %v622 = vpop.f32.mrf.mxu0
      %623 = vmatprep.mubr.f32.mxu0 0.0
      %624 = vmatmul.mubr.f32.gmra.mxu0 %v426
      %v625 = vpop.f32.mrf.mxu0
      %v626 = vadd.f32 0.0, %v625
      %v627 = vpop.f32.mrf.mxu0
      %628 = vmatprep.mubr.f32.mxu0 0.0
      %629 = vmatmul.mubr.f32.gmra.mxu0 %v429
      %v630 = vpop.f32.mrf.mxu0
      %v631 = vadd.f32 0.0, %v630
      %v632 = vpop.f32.mrf.mxu0
      %633 = vmatprep.mubr.f32.mxu0 0.0
      %634 = vmatmul.mubr.f32.gmra.mxu0 %v432
      %v635 = vpop.f32.mrf.mxu0
      %v636 = vadd.f32 0.0, %v635
      %v637 = vpop.f32.mrf.mxu0
      %638 = vmatprep.mubr.f32.mxu0 0.0
      %639 = vmatmul.mubr.f32.gmra.mxu0 %v435
      %v640 = vpop.f32.mrf.mxu0
      %v641 = vadd.f32 0.0, %v640
      %v642 = vpop.f32.mrf.mxu0
      %643 = vmatprep.mubr.f32.mxu0 0.0
      %644 = vmatmul.mubr.f32.gmra.mxu0 %v438
      %v645 = vpop.f32.mrf.mxu0
      %v646 = vadd.f32 0.0, %v645
      %v647 = vpop.f32.mrf.mxu0
      %648 = vmatprep.mubr.f32.mxu0 0.0
      %649 = vmatmul.mubr.f32.gmra.mxu0 %v441
      %v650 = vpop.f32.mrf.mxu0
      %v651 = vadd.f32 0.0, %v650
      %v652 = vpop.f32.mrf.mxu0
      %653 = vmatprep.mubr.f32.mxu0 0.0
      %654 = vmatmul.mubr.f32.gmra.mxu0 %v444
      %v655 = vpop.f32.mrf.mxu0
      %v656 = vadd.f32 0.0, %v655
      %v657 = vpop.f32.mrf.mxu0
      %658 = vmatprep.mubr.f32.mxu0 0.0
      %659 = vmatmul.mubr.f32.gmra.mxu0 %v447
      %v660 = vpop.f32.mrf.mxu0
      %v661 = vadd.f32 0.0, %v660
      %v662 = vpop.f32.mrf.mxu0
      %663 = vmatprep.mubr.f32.mxu0 0.0
      %664 = vmatmul.mubr.f32.gmra.mxu0 %v450
      %v665 = vpop.f32.mrf.mxu0
      %v666 = vadd.f32 0.0, %v665
      %v667 = vpop.f32.mrf.mxu0
      %668 = vmatprep.mubr.f32.mxu0 0.0
      %669 = vmatmul.mubr.f32.gmra.mxu0 %v453
      %v670 = vpop.f32.mrf.mxu0
      %v671 = vadd.f32 0.0, %v670
      %v672 = vpop.f32.mrf.mxu0
      %673 = vmatprep.mubr.f32.mxu0 0.0
      %674 = vmatmul.mubr.f32.gmra.mxu0 %v456
      %v675 = vpop.f32.mrf.mxu0
      %v676 = vadd.f32 0.0, %v675
      %v677 = vpop.f32.mrf.mxu0
      %678 = vmatprep.mubr.f32.mxu0 0.0
      %679 = vmatmul.mubr.f32.gmra.mxu0 %v459
      %v680 = vpop.f32.mrf.mxu0
      %v681 = vadd.f32 0.0, %v680
      %v682 = vpop.f32.mrf.mxu0
      %683 = vmatprep.mubr.f32.mxu0 0.0
      %684 = vmatmul.mubr.f32.gmra.mxu0 %v462
      %v685 = vpop.f32.mrf.mxu0
      %v686 = vadd.f32 0.0, %v685
      %v687 = vpop.f32.mrf.mxu0
      %688 = vmatprep.mubr.f32.mxu0 0.0
      %689 = vmatmul.mubr.f32.gmra.mxu0 %v465
      %v690 = vpop.f32.mrf.mxu0
      %v691 = vadd.f32 0.0, %v690
      %v692 = vpop.f32.mrf.mxu0
      %693 = vmatprep.mubr.f32.mxu0 0.0
      %694 = vmatmul.mubr.f32.gmra.mxu0 %v468
      %v695 = vpop.f32.mrf.mxu0
      %v696 = vadd.f32 0.0, %v695
      %v697 = vpop.f32.mrf.mxu0
      %698 = vdwg.mxu0
      %v700 = vsel %vm373, %v306, 0
      %v703 = vsel %vm373, %v307, 0
      %v706 = vsel %vm373, %v308, 0
      %v709 = vsel %vm373, %v309, 0
      %v712 = vsel %vm373, %v310, 0
      %v715 = vsel %vm373, %v311, 0
      %v718 = vsel %vm373, %v312, 0
      %v721 = vsel %vm373, %v313, 0
      %v724 = vsel %vm373, %v314, 0
      %v727 = vsel %vm373, %v315, 0
      %v730 = vsel %vm373, %v316, 0
      %v733 = vsel %vm373, %v317, 0
      %v736 = vsel %vm373, %v318, 0
      %v739 = vsel %vm373, %v319, 0
      %v742 = vsel %vm373, %v320, 0
      %v745 = vsel %vm373, %v321, 0
      %v748 = vsel %vm373, %v322, 0
      %v751 = vsel %vm373, %v323, 0
      %v754 = vsel %vm373, %v324, 0
      %v757 = vsel %vm373, %v325, 0
      %v760 = vsel %vm373, %v326, 0
      %v763 = vsel %vm373, %v327, 0
      %v766 = vsel %vm373, %v328, 0
      %v769 = vsel %vm373, %v329, 0
      %v772 = vsel %vm373, %v330, 0
      %v775 = vsel %vm373, %v331, 0
      %v778 = vsel %vm373, %v332, 0
      %v781 = vsel %vm373, %v333, 0
      %v784 = vsel %vm373, %v334, 0
      %v787 = vsel %vm373, %v335, 0
      %v790 = vsel %vm373, %v336, 0
      %v793 = vsel %vm373, %v337, 0
      %v796 = vsel %vm470, %v338, 0
      %798 = vmatprep.subr.mxu0 0.0
      %799 = vmatpush1.msra.mxu0 0.0
      %800 = vmatprep.subr.mxu0 0.0
      %801 = vmatpush1.msra.mxu0 0.0
      %802 = vmatprep.subr.mxu0 0.0
      %803 = vmatpush1.msra.mxu0 0.0
      %804 = vmatprep.subr.mxu0 0.0
      %805 = vmatpush1.msra.mxu0 0.0
      %806 = vmatprep.subr.mxu0 0.0
      %807 = vmatpush1.msra.mxu0 0.0
      %808 = vmatprep.subr.mxu0 0.0
      %809 = vmatpush1.msra.mxu0 0.0
      %810 = vmatprep.subr.mxu0 0.0
      %811 = vmatpush1.msra.mxu0 0.0
      %812 = vmatprep.subr.mxu0 0.0
      %813 = vmatpush1.msra.mxu0 0.0
      %814 = vmatprep.subr.mxu0 0.0
      %815 = vmatpush1.msra.mxu0 0.0
      %816 = vmatprep.subr.mxu0 0.0
      %817 = vmatpush1.msra.mxu0 0.0
      %818 = vmatprep.subr.mxu0 0.0
      %819 = vmatpush1.msra.mxu0 0.0
      %820 = vmatprep.subr.mxu0 0.0
      %821 = vmatpush1.msra.mxu0 0.0
      %822 = vmatprep.subr.mxu0 0.0
      %823 = vmatpush1.msra.mxu0 0.0
      %824 = vmatprep.subr.mxu0 0.0
      %825 = vmatpush1.msra.mxu0 0.0
      %826 = vmatprep.subr.mxu0 0.0
      %827 = vmatpush1.msra.mxu0 0.0
      %828 = vmatprep.subr.mxu0 0.0
      %829 = vmatpush1.msra.mxu0 %v796
      %830 = vmatprep.subr.mxu0 0.0
      %831 = vmatpush2.msra.mxu0 0.0
      %832 = vmatprep.subr.mxu0 0.0
      %833 = vmatpush2.msra.mxu0 0.0
      %834 = vmatprep.subr.mxu0 0.0
      %835 = vmatpush2.msra.mxu0 0.0
      %836 = vmatprep.subr.mxu0 0.0
      %837 = vmatpush2.msra.mxu0 0.0
      %838 = vmatprep.subr.mxu0 0.0
      %839 = vmatpush2.msra.mxu0 0.0
      %840 = vmatprep.subr.mxu0 0.0
      %841 = vmatpush2.msra.mxu0 0.0
      %842 = vmatprep.subr.mxu0 0.0
      %843 = vmatpush2.msra.mxu0 0.0
      %844 = vmatprep.subr.mxu0 0.0
      %845 = vmatpush2.msra.mxu0 0.0
      %846 = vmatprep.subr.mxu0 0.0
      %847 = vmatpush2.msra.mxu0 0.0
      %848 = vmatprep.subr.mxu0 0.0
      %849 = vmatpush2.msra.mxu0 0.0
      %850 = vmatprep.subr.mxu0 0.0
      %851 = vmatpush2.msra.mxu0 0.0
      %852 = vmatprep.subr.mxu0 0.0
      %853 = vmatpush2.msra.mxu0 0.0
      %854 = vmatprep.subr.mxu0 0.0
      %855 = vmatpush2.msra.mxu0 0.0
      %856 = vmatprep.subr.mxu0 0.0
      %857 = vmatpush2.msra.mxu0 0.0
      %858 = vmatprep.subr.mxu0 0.0
      %859 = vmatpush2.msra.mxu0 0.0
      %860 = vmatprep.subr.mxu0 0.0
      %861 = vmatpush2.msra.mxu0 0.0
      %862 = vmatprep.mubr.f32.mxu0 0.0
      %863 = vmatmul.mubr.f32.gmra.mxu0 %v700
      %v864 = vpop.f32.mrf.mxu0
      %v865 = vadd.f32 %v541, %v864
      %v866 = vpop.f32.mrf.mxu0
      %867 = vmatprep.mubr.f32.mxu0 0.0
      %868 = vmatmul.mubr.f32.gmra.mxu0 %v703
      %v869 = vpop.f32.mrf.mxu0
      %v870 = vadd.f32 %v546, %v869
      %v871 = vpop.f32.mrf.mxu0
      %872 = vmatprep.mubr.f32.mxu0 0.0
      %873 = vmatmul.mubr.f32.gmra.mxu0 %v706
      %v874 = vpop.f32.mrf.mxu0
      %v875 = vadd.f32 %v551, %v874
      %v876 = vpop.f32.mrf.mxu0
      %877 = vmatprep.mubr.f32.mxu0 0.0
      %878 = vmatmul.mubr.f32.gmra.mxu0 %v709
      %v879 = vpop.f32.mrf.mxu0
      %v880 = vadd.f32 %v556, %v879
      %v881 = vpop.f32.mrf.mxu0
      %882 = vmatprep.mubr.f32.mxu0 0.0
      %883 = vmatmul.mubr.f32.gmra.mxu0 %v712
      %v884 = vpop.f32.mrf.mxu0
      %v885 = vadd.f32 %v561, %v884
      %v886 = vpop.f32.mrf.mxu0
      %887 = vmatprep.mubr.f32.mxu0 0.0
      %888 = vmatmul.mubr.f32.gmra.mxu0 %v715
      %v889 = vpop.f32.mrf.mxu0
      %v890 = vadd.f32 %v566, %v889
      %v891 = vpop.f32.mrf.mxu0
      %892 = vmatprep.mubr.f32.mxu0 0.0
      %893 = vmatmul.mubr.f32.gmra.mxu0 %v718
      %v894 = vpop.f32.mrf.mxu0
      %v895 = vadd.f32 %v571, %v894
      %v896 = vpop.f32.mrf.mxu0
      %897 = vmatprep.mubr.f32.mxu0 0.0
      %898 = vmatmul.mubr.f32.gmra.mxu0 %v721
      %v899 = vpop.f32.mrf.mxu0
      %v900 = vadd.f32 %v576, %v899
      %v901 = vpop.f32.mrf.mxu0
      %902 = vmatprep.mubr.f32.mxu0 0.0
      %903 = vmatmul.mubr.f32.gmra.mxu0 %v724
      %v904 = vpop.f32.mrf.mxu0
      %v905 = vadd.f32 %v581, %v904
      %v906 = vpop.f32.mrf.mxu0
      %907 = vmatprep.mubr.f32.mxu0 0.0
      %908 = vmatmul.mubr.f32.gmra.mxu0 %v727
      %v909 = vpop.f32.mrf.mxu0
      %v910 = vadd.f32 %v586, %v909
      %v911 = vpop.f32.mrf.mxu0
      %912 = vmatprep.mubr.f32.mxu0 0.0
      %913 = vmatmul.mubr.f32.gmra.mxu0 %v730
      %v914 = vpop.f32.mrf.mxu0
      %v915 = vadd.f32 %v591, %v914
      %v916 = vpop.f32.mrf.mxu0
      %917 = vmatprep.mubr.f32.mxu0 0.0
      %918 = vmatmul.mubr.f32.gmra.mxu0 %v733
      %v919 = vpop.f32.mrf.mxu0
      %v920 = vadd.f32 %v596, %v919
      %v921 = vpop.f32.mrf.mxu0
      %922 = vmatprep.mubr.f32.mxu0 0.0
      %923 = vmatmul.mubr.f32.gmra.mxu0 %v736
      %v924 = vpop.f32.mrf.mxu0
      %v925 = vadd.f32 %v601, %v924
      %v926 = vpop.f32.mrf.mxu0
      %927 = vmatprep.mubr.f32.mxu0 0.0
      %928 = vmatmul.mubr.f32.gmra.mxu0 %v739
      %v929 = vpop.f32.mrf.mxu0
      %v930 = vadd.f32 %v606, %v929
      %v931 = vpop.f32.mrf.mxu0
      %932 = vmatprep.mubr.f32.mxu0 0.0
      %933 = vmatmul.mubr.f32.gmra.mxu0 %v742
      %v934 = vpop.f32.mrf.mxu0
      %v935 = vadd.f32 %v611, %v934
      %v936 = vpop.f32.mrf.mxu0
      %937 = vmatprep.mubr.f32.mxu0 0.0
      %938 = vmatmul.mubr.f32.gmra.mxu0 %v745
      %v939 = vpop.f32.mrf.mxu0
      %v940 = vadd.f32 %v616, %v939
      %v941 = vpop.f32.mrf.mxu0
      %942 = vmatprep.mubr.f32.mxu0 0.0
      %943 = vmatmul.mubr.f32.gmra.mxu0 %v748
      %v944 = vpop.f32.mrf.mxu0
      %v945 = vadd.f32 %v621, %v944
      %v946 = vpop.f32.mrf.mxu0
      %947 = vmatprep.mubr.f32.mxu0 0.0
      %948 = vmatmul.mubr.f32.gmra.mxu0 %v751
      %v949 = vpop.f32.mrf.mxu0
      %v950 = vadd.f32 %v626, %v949
      %v951 = vpop.f32.mrf.mxu0
      %952 = vmatprep.mubr.f32.mxu0 0.0
      %953 = vmatmul.mubr.f32.gmra.mxu0 %v754
      %v954 = vpop.f32.mrf.mxu0
      %v955 = vadd.f32 %v631, %v954
      %v956 = vpop.f32.mrf.mxu0
      %957 = vmatprep.mubr.f32.mxu0 0.0
      %958 = vmatmul.mubr.f32.gmra.mxu0 %v757
      %v959 = vpop.f32.mrf.mxu0
      %v960 = vadd.f32 %v636, %v959
      %v961 = vpop.f32.mrf.mxu0
      %962 = vmatprep.mubr.f32.mxu0 0.0
      %963 = vmatmul.mubr.f32.gmra.mxu0 %v760
      %v964 = vpop.f32.mrf.mxu0
      %v965 = vadd.f32 %v641, %v964
      %v966 = vpop.f32.mrf.mxu0
      %967 = vmatprep.mubr.f32.mxu0 0.0
      %968 = vmatmul.mubr.f32.gmra.mxu0 %v763
      %v969 = vpop.f32.mrf.mxu0
      %v970 = vadd.f32 %v646, %v969
      %v971 = vpop.f32.mrf.mxu0
      %972 = vmatprep.mubr.f32.mxu0 0.0
      %973 = vmatmul.mubr.f32.gmra.mxu0 %v766
      %v974 = vpop.f32.mrf.mxu0
      %v975 = vadd.f32 %v651, %v974
      %v976 = vpop.f32.mrf.mxu0
      %977 = vmatprep.mubr.f32.mxu0 0.0
      %978 = vmatmul.mubr.f32.gmra.mxu0 %v769
      %v979 = vpop.f32.mrf.mxu0
      %v980 = vadd.f32 %v656, %v979
      %v981 = vpop.f32.mrf.mxu0
      %982 = vmatprep.mubr.f32.mxu0 0.0
      %983 = vmatmul.mubr.f32.gmra.mxu0 %v772
      %v984 = vpop.f32.mrf.mxu0
      %v985 = vadd.f32 %v661, %v984
      %v986 = vpop.f32.mrf.mxu0
      %987 = vmatprep.mubr.f32.mxu0 0.0
      %988 = vmatmul.mubr.f32.gmra.mxu0 %v775
      %v989 = vpop.f32.mrf.mxu0
      %v990 = vadd.f32 %v666, %v989
      %v991 = vpop.f32.mrf.mxu0
      %992 = vmatprep.mubr.f32.mxu0 0.0
      %993 = vmatmul.mubr.f32.gmra.mxu0 %v778
      %v994 = vpop.f32.mrf.mxu0
      %v995 = vadd.f32 %v671, %v994
      %v996 = vpop.f32.mrf.mxu0
      %997 = vmatprep.mubr.f32.mxu0 0.0
      %998 = vmatmul.mubr.f32.gmra.mxu0 %v781
      %v999 = vpop.f32.mrf.mxu0
      %v1000 = vadd.f32 %v676, %v999
      %v1001 = vpop.f32.mrf.mxu0
      %1002 = vmatprep.mubr.f32.mxu0 0.0
      %1003 = vmatmul.mubr.f32.gmra.mxu0 %v784
      %v1004 = vpop.f32.mrf.mxu0
      %v1005 = vadd.f32 %v681, %v1004
      %v1006 = vpop.f32.mrf.mxu0
      %1007 = vmatprep.mubr.f32.mxu0 0.0
      %1008 = vmatmul.mubr.f32.gmra.mxu0 %v787
      %v1009 = vpop.f32.mrf.mxu0
      %v1010 = vadd.f32 %v686, %v1009
      %v1011 = vpop.f32.mrf.mxu0
      %1012 = vmatprep.mubr.f32.mxu0 0.0
      %1013 = vmatmul.mubr.f32.gmra.mxu0 %v790
      %v1014 = vpop.f32.mrf.mxu0
      %v1015 = vadd.f32 %v691, %v1014
      %v1016 = vpop.f32.mrf.mxu0
      %1017 = vmatprep.mubr.f32.mxu0 0.0
      %1018 = vmatmul.mubr.f32.gmra.mxu0 %v793
      %v1019 = vpop.f32.mrf.mxu0
      %v1020 = vadd.f32 %v696, %v1019
      %v1021 = vpop.f32.mrf.mxu0
      %1022 = vdwg.mxu0
      %v1023 = vld [vmem:[%s300 + $0x2] sm:$0xff]
      %v1024 = vld [vmem:[%s300 + $0xa] sm:$0xff]
      %v1025 = vld [vmem:[%s300 + $0x1a] sm:$0xff]
      %v1026 = vld [vmem:[%s300 + $0x22] sm:$0xff]
      %v1027 = vld [vmem:[%s300 + $0x32] sm:$0xff]
      %v1028 = vld [vmem:[%s300 + $0x3a] sm:$0xff]
      %v1029 = vld [vmem:[%s300 + $0x4a] sm:$0xff]
      %v1030 = vld [vmem:[%s300 + $0x52] sm:$0xff]
      %v1031 = vld [vmem:[%s300 + $0x62] sm:$0xff]
      %v1032 = vld [vmem:[%s300 + $0x6a] sm:$0xff]
      %v1033 = vld [vmem:[%s300 + $0x7a] sm:$0xff]
      %v1034 = vld [vmem:[%s300 + $0x82] sm:$0xff]
      %v1035 = vld [vmem:[%s300 + $0x92] sm:$0xff]
      %v1036 = vld [vmem:[%s300 + $0x9a] sm:$0xff]
      %v1037 = vld [vmem:[%s300 + $0xaa] sm:$0xff]
      %v1038 = vld [vmem:[%s300 + $0xb2] sm:$0xff]
      %v1039 = vld [vmem:[%s300 + $0xc2] sm:$0xff]
      %v1040 = vld [vmem:[%s300 + $0xca] sm:$0xff]
      %v1041 = vld [vmem:[%s300 + $0xda] sm:$0xff]
      %v1042 = vld [vmem:[%s300 + $0xe2] sm:$0xff]
      %v1043 = vld [vmem:[%s300 + $0xf2] sm:$0xff]
      %v1044 = vld [vmem:[%s300 + $0xfa] sm:$0xff]
      %v1045 = vld [vmem:[%s300 + $0x10a] sm:$0xff]
      %v1046 = vld [vmem:[%s300 + $0x112] sm:$0xff]
      %v1047 = vld [vmem:[%s300 + $0x122] sm:$0xff]
      %v1048 = vld [vmem:[%s300 + $0x12a] sm:$0xff]
      %v1049 = vld [vmem:[%s300 + $0x13a] sm:$0xff]
      %v1050 = vld [vmem:[%s300 + $0x142] sm:$0xff]
      %v1051 = vld [vmem:[%s300 + $0x152] sm:$0xff]
      %v1052 = vld [vmem:[%s300 + $0x15a] sm:$0xff]
      %v1053 = vld [vmem:[%s300 + $0x16a] sm:$0xff]
      %v1054 = vld [vmem:[%s300 + $0x172] sm:$0xff]
      %s1055 = scalar_lea.vmem %s1, 8
      %v1056 = vld [vmem:[%s1055] sm:$0xf]
      %v1058 = vsel %vm373, %v1023, 0
      %v1061 = vsel %vm373, %v1024, 0
      %v1064 = vsel %vm373, %v1025, 0
      %v1067 = vsel %vm373, %v1026, 0
      %v1070 = vsel %vm373, %v1027, 0
      %v1073 = vsel %vm373, %v1028, 0
      %v1076 = vsel %vm373, %v1029, 0
      %v1079 = vsel %vm373, %v1030, 0
      %v1082 = vsel %vm373, %v1031, 0
      %v1085 = vsel %vm373, %v1032, 0
      %v1088 = vsel %vm373, %v1033, 0
      %v1091 = vsel %vm373, %v1034, 0
      %v1094 = vsel %vm373, %v1035, 0
      %v1097 = vsel %vm373, %v1036, 0
      %v1100 = vsel %vm373, %v1037, 0
      %v1103 = vsel %vm373, %v1038, 0
      %v1106 = vsel %vm373, %v1039, 0
      %v1109 = vsel %vm373, %v1040, 0
      %v1112 = vsel %vm373, %v1041, 0
      %v1115 = vsel %vm373, %v1042, 0
      %v1118 = vsel %vm373, %v1043, 0
      %v1121 = vsel %vm373, %v1044, 0
      %v1124 = vsel %vm373, %v1045, 0
      %v1127 = vsel %vm373, %v1046, 0
      %v1130 = vsel %vm373, %v1047, 0
      %v1133 = vsel %vm373, %v1048, 0
      %v1136 = vsel %vm373, %v1049, 0
      %v1139 = vsel %vm373, %v1050, 0
      %v1142 = vsel %vm373, %v1051, 0
      %v1145 = vsel %vm373, %v1052, 0
      %v1148 = vsel %vm373, %v1053, 0
      %v1151 = vsel %vm373, %v1054, 0
      %v1154 = vsel %vm470, %v1056, 0
      %1156 = vmatprep.subr.mxu0 0.0
      %1157 = vmatpush1.msra.mxu0 0.0
      %1158 = vmatprep.subr.mxu0 0.0
      %1159 = vmatpush1.msra.mxu0 0.0
      %1160 = vmatprep.subr.mxu0 0.0
      %1161 = vmatpush1.msra.mxu0 0.0
      %1162 = vmatprep.subr.mxu0 0.0
      %1163 = vmatpush1.msra.mxu0 0.0
      %1164 = vmatprep.subr.mxu0 0.0
      %1165 = vmatpush1.msra.mxu0 0.0
      %1166 = vmatprep.subr.mxu0 0.0
      %1167 = vmatpush1.msra.mxu0 0.0
      %1168 = vmatprep.subr.mxu0 0.0
      %1169 = vmatpush1.msra.mxu0 0.0
      %1170 = vmatprep.subr.mxu0 0.0
      %1171 = vmatpush1.msra.mxu0 0.0
      %1172 = vmatprep.subr.mxu0 0.0
      %1173 = vmatpush1.msra.mxu0 0.0
      %1174 = vmatprep.subr.mxu0 0.0
      %1175 = vmatpush1.msra.mxu0 0.0
      %1176 = vmatprep.subr.mxu0 0.0
      %1177 = vmatpush1.msra.mxu0 0.0
      %1178 = vmatprep.subr.mxu0 0.0
      %1179 = vmatpush1.msra.mxu0 0.0
      %1180 = vmatprep.subr.mxu0 0.0
      %1181 = vmatpush1.msra.mxu0 0.0
      %1182 = vmatprep.subr.mxu0 0.0
      %1183 = vmatpush1.msra.mxu0 0.0
      %1184 = vmatprep.subr.mxu0 0.0
      %1185 = vmatpush1.msra.mxu0 0.0
      %1186 = vmatprep.subr.mxu0 0.0
      %1187 = vmatpush1.msra.mxu0 %v1154
      %1188 = vmatprep.subr.mxu0 0.0
      %1189 = vmatpush2.msra.mxu0 0.0
      %1190 = vmatprep.subr.mxu0 0.0
      %1191 = vmatpush2.msra.mxu0 0.0
      %1192 = vmatprep.subr.mxu0 0.0
      %1193 = vmatpush2.msra.mxu0 0.0
      %1194 = vmatprep.subr.mxu0 0.0
      %1195 = vmatpush2.msra.mxu0 0.0
      %1196 = vmatprep.subr.mxu0 0.0
      %1197 = vmatpush2.msra.mxu0 0.0
      %1198 = vmatprep.subr.mxu0 0.0
      %1199 = vmatpush2.msra.mxu0 0.0
      %1200 = vmatprep.subr.mxu0 0.0
      %1201 = vmatpush2.msra.mxu0 0.0
      %1202 = vmatprep.subr.mxu0 0.0
      %1203 = vmatpush2.msra.mxu0 0.0
      %1204 = vmatprep.subr.mxu0 0.0
      %1205 = vmatpush2.msra.mxu0 0.0
      %1206 = vmatprep.subr.mxu0 0.0
      %1207 = vmatpush2.msra.mxu0 0.0
      %1208 = vmatprep.subr.mxu0 0.0
      %1209 = vmatpush2.msra.mxu0 0.0
      %1210 = vmatprep.subr.mxu0 0.0
      %1211 = vmatpush2.msra.mxu0 0.0
      %1212 = vmatprep.subr.mxu0 0.0
      %1213 = vmatpush2.msra.mxu0 0.0
      %1214 = vmatprep.subr.mxu0 0.0
      %1215 = vmatpush2.msra.mxu0 0.0
      %1216 = vmatprep.subr.mxu0 0.0
      %1217 = vmatpush2.msra.mxu0 0.0
      %1218 = vmatprep.subr.mxu0 0.0
      %1219 = vmatpush2.msra.mxu0 0.0
      %1220 = vmatprep.mubr.f32.mxu0 0.0
      %1221 = vmatmul.mubr.f32.gmra.mxu0 %v1058
      %v1222 = vpop.f32.mrf.mxu0
      %v1223 = vadd.f32 0.0, %v1222
      %v1224 = vpop.f32.mrf.mxu0
      %1225 = vmatprep.mubr.f32.mxu0 0.0
      %1226 = vmatmul.mubr.f32.gmra.mxu0 %v1061
      %v1227 = vpop.f32.mrf.mxu0
      %v1228 = vadd.f32 0.0, %v1227
      %v1229 = vpop.f32.mrf.mxu0
      %1230 = vmatprep.mubr.f32.mxu0 0.0
      %1231 = vmatmul.mubr.f32.gmra.mxu0 %v1064
      %v1232 = vpop.f32.mrf.mxu0
      %v1233 = vadd.f32 0.0, %v1232
      %v1234 = vpop.f32.mrf.mxu0
      %1235 = vmatprep.mubr.f32.mxu0 0.0
      %1236 = vmatmul.mubr.f32.gmra.mxu0 %v1067
      %v1237 = vpop.f32.mrf.mxu0
      %v1238 = vadd.f32 0.0, %v1237
      %v1239 = vpop.f32.mrf.mxu0
      %1240 = vmatprep.mubr.f32.mxu0 0.0
      %1241 = vmatmul.mubr.f32.gmra.mxu0 %v1070
      %v1242 = vpop.f32.mrf.mxu0
      %v1243 = vadd.f32 0.0, %v1242
      %v1244 = vpop.f32.mrf.mxu0
      %1245 = vmatprep.mubr.f32.mxu0 0.0
      %1246 = vmatmul.mubr.f32.gmra.mxu0 %v1073
      %v1247 = vpop.f32.mrf.mxu0
      %v1248 = vadd.f32 0.0, %v1247
      %v1249 = vpop.f32.mrf.mxu0
      %1250 = vmatprep.mubr.f32.mxu0 0.0
      %1251 = vmatmul.mubr.f32.gmra.mxu0 %v1076
      %v1252 = vpop.f32.mrf.mxu0
      %v1253 = vadd.f32 0.0, %v1252
      %v1254 = vpop.f32.mrf.mxu0
      %1255 = vmatprep.mubr.f32.mxu0 0.0
      %1256 = vmatmul.mubr.f32.gmra.mxu0 %v1079
      %v1257 = vpop.f32.mrf.mxu0
      %v1258 = vadd.f32 0.0, %v1257
      %v1259 = vpop.f32.mrf.mxu0
      %1260 = vmatprep.mubr.f32.mxu0 0.0
      %1261 = vmatmul.mubr.f32.gmra.mxu0 %v1082
      %v1262 = vpop.f32.mrf.mxu0
      %v1263 = vadd.f32 0.0, %v1262
      %v1264 = vpop.f32.mrf.mxu0
      %1265 = vmatprep.mubr.f32.mxu0 0.0
      %1266 = vmatmul.mubr.f32.gmra.mxu0 %v1085
      %v1267 = vpop.f32.mrf.mxu0
      %v1268 = vadd.f32 0.0, %v1267
      %v1269 = vpop.f32.mrf.mxu0
      %1270 = vmatprep.mubr.f32.mxu0 0.0
      %1271 = vmatmul.mubr.f32.gmra.mxu0 %v1088
      %v1272 = vpop.f32.mrf.mxu0
      %v1273 = vadd.f32 0.0, %v1272
      %v1274 = vpop.f32.mrf.mxu0
      %1275 = vmatprep.mubr.f32.mxu0 0.0
      %1276 = vmatmul.mubr.f32.gmra.mxu0 %v1091
      %v1277 = vpop.f32.mrf.mxu0
      %v1278 = vadd.f32 0.0, %v1277
      %v1279 = vpop.f32.mrf.mxu0
      %1280 = vmatprep.mubr.f32.mxu0 0.0
      %1281 = vmatmul.mubr.f32.gmra.mxu0 %v1094
      %v1282 = vpop.f32.mrf.mxu0
      %v1283 = vadd.f32 0.0, %v1282
      %v1284 = vpop.f32.mrf.mxu0
      %1285 = vmatprep.mubr.f32.mxu0 0.0
      %1286 = vmatmul.mubr.f32.gmra.mxu0 %v1097
      %v1287 = vpop.f32.mrf.mxu0
      %v1288 = vadd.f32 0.0, %v1287
      %v1289 = vpop.f32.mrf.mxu0
      %1290 = vmatprep.mubr.f32.mxu0 0.0
      %1291 = vmatmul.mubr.f32.gmra.mxu0 %v1100
      %v1292 = vpop.f32.mrf.mxu0
      %v1293 = vadd.f32 0.0, %v1292
      %v1294 = vpop.f32.mrf.mxu0
      %1295 = vmatprep.mubr.f32.mxu0 0.0
      %1296 = vmatmul.mubr.f32.gmra.mxu0 %v1103
      %v1297 = vpop.f32.mrf.mxu0
      %v1298 = vadd.f32 0.0, %v1297
      %v1299 = vpop.f32.mrf.mxu0
      %1300 = vmatprep.mubr.f32.mxu0 0.0
      %1301 = vmatmul.mubr.f32.gmra.mxu0 %v1106
      %v1302 = vpop.f32.mrf.mxu0
      %v1303 = vadd.f32 0.0, %v1302
      %v1304 = vpop.f32.mrf.mxu0
      %1305 = vmatprep.mubr.f32.mxu0 0.0
      %1306 = vmatmul.mubr.f32.gmra.mxu0 %v1109
      %v1307 = vpop.f32.mrf.mxu0
      %v1308 = vadd.f32 0.0, %v1307
      %v1309 = vpop.f32.mrf.mxu0
      %1310 = vmatprep.mubr.f32.mxu0 0.0
      %1311 = vmatmul.mubr.f32.gmra.mxu0 %v1112
      %v1312 = vpop.f32.mrf.mxu0
      %v1313 = vadd.f32 0.0, %v1312
      %v1314 = vpop.f32.mrf.mxu0
      %1315 = vmatprep.mubr.f32.mxu0 0.0
      %1316 = vmatmul.mubr.f32.gmra.mxu0 %v1115
      %v1317 = vpop.f32.mrf.mxu0
      %v1318 = vadd.f32 0.0, %v1317
      %v1319 = vpop.f32.mrf.mxu0
      %1320 = vmatprep.mubr.f32.mxu0 0.0
      %1321 = vmatmul.mubr.f32.gmra.mxu0 %v1118
      %v1322 = vpop.f32.mrf.mxu0
      %v1323 = vadd.f32 0.0, %v1322
      %v1324 = vpop.f32.mrf.mxu0
      %1325 = vmatprep.mubr.f32.mxu0 0.0
      %1326 = vmatmul.mubr.f32.gmra.mxu0 %v1121
      %v1327 = vpop.f32.mrf.mxu0
      %v1328 = vadd.f32 0.0, %v1327
      %v1329 = vpop.f32.mrf.mxu0
      %1330 = vmatprep.mubr.f32.mxu0 0.0
      %1331 = vmatmul.mubr.f32.gmra.mxu0 %v1124
      %v1332 = vpop.f32.mrf.mxu0
      %v1333 = vadd.f32 0.0, %v1332
      %v1334 = vpop.f32.mrf.mxu0
      %1335 = vmatprep.mubr.f32.mxu0 0.0
      %1336 = vmatmul.mubr.f32.gmra.mxu0 %v1127
      %v1337 = vpop.f32.mrf.mxu0
      %v1338 = vadd.f32 0.0, %v1337
      %v1339 = vpop.f32.mrf.mxu0
      %1340 = vmatprep.mubr.f32.mxu0 0.0
      %1341 = vmatmul.mubr.f32.gmra.mxu0 %v1130
      %v1342 = vpop.f32.mrf.mxu0
      %v1343 = vadd.f32 0.0, %v1342
      %v1344 = vpop.f32.mrf.mxu0
      %1345 = vmatprep.mubr.f32.mxu0 0.0
      %1346 = vmatmul.mubr.f32.gmra.mxu0 %v1133
      %v1347 = vpop.f32.mrf.mxu0
      %v1348 = vadd.f32 0.0, %v1347
      %v1349 = vpop.f32.mrf.mxu0
      %1350 = vmatprep.mubr.f32.mxu0 0.0
      %1351 = vmatmul.mubr.f32.gmra.mxu0 %v1136
      %v1352 = vpop.f32.mrf.mxu0
      %v1353 = vadd.f32 0.0, %v1352
      %v1354 = vpop.f32.mrf.mxu0
      %1355 = vmatprep.mubr.f32.mxu0 0.0
      %1356 = vmatmul.mubr.f32.gmra.mxu0 %v1139
      %v1357 = vpop.f32.mrf.mxu0
      %v1358 = vadd.f32 0.0, %v1357
      %v1359 = vpop.f32.mrf.mxu0
      %1360 = vmatprep.mubr.f32.mxu0 0.0
      %1361 = vmatmul.mubr.f32.gmra.mxu0 %v1142
      %v1362 = vpop.f32.mrf.mxu0
      %v1363 = vadd.f32 0.0, %v1362
      %v1364 = vpop.f32.mrf.mxu0
      %1365 = vmatprep.mubr.f32.mxu0 0.0
      %1366 = vmatmul.mubr.f32.gmra.mxu0 %v1145
      %v1367 = vpop.f32.mrf.mxu0
      %v1368 = vadd.f32 0.0, %v1367
      %v1369 = vpop.f32.mrf.mxu0
      %1370 = vmatprep.mubr.f32.mxu0 0.0
      %1371 = vmatmul.mubr.f32.gmra.mxu0 %v1148
      %v1372 = vpop.f32.mrf.mxu0
      %v1373 = vadd.f32 0.0, %v1372
      %v1374 = vpop.f32.mrf.mxu0
      %1375 = vmatprep.mubr.f32.mxu0 0.0
      %1376 = vmatmul.mubr.f32.gmra.mxu0 %v1151
      %v1377 = vpop.f32.mrf.mxu0
      %v1378 = vadd.f32 0.0, %v1377
      %v1379 = vpop.f32.mrf.mxu0
      %1380 = vdwg.mxu0
      %v1381 = vadd.f32 %v865, %v1223
      %v1382 = vadd.f32 %v870, %v1228
      %v1383 = vadd.f32 %v875, %v1233
      %v1384 = vadd.f32 %v880, %v1238
      %v1385 = vadd.f32 %v885, %v1243
      %v1386 = vadd.f32 %v890, %v1248
      %v1387 = vadd.f32 %v895, %v1253
      %v1388 = vadd.f32 %v900, %v1258
      %v1389 = vadd.f32 %v905, %v1263
      %v1390 = vadd.f32 %v910, %v1268
      %v1391 = vadd.f32 %v915, %v1273
      %v1392 = vadd.f32 %v920, %v1278
      %v1393 = vadd.f32 %v925, %v1283
      %v1394 = vadd.f32 %v930, %v1288
      %v1395 = vadd.f32 %v935, %v1293
      %v1396 = vadd.f32 %v940, %v1298
      %v1397 = vadd.f32 %v945, %v1303
      %v1398 = vadd.f32 %v950, %v1308
      %v1399 = vadd.f32 %v955, %v1313
      %v1400 = vadd.f32 %v960, %v1318
      %v1401 = vadd.f32 %v965, %v1323
      %v1402 = vadd.f32 %v970, %v1328
      %v1403 = vadd.f32 %v975, %v1333
      %v1404 = vadd.f32 %v980, %v1338
      %v1405 = vadd.f32 %v985, %v1343
      %v1406 = vadd.f32 %v990, %v1348
      %v1407 = vadd.f32 %v995, %v1353
      %v1408 = vadd.f32 %v1000, %v1358
      %v1409 = vadd.f32 %v1005, %v1363
      %v1410 = vadd.f32 %v1010, %v1368
      %v1411 = vadd.f32 %v1015, %v1373
      %v1412 = vadd.f32 %v1020, %v1378
      %s1413 = scalar_lea.vmem %s300, 24
      %v1414 = vld [vmem:[%s1413] sm:$0xff]
      %v1415 = vld [vmem:[%s1413 + $0x8] sm:$0xff]
      %v1416 = vld [vmem:[%s1413 + $0x18] sm:$0xff]
      %v1417 = vld [vmem:[%s1413 + $0x20] sm:$0xff]
      %v1418 = vld [vmem:[%s1413 + $0x30] sm:$0xff]
      %v1419 = vld [vmem:[%s1413 + $0x38] sm:$0xff]
      %v1420 = vld [vmem:[%s1413 + $0x48] sm:$0xff]
      %v1421 = vld [vmem:[%s1413 + $0x50] sm:$0xff]
      %v1422 = vld [vmem:[%s1413 + $0x60] sm:$0xff]
      %v1423 = vld [vmem:[%s1413 + $0x68] sm:$0xff]
      %v1424 = vld [vmem:[%s1413 + $0x78] sm:$0xff]
      %v1425 = vld [vmem:[%s1413 + $0x80] sm:$0xff]
      %v1426 = vld [vmem:[%s1413 + $0x90] sm:$0xff]
      %v1427 = vld [vmem:[%s1413 + $0x98] sm:$0xff]
      %v1428 = vld [vmem:[%s1413 + $0xa8] sm:$0xff]
      %v1429 = vld [vmem:[%s1413 + $0xb0] sm:$0xff]
      %v1430 = vld [vmem:[%s1413 + $0xc0] sm:$0xff]
      %v1431 = vld [vmem:[%s1413 + $0xc8] sm:$0xff]
      %v1432 = vld [vmem:[%s1413 + $0xd8] sm:$0xff]
      %v1433 = vld [vmem:[%s1413 + $0xe0] sm:$0xff]
      %v1434 = vld [vmem:[%s1413 + $0xf0] sm:$0xff]
      %v1435 = vld [vmem:[%s1413 + $0xf8] sm:$0xff]
      %v1436 = vld [vmem:[%s1413 + $0x108] sm:$0xff]
      %v1437 = vld [vmem:[%s1413 + $0x110] sm:$0xff]
      %v1438 = vld [vmem:[%s1413 + $0x120] sm:$0xff]
      %v1439 = vld [vmem:[%s1413 + $0x128] sm:$0xff]
      %v1440 = vld [vmem:[%s1413 + $0x138] sm:$0xff]
      %v1441 = vld [vmem:[%s1413 + $0x140] sm:$0xff]
      %v1442 = vld [vmem:[%s1413 + $0x150] sm:$0xff]
      %v1443 = vld [vmem:[%s1413 + $0x158] sm:$0xff]
      %v1444 = vld [vmem:[%s1413 + $0x168] sm:$0xff]
      %v1445 = vld [vmem:[%s1413 + $0x170] sm:$0xff]
      %s1446 = scalar_lea.vmem %s1, 12
      %v1447 = vld [vmem:[%s1446] sm:$0xf]
      %v1449 = vsel %vm373, %v1414, 0
      %v1452 = vsel %vm373, %v1415, 0
      %v1455 = vsel %vm373, %v1416, 0
      %v1458 = vsel %vm373, %v1417, 0
      %v1461 = vsel %vm373, %v1418, 0
      %v1464 = vsel %vm373, %v1419, 0
      %v1467 = vsel %vm373, %v1420, 0
      %v1470 = vsel %vm373, %v1421, 0
      %v1473 = vsel %vm373, %v1422, 0
      %v1476 = vsel %vm373, %v1423, 0
      %v1479 = vsel %vm373, %v1424, 0
      %v1482 = vsel %vm373, %v1425, 0
      %v1485 = vsel %vm373, %v1426, 0
      %v1488 = vsel %vm373, %v1427, 0
      %v1491 = vsel %vm373, %v1428, 0
      %v1494 = vsel %vm373, %v1429, 0
      %v1497 = vsel %vm373, %v1430, 0
      %v1500 = vsel %vm373, %v1431, 0
      %v1503 = vsel %vm373, %v1432, 0
      %v1506 = vsel %vm373, %v1433, 0
      %v1509 = vsel %vm373, %v1434, 0
      %v1512 = vsel %vm373, %v1435, 0
      %v1515 = vsel %vm373, %v1436, 0
      %v1518 = vsel %vm373, %v1437, 0
      %v1521 = vsel %vm373, %v1438, 0
      %v1524 = vsel %vm373, %v1439, 0
      %v1527 = vsel %vm373, %v1440, 0
      %v1530 = vsel %vm373, %v1441, 0
      %v1533 = vsel %vm373, %v1442, 0
      %v1536 = vsel %vm373, %v1443, 0
      %v1539 = vsel %vm373, %v1444, 0
      %v1542 = vsel %vm373, %v1445, 0
      %v1545 = vsel %vm470, %v1447, 0
      %1547 = vmatprep.subr.mxu0 0.0
      %1548 = vmatpush1.msra.mxu0 0.0
      %1549 = vmatprep.subr.mxu0 0.0
      %1550 = vmatpush1.msra.mxu0 0.0
      %1551 = vmatprep.subr.mxu0 0.0
      %1552 = vmatpush1.msra.mxu0 0.0
      %1553 = vmatprep.subr.mxu0 0.0
      %1554 = vmatpush1.msra.mxu0 0.0
      %1555 = vmatprep.subr.mxu0 0.0
      %1556 = vmatpush1.msra.mxu0 0.0
      %1557 = vmatprep.subr.mxu0 0.0
      %1558 = vmatpush1.msra.mxu0 0.0
      %1559 = vmatprep.subr.mxu0 0.0
      %1560 = vmatpush1.msra.mxu0 0.0
      %1561 = vmatprep.subr.mxu0 0.0
      %1562 = vmatpush1.msra.mxu0 0.0
      %1563 = vmatprep.subr.mxu0 0.0
      %1564 = vmatpush1.msra.mxu0 0.0
      %1565 = vmatprep.subr.mxu0 0.0
      %1566 = vmatpush1.msra.mxu0 0.0
      %1567 = vmatprep.subr.mxu0 0.0
      %1568 = vmatpush1.msra.mxu0 0.0
      %1569 = vmatprep.subr.mxu0 0.0
      %1570 = vmatpush1.msra.mxu0 0.0
      %1571 = vmatprep.subr.mxu0 0.0
      %1572 = vmatpush1.msra.mxu0 0.0
      %1573 = vmatprep.subr.mxu0 0.0
      %1574 = vmatpush1.msra.mxu0 0.0
      %1575 = vmatprep.subr.mxu0 0.0
      %1576 = vmatpush1.msra.mxu0 0.0
      %1577 = vmatprep.subr.mxu0 0.0
      %1578 = vmatpush1.msra.mxu0 %v1545
      %1579 = vmatprep.subr.mxu0 0.0
      %1580 = vmatpush2.msra.mxu0 0.0
      %1581 = vmatprep.subr.mxu0 0.0
      %1582 = vmatpush2.msra.mxu0 0.0
      %1583 = vmatprep.subr.mxu0 0.0
      %1584 = vmatpush2.msra.mxu0 0.0
      %1585 = vmatprep.subr.mxu0 0.0
      %1586 = vmatpush2.msra.mxu0 0.0
      %1587 = vmatprep.subr.mxu0 0.0
      %1588 = vmatpush2.msra.mxu0 0.0
      %1589 = vmatprep.subr.mxu0 0.0
      %1590 = vmatpush2.msra.mxu0 0.0
      %1591 = vmatprep.subr.mxu0 0.0
      %1592 = vmatpush2.msra.mxu0 0.0
      %1593 = vmatprep.subr.mxu0 0.0
      %1594 = vmatpush2.msra.mxu0 0.0
      %1595 = vmatprep.subr.mxu0 0.0
      %1596 = vmatpush2.msra.mxu0 0.0
      %1597 = vmatprep.subr.mxu0 0.0
      %1598 = vmatpush2.msra.mxu0 0.0
      %1599 = vmatprep.subr.mxu0 0.0
      %1600 = vmatpush2.msra.mxu0 0.0
      %1601 = vmatprep.subr.mxu0 0.0
      %1602 = vmatpush2.msra.mxu0 0.0
      %1603 = vmatprep.subr.mxu0 0.0
      %1604 = vmatpush2.msra.mxu0 0.0
      %1605 = vmatprep.subr.mxu0 0.0
      %1606 = vmatpush2.msra.mxu0 0.0
      %1607 = vmatprep.subr.mxu0 0.0
      %1608 = vmatpush2.msra.mxu0 0.0
      %1609 = vmatprep.subr.mxu0 0.0
      %1610 = vmatpush2.msra.mxu0 0.0
      %1611 = vmatprep.mubr.f32.mxu0 0.0
      %1612 = vmatmul.mubr.f32.gmra.mxu0 %v1449
      %v1613 = vpop.f32.mrf.mxu0
      %v1614 = vadd.f32 0.0, %v1613
      %v1615 = vpop.f32.mrf.mxu0
      %1616 = vmatprep.mubr.f32.mxu0 0.0
      %1617 = vmatmul.mubr.f32.gmra.mxu0 %v1452
      %v1618 = vpop.f32.mrf.mxu0
      %v1619 = vadd.f32 0.0, %v1618
      %v1620 = vpop.f32.mrf.mxu0
      %1621 = vmatprep.mubr.f32.mxu0 0.0
      %1622 = vmatmul.mubr.f32.gmra.mxu0 %v1455
      %v1623 = vpop.f32.mrf.mxu0
      %v1624 = vadd.f32 0.0, %v1623
      %v1625 = vpop.f32.mrf.mxu0
      %1626 = vmatprep.mubr.f32.mxu0 0.0
      %1627 = vmatmul.mubr.f32.gmra.mxu0 %v1458
      %v1628 = vpop.f32.mrf.mxu0
      %v1629 = vadd.f32 0.0, %v1628
      %v1630 = vpop.f32.mrf.mxu0
      %1631 = vmatprep.mubr.f32.mxu0 0.0
      %1632 = vmatmul.mubr.f32.gmra.mxu0 %v1461
      %v1633 = vpop.f32.mrf.mxu0
      %v1634 = vadd.f32 0.0, %v1633
      %v1635 = vpop.f32.mrf.mxu0
      %1636 = vmatprep.mubr.f32.mxu0 0.0
      %1637 = vmatmul.mubr.f32.gmra.mxu0 %v1464
      %v1638 = vpop.f32.mrf.mxu0
      %v1639 = vadd.f32 0.0, %v1638
      %v1640 = vpop.f32.mrf.mxu0
      %1641 = vmatprep.mubr.f32.mxu0 0.0
      %1642 = vmatmul.mubr.f32.gmra.mxu0 %v1467
      %v1643 = vpop.f32.mrf.mxu0
      %v1644 = vadd.f32 0.0, %v1643
      %v1645 = vpop.f32.mrf.mxu0
      %1646 = vmatprep.mubr.f32.mxu0 0.0
      %1647 = vmatmul.mubr.f32.gmra.mxu0 %v1470
      %v1648 = vpop.f32.mrf.mxu0
      %v1649 = vadd.f32 0.0, %v1648
      %v1650 = vpop.f32.mrf.mxu0
      %1651 = vmatprep.mubr.f32.mxu0 0.0
      %1652 = vmatmul.mubr.f32.gmra.mxu0 %v1473
      %v1653 = vpop.f32.mrf.mxu0
      %v1654 = vadd.f32 0.0, %v1653
      %v1655 = vpop.f32.mrf.mxu0
      %1656 = vmatprep.mubr.f32.mxu0 0.0
      %1657 = vmatmul.mubr.f32.gmra.mxu0 %v1476
      %v1658 = vpop.f32.mrf.mxu0
      %v1659 = vadd.f32 0.0, %v1658
      %v1660 = vpop.f32.mrf.mxu0
      %1661 = vmatprep.mubr.f32.mxu0 0.0
      %1662 = vmatmul.mubr.f32.gmra.mxu0 %v1479
      %v1663 = vpop.f32.mrf.mxu0
      %v1664 = vadd.f32 0.0, %v1663
      %v1665 = vpop.f32.mrf.mxu0
      %1666 = vmatprep.mubr.f32.mxu0 0.0
      %1667 = vmatmul.mubr.f32.gmra.mxu0 %v1482
      %v1668 = vpop.f32.mrf.mxu0
      %v1669 = vadd.f32 0.0, %v1668
      %v1670 = vpop.f32.mrf.mxu0
      %1671 = vmatprep.mubr.f32.mxu0 0.0
      %1672 = vmatmul.mubr.f32.gmra.mxu0 %v1485
      %v1673 = vpop.f32.mrf.mxu0
      %v1674 = vadd.f32 0.0, %v1673
      %v1675 = vpop.f32.mrf.mxu0
      %1676 = vmatprep.mubr.f32.mxu0 0.0
      %1677 = vmatmul.mubr.f32.gmra.mxu0 %v1488
      %v1678 = vpop.f32.mrf.mxu0
      %v1679 = vadd.f32 0.0, %v1678
      %v1680 = vpop.f32.mrf.mxu0
      %1681 = vmatprep.mubr.f32.mxu0 0.0
      %1682 = vmatmul.mubr.f32.gmra.mxu0 %v1491
      %v1683 = vpop.f32.mrf.mxu0
      %v1684 = vadd.f32 0.0, %v1683
      %v1685 = vpop.f32.mrf.mxu0
      %1686 = vmatprep.mubr.f32.mxu0 0.0
      %1687 = vmatmul.mubr.f32.gmra.mxu0 %v1494
      %v1688 = vpop.f32.mrf.mxu0
      %v1689 = vadd.f32 0.0, %v1688
      %v1690 = vpop.f32.mrf.mxu0
      %1691 = vmatprep.mubr.f32.mxu0 0.0
      %1692 = vmatmul.mubr.f32.gmra.mxu0 %v1497
      %v1693 = vpop.f32.mrf.mxu0
      %v1694 = vadd.f32 0.0, %v1693
      %v1695 = vpop.f32.mrf.mxu0
      %1696 = vmatprep.mubr.f32.mxu0 0.0
      %1697 = vmatmul.mubr.f32.gmra.mxu0 %v1500
      %v1698 = vpop.f32.mrf.mxu0
      %v1699 = vadd.f32 0.0, %v1698
      %v1700 = vpop.f32.mrf.mxu0
      %1701 = vmatprep.mubr.f32.mxu0 0.0
      %1702 = vmatmul.mubr.f32.gmra.mxu0 %v1503
      %v1703 = vpop.f32.mrf.mxu0
      %v1704 = vadd.f32 0.0, %v1703
      %v1705 = vpop.f32.mrf.mxu0
      %1706 = vmatprep.mubr.f32.mxu0 0.0
      %1707 = vmatmul.mubr.f32.gmra.mxu0 %v1506
      %v1708 = vpop.f32.mrf.mxu0
      %v1709 = vadd.f32 0.0, %v1708
      %v1710 = vpop.f32.mrf.mxu0
      %1711 = vmatprep.mubr.f32.mxu0 0.0
      %1712 = vmatmul.mubr.f32.gmra.mxu0 %v1509
      %v1713 = vpop.f32.mrf.mxu0
      %v1714 = vadd.f32 0.0, %v1713
      %v1715 = vpop.f32.mrf.mxu0
      %1716 = vmatprep.mubr.f32.mxu0 0.0
      %1717 = vmatmul.mubr.f32.gmra.mxu0 %v1512
      %v1718 = vpop.f32.mrf.mxu0
      %v1719 = vadd.f32 0.0, %v1718
      %v1720 = vpop.f32.mrf.mxu0
      %1721 = vmatprep.mubr.f32.mxu0 0.0
      %1722 = vmatmul.mubr.f32.gmra.mxu0 %v1515
      %v1723 = vpop.f32.mrf.mxu0
      %v1724 = vadd.f32 0.0, %v1723
      %v1725 = vpop.f32.mrf.mxu0
      %1726 = vmatprep.mubr.f32.mxu0 0.0
      %1727 = vmatmul.mubr.f32.gmra.mxu0 %v1518
      %v1728 = vpop.f32.mrf.mxu0
      %v1729 = vadd.f32 0.0, %v1728
      %v1730 = vpop.f32.mrf.mxu0
      %1731 = vmatprep.mubr.f32.mxu0 0.0
      %1732 = vmatmul.mubr.f32.gmra.mxu0 %v1521
      %v1733 = vpop.f32.mrf.mxu0
      %v1734 = vadd.f32 0.0, %v1733
      %v1735 = vpop.f32.mrf.mxu0
      %1736 = vmatprep.mubr.f32.mxu0 0.0
      %1737 = vmatmul.mubr.f32.gmra.mxu0 %v1524
      %v1738 = vpop.f32.mrf.mxu0
      %v1739 = vadd.f32 0.0, %v1738
      %v1740 = vpop.f32.mrf.mxu0
      %1741 = vmatprep.mubr.f32.mxu0 0.0
      %1742 = vmatmul.mubr.f32.gmra.mxu0 %v1527
      %v1743 = vpop.f32.mrf.mxu0
      %v1744 = vadd.f32 0.0, %v1743
      %v1745 = vpop.f32.mrf.mxu0
      %1746 = vmatprep.mubr.f32.mxu0 0.0
      %1747 = vmatmul.mubr.f32.gmra.mxu0 %v1530
      %v1748 = vpop.f32.mrf.mxu0
      %v1749 = vadd.f32 0.0, %v1748
      %v1750 = vpop.f32.mrf.mxu0
      %1751 = vmatprep.mubr.f32.mxu0 0.0
      %1752 = vmatmul.mubr.f32.gmra.mxu0 %v1533
      %v1753 = vpop.f32.mrf.mxu0
      %v1754 = vadd.f32 0.0, %v1753
      %v1755 = vpop.f32.mrf.mxu0
      %1756 = vmatprep.mubr.f32.mxu0 0.0
      %1757 = vmatmul.mubr.f32.gmra.mxu0 %v1536
      %v1758 = vpop.f32.mrf.mxu0
      %v1759 = vadd.f32 0.0, %v1758
      %v1760 = vpop.f32.mrf.mxu0
      %1761 = vmatprep.mubr.f32.mxu0 0.0
      %1762 = vmatmul.mubr.f32.gmra.mxu0 %v1539
      %v1763 = vpop.f32.mrf.mxu0
      %v1764 = vadd.f32 0.0, %v1763
      %v1765 = vpop.f32.mrf.mxu0
      %1766 = vmatprep.mubr.f32.mxu0 0.0
      %1767 = vmatmul.mubr.f32.gmra.mxu0 %v1542
      %v1768 = vpop.f32.mrf.mxu0
      %v1769 = vadd.f32 0.0, %v1768
      %v1770 = vpop.f32.mrf.mxu0
      %1771 = vdwg.mxu0
      %v1772 = vadd.f32 %v1381, %v1614
      %v1773 = vadd.f32 %v1382, %v1619
      %v1774 = vadd.f32 %v1383, %v1624
      %v1775 = vadd.f32 %v1384, %v1629
      %v1776 = vadd.f32 %v1385, %v1634
      %v1777 = vadd.f32 %v1386, %v1639
      %v1778 = vadd.f32 %v1387, %v1644
      %v1779 = vadd.f32 %v1388, %v1649
      %v1780 = vadd.f32 %v1389, %v1654
      %v1781 = vadd.f32 %v1390, %v1659
      %v1782 = vadd.f32 %v1391, %v1664
      %v1783 = vadd.f32 %v1392, %v1669
      %v1784 = vadd.f32 %v1393, %v1674
      %v1785 = vadd.f32 %v1394, %v1679
      %v1786 = vadd.f32 %v1395, %v1684
      %v1787 = vadd.f32 %v1396, %v1689
      %v1788 = vadd.f32 %v1397, %v1694
      %v1789 = vadd.f32 %v1398, %v1699
      %v1790 = vadd.f32 %v1399, %v1704
      %v1791 = vadd.f32 %v1400, %v1709
      %v1792 = vadd.f32 %v1401, %v1714
      %v1793 = vadd.f32 %v1402, %v1719
      %v1794 = vadd.f32 %v1403, %v1724
      %v1795 = vadd.f32 %v1404, %v1729
      %v1796 = vadd.f32 %v1405, %v1734
      %v1797 = vadd.f32 %v1406, %v1739
      %v1798 = vadd.f32 %v1407, %v1744
      %v1799 = vadd.f32 %v1408, %v1749
      %v1800 = vadd.f32 %v1409, %v1754
      %v1801 = vadd.f32 %v1410, %v1759
      %v1802 = vadd.f32 %v1411, %v1764
      %v1803 = vadd.f32 %v1412, %v1769
      %v1804 = vld [vmem:[%s1413 + $0x1] sm:$0xff]
      %v1805 = vld [vmem:[%s1413 + $0x9] sm:$0xff]
      %v1806 = vld [vmem:[%s1413 + $0x19] sm:$0xff]
      %v1807 = vld [vmem:[%s1413 + $0x21] sm:$0xff]
      %v1808 = vld [vmem:[%s1413 + $0x31] sm:$0xff]
      %v1809 = vld [vmem:[%s1413 + $0x39] sm:$0xff]
      %v1810 = vld [vmem:[%s1413 + $0x49] sm:$0xff]
      %v1811 = vld [vmem:[%s1413 + $0x51] sm:$0xff]
      %v1812 = vld [vmem:[%s1413 + $0x61] sm:$0xff]
      %v1813 = vld [vmem:[%s1413 + $0x69] sm:$0xff]
      %v1814 = vld [vmem:[%s1413 + $0x79] sm:$0xff]
      %v1815 = vld [vmem:[%s1413 + $0x81] sm:$0xff]
      %v1816 = vld [vmem:[%s1413 + $0x91] sm:$0xff]
      %v1817 = vld [vmem:[%s1413 + $0x99] sm:$0xff]
      %v1818 = vld [vmem:[%s1413 + $0xa9] sm:$0xff]
      %v1819 = vld [vmem:[%s1413 + $0xb1] sm:$0xff]
      %v1820 = vld [vmem:[%s1413 + $0xc1] sm:$0xff]
      %v1821 = vld [vmem:[%s1413 + $0xc9] sm:$0xff]
      %v1822 = vld [vmem:[%s1413 + $0xd9] sm:$0xff]
      %v1823 = vld [vmem:[%s1413 + $0xe1] sm:$0xff]
      %v1824 = vld [vmem:[%s1413 + $0xf1] sm:$0xff]
      %v1825 = vld [vmem:[%s1413 + $0xf9] sm:$0xff]
      %v1826 = vld [vmem:[%s1413 + $0x109] sm:$0xff]
      %v1827 = vld [vmem:[%s1413 + $0x111] sm:$0xff]
      %v1828 = vld [vmem:[%s1413 + $0x121] sm:$0xff]
      %v1829 = vld [vmem:[%s1413 + $0x129] sm:$0xff]
      %v1830 = vld [vmem:[%s1413 + $0x139] sm:$0xff]
      %v1831 = vld [vmem:[%s1413 + $0x141] sm:$0xff]
      %v1832 = vld [vmem:[%s1413 + $0x151] sm:$0xff]
      %v1833 = vld [vmem:[%s1413 + $0x159] sm:$0xff]
      %v1834 = vld [vmem:[%s1413 + $0x169] sm:$0xff]
      %v1835 = vld [vmem:[%s1413 + $0x171] sm:$0xff]
      %s1836 = scalar_lea.vmem %s1, 16
      %v1837 = vld [vmem:[%s1836] sm:$0xf]
      %v1839 = vsel %vm373, %v1804, 0
      %v1842 = vsel %vm373, %v1805, 0
      %v1845 = vsel %vm373, %v1806, 0
      %v1848 = vsel %vm373, %v1807, 0
      %v1851 = vsel %vm373, %v1808, 0
      %v1854 = vsel %vm373, %v1809, 0
      %v1857 = vsel %vm373, %v1810, 0
      %v1860 = vsel %vm373, %v1811, 0
      %v1863 = vsel %vm373, %v1812, 0
      %v1866 = vsel %vm373, %v1813, 0
      %v1869 = vsel %vm373, %v1814, 0
      %v1872 = vsel %vm373, %v1815, 0
      %v1875 = vsel %vm373, %v1816, 0
      %v1878 = vsel %vm373, %v1817, 0
      %v1881 = vsel %vm373, %v1818, 0
      %v1884 = vsel %vm373, %v1819, 0
      %v1887 = vsel %vm373, %v1820, 0
      %v1890 = vsel %vm373, %v1821, 0
      %v1893 = vsel %vm373, %v1822, 0
      %v1896 = vsel %vm373, %v1823, 0
      %v1899 = vsel %vm373, %v1824, 0
      %v1902 = vsel %vm373, %v1825, 0
      %v1905 = vsel %vm373, %v1826, 0
      %v1908 = vsel %vm373, %v1827, 0
      %v1911 = vsel %vm373, %v1828, 0
      %v1914 = vsel %vm373, %v1829, 0
      %v1917 = vsel %vm373, %v1830, 0
      %v1920 = vsel %vm373, %v1831, 0
      %v1923 = vsel %vm373, %v1832, 0
      %v1926 = vsel %vm373, %v1833, 0
      %v1929 = vsel %vm373, %v1834, 0
      %v1932 = vsel %vm373, %v1835, 0
      %v1935 = vsel %vm470, %v1837, 0
      %1937 = vmatprep.subr.mxu0 0.0
      %1938 = vmatpush1.msra.mxu0 0.0
      %1939 = vmatprep.subr.mxu0 0.0
      %1940 = vmatpush1.msra.mxu0 0.0
      %1941 = vmatprep.subr.mxu0 0.0
      %1942 = vmatpush1.msra.mxu0 0.0
      %1943 = vmatprep.subr.mxu0 0.0
      %1944 = vmatpush1.msra.mxu0 0.0
      %1945 = vmatprep.subr.mxu0 0.0
      %1946 = vmatpush1.msra.mxu0 0.0
      %1947 = vmatprep.subr.mxu0 0.0
      %1948 = vmatpush1.msra.mxu0 0.0
      %1949 = vmatprep.subr.mxu0 0.0
      %1950 = vmatpush1.msra.mxu0 0.0
      %1951 = vmatprep.subr.mxu0 0.0
      %1952 = vmatpush1.msra.mxu0 0.0
      %1953 = vmatprep.subr.mxu0 0.0
      %1954 = vmatpush1.msra.mxu0 0.0
      %1955 = vmatprep.subr.mxu0 0.0
      %1956 = vmatpush1.msra.mxu0 0.0
      %1957 = vmatprep.subr.mxu0 0.0
      %1958 = vmatpush1.msra.mxu0 0.0
      %1959 = vmatprep.subr.mxu0 0.0
      %1960 = vmatpush1.msra.mxu0 0.0
      %1961 = vmatprep.subr.mxu0 0.0
      %1962 = vmatpush1.msra.mxu0 0.0
      %1963 = vmatprep.subr.mxu0 0.0
      %1964 = vmatpush1.msra.mxu0 0.0
      %1965 = vmatprep.subr.mxu0 0.0
      %1966 = vmatpush1.msra.mxu0 0.0
      %1967 = vmatprep.subr.mxu0 0.0
      %1968 = vmatpush1.msra.mxu0 %v1935
      %1969 = vmatprep.subr.mxu0 0.0
      %1970 = vmatpush2.msra.mxu0 0.0
      %1971 = vmatprep.subr.mxu0 0.0
      %1972 = vmatpush2.msra.mxu0 0.0
      %1973 = vmatprep.subr.mxu0 0.0
      %1974 = vmatpush2.msra.mxu0 0.0
      %1975 = vmatprep.subr.mxu0 0.0
      %1976 = vmatpush2.msra.mxu0 0.0
      %1977 = vmatprep.subr.mxu0 0.0
      %1978 = vmatpush2.msra.mxu0 0.0
      %1979 = vmatprep.subr.mxu0 0.0
      %1980 = vmatpush2.msra.mxu0 0.0
      %1981 = vmatprep.subr.mxu0 0.0
      %1982 = vmatpush2.msra.mxu0 0.0
      %1983 = vmatprep.subr.mxu0 0.0
      %1984 = vmatpush2.msra.mxu0 0.0
      %1985 = vmatprep.subr.mxu0 0.0
      %1986 = vmatpush2.msra.mxu0 0.0
      %1987 = vmatprep.subr.mxu0 0.0
      %1988 = vmatpush2.msra.mxu0 0.0
      %1989 = vmatprep.subr.mxu0 0.0
      %1990 = vmatpush2.msra.mxu0 0.0
      %1991 = vmatprep.subr.mxu0 0.0
      %1992 = vmatpush2.msra.mxu0 0.0
      %1993 = vmatprep.subr.mxu0 0.0
      %1994 = vmatpush2.msra.mxu0 0.0
      %1995 = vmatprep.subr.mxu0 0.0
      %1996 = vmatpush2.msra.mxu0 0.0
      %1997 = vmatprep.subr.mxu0 0.0
      %1998 = vmatpush2.msra.mxu0 0.0
      %1999 = vmatprep.subr.mxu0 0.0
      %2000 = vmatpush2.msra.mxu0 0.0
      %2001 = vmatprep.mubr.f32.mxu0 0.0
      %2002 = vmatmul.mubr.f32.gmra.mxu0 %v1839
      %v2003 = vpop.f32.mrf.mxu0
      %v2004 = vadd.f32 0.0, %v2003
      %v2005 = vpop.f32.mrf.mxu0
      %2006 = vmatprep.mubr.f32.mxu0 0.0
      %2007 = vmatmul.mubr.f32.gmra.mxu0 %v1842
      %v2008 = vpop.f32.mrf.mxu0
      %v2009 = vadd.f32 0.0, %v2008
      %v2010 = vpop.f32.mrf.mxu0
      %2011 = vmatprep.mubr.f32.mxu0 0.0
      %2012 = vmatmul.mubr.f32.gmra.mxu0 %v1845
      %v2013 = vpop.f32.mrf.mxu0
      %v2014 = vadd.f32 0.0, %v2013
      %v2015 = vpop.f32.mrf.mxu0
      %2016 = vmatprep.mubr.f32.mxu0 0.0
      %2017 = vmatmul.mubr.f32.gmra.mxu0 %v1848
      %v2018 = vpop.f32.mrf.mxu0
      %v2019 = vadd.f32 0.0, %v2018
      %v2020 = vpop.f32.mrf.mxu0
      %2021 = vmatprep.mubr.f32.mxu0 0.0
      %2022 = vmatmul.mubr.f32.gmra.mxu0 %v1851
      %v2023 = vpop.f32.mrf.mxu0
      %v2024 = vadd.f32 0.0, %v2023
      %v2025 = vpop.f32.mrf.mxu0
      %2026 = vmatprep.mubr.f32.mxu0 0.0
      %2027 = vmatmul.mubr.f32.gmra.mxu0 %v1854
      %v2028 = vpop.f32.mrf.mxu0
      %v2029 = vadd.f32 0.0, %v2028
      %v2030 = vpop.f32.mrf.mxu0
      %2031 = vmatprep.mubr.f32.mxu0 0.0
      %2032 = vmatmul.mubr.f32.gmra.mxu0 %v1857
      %v2033 = vpop.f32.mrf.mxu0
      %v2034 = vadd.f32 0.0, %v2033
      %v2035 = vpop.f32.mrf.mxu0
      %2036 = vmatprep.mubr.f32.mxu0 0.0
      %2037 = vmatmul.mubr.f32.gmra.mxu0 %v1860
      %v2038 = vpop.f32.mrf.mxu0
      %v2039 = vadd.f32 0.0, %v2038
      %v2040 = vpop.f32.mrf.mxu0
      %2041 = vmatprep.mubr.f32.mxu0 0.0
      %2042 = vmatmul.mubr.f32.gmra.mxu0 %v1863
      %v2043 = vpop.f32.mrf.mxu0
      %v2044 = vadd.f32 0.0, %v2043
      %v2045 = vpop.f32.mrf.mxu0
      %2046 = vmatprep.mubr.f32.mxu0 0.0
      %2047 = vmatmul.mubr.f32.gmra.mxu0 %v1866
      %v2048 = vpop.f32.mrf.mxu0
      %v2049 = vadd.f32 0.0, %v2048
      %v2050 = vpop.f32.mrf.mxu0
      %2051 = vmatprep.mubr.f32.mxu0 0.0
      %2052 = vmatmul.mubr.f32.gmra.mxu0 %v1869
      %v2053 = vpop.f32.mrf.mxu0
      %v2054 = vadd.f32 0.0, %v2053
      %v2055 = vpop.f32.mrf.mxu0
      %2056 = vmatprep.mubr.f32.mxu0 0.0
      %2057 = vmatmul.mubr.f32.gmra.mxu0 %v1872
      %v2058 = vpop.f32.mrf.mxu0
      %v2059 = vadd.f32 0.0, %v2058
      %v2060 = vpop.f32.mrf.mxu0
      %2061 = vmatprep.mubr.f32.mxu0 0.0
      %2062 = vmatmul.mubr.f32.gmra.mxu0 %v1875
      %v2063 = vpop.f32.mrf.mxu0
      %v2064 = vadd.f32 0.0, %v2063
      %v2065 = vpop.f32.mrf.mxu0
      %2066 = vmatprep.mubr.f32.mxu0 0.0
      %2067 = vmatmul.mubr.f32.gmra.mxu0 %v1878
      %v2068 = vpop.f32.mrf.mxu0
      %v2069 = vadd.f32 0.0, %v2068
      %v2070 = vpop.f32.mrf.mxu0
      %2071 = vmatprep.mubr.f32.mxu0 0.0
      %2072 = vmatmul.mubr.f32.gmra.mxu0 %v1881
      %v2073 = vpop.f32.mrf.mxu0
      %v2074 = vadd.f32 0.0, %v2073
      %v2075 = vpop.f32.mrf.mxu0
      %2076 = vmatprep.mubr.f32.mxu0 0.0
      %2077 = vmatmul.mubr.f32.gmra.mxu0 %v1884
      %v2078 = vpop.f32.mrf.mxu0
      %v2079 = vadd.f32 0.0, %v2078
      %v2080 = vpop.f32.mrf.mxu0
      %2081 = vmatprep.mubr.f32.mxu0 0.0
      %2082 = vmatmul.mubr.f32.gmra.mxu0 %v1887
      %v2083 = vpop.f32.mrf.mxu0
      %v2084 = vadd.f32 0.0, %v2083
      %v2085 = vpop.f32.mrf.mxu0
      %2086 = vmatprep.mubr.f32.mxu0 0.0
      %2087 = vmatmul.mubr.f32.gmra.mxu0 %v1890
      %v2088 = vpop.f32.mrf.mxu0
      %v2089 = vadd.f32 0.0, %v2088
      %v2090 = vpop.f32.mrf.mxu0
      %2091 = vmatprep.mubr.f32.mxu0 0.0
      %2092 = vmatmul.mubr.f32.gmra.mxu0 %v1893
      %v2093 = vpop.f32.mrf.mxu0
      %v2094 = vadd.f32 0.0, %v2093
      %v2095 = vpop.f32.mrf.mxu0
      %2096 = vmatprep.mubr.f32.mxu0 0.0
      %2097 = vmatmul.mubr.f32.gmra.mxu0 %v1896
      %v2098 = vpop.f32.mrf.mxu0
      %v2099 = vadd.f32 0.0, %v2098
      %v2100 = vpop.f32.mrf.mxu0
      %2101 = vmatprep.mubr.f32.mxu0 0.0
      %2102 = vmatmul.mubr.f32.gmra.mxu0 %v1899
      %v2103 = vpop.f32.mrf.mxu0
      %v2104 = vadd.f32 0.0, %v2103
      %v2105 = vpop.f32.mrf.mxu0
      %2106 = vmatprep.mubr.f32.mxu0 0.0
      %2107 = vmatmul.mubr.f32.gmra.mxu0 %v1902
      %v2108 = vpop.f32.mrf.mxu0
      %v2109 = vadd.f32 0.0, %v2108
      %v2110 = vpop.f32.mrf.mxu0
      %2111 = vmatprep.mubr.f32.mxu0 0.0
      %2112 = vmatmul.mubr.f32.gmra.mxu0 %v1905
      %v2113 = vpop.f32.mrf.mxu0
      %v2114 = vadd.f32 0.0, %v2113
      %v2115 = vpop.f32.mrf.mxu0
      %2116 = vmatprep.mubr.f32.mxu0 0.0
      %2117 = vmatmul.mubr.f32.gmra.mxu0 %v1908
      %v2118 = vpop.f32.mrf.mxu0
      %v2119 = vadd.f32 0.0, %v2118
      %v2120 = vpop.f32.mrf.mxu0
      %2121 = vmatprep.mubr.f32.mxu0 0.0
      %2122 = vmatmul.mubr.f32.gmra.mxu0 %v1911
      %v2123 = vpop.f32.mrf.mxu0
      %v2124 = vadd.f32 0.0, %v2123
      %v2125 = vpop.f32.mrf.mxu0
      %2126 = vmatprep.mubr.f32.mxu0 0.0
      %2127 = vmatmul.mubr.f32.gmra.mxu0 %v1914
      %v2128 = vpop.f32.mrf.mxu0
      %v2129 = vadd.f32 0.0, %v2128
      %v2130 = vpop.f32.mrf.mxu0
      %2131 = vmatprep.mubr.f32.mxu0 0.0
      %2132 = vmatmul.mubr.f32.gmra.mxu0 %v1917
      %v2133 = vpop.f32.mrf.mxu0
      %v2134 = vadd.f32 0.0, %v2133
      %v2135 = vpop.f32.mrf.mxu0
      %2136 = vmatprep.mubr.f32.mxu0 0.0
      %2137 = vmatmul.mubr.f32.gmra.mxu0 %v1920
      %v2138 = vpop.f32.mrf.mxu0
      %v2139 = vadd.f32 0.0, %v2138
      %v2140 = vpop.f32.mrf.mxu0
      %2141 = vmatprep.mubr.f32.mxu0 0.0
      %2142 = vmatmul.mubr.f32.gmra.mxu0 %v1923
      %v2143 = vpop.f32.mrf.mxu0
      %v2144 = vadd.f32 0.0, %v2143
      %v2145 = vpop.f32.mrf.mxu0
      %2146 = vmatprep.mubr.f32.mxu0 0.0
      %2147 = vmatmul.mubr.f32.gmra.mxu0 %v1926
      %v2148 = vpop.f32.mrf.mxu0
      %v2149 = vadd.f32 0.0, %v2148
      %v2150 = vpop.f32.mrf.mxu0
      %2151 = vmatprep.mubr.f32.mxu0 0.0
      %2152 = vmatmul.mubr.f32.gmra.mxu0 %v1929
      %v2153 = vpop.f32.mrf.mxu0
      %v2154 = vadd.f32 0.0, %v2153
      %v2155 = vpop.f32.mrf.mxu0
      %2156 = vmatprep.mubr.f32.mxu0 0.0
      %2157 = vmatmul.mubr.f32.gmra.mxu0 %v1932
      %v2158 = vpop.f32.mrf.mxu0
      %v2159 = vadd.f32 0.0, %v2158
      %v2160 = vpop.f32.mrf.mxu0
      %2161 = vdwg.mxu0
      %v2162 = vadd.f32 %v1772, %v2004
      %v2163 = vadd.f32 %v1773, %v2009
      %v2164 = vadd.f32 %v1774, %v2014
      %v2165 = vadd.f32 %v1775, %v2019
      %v2166 = vadd.f32 %v1776, %v2024
      %v2167 = vadd.f32 %v1777, %v2029
      %v2168 = vadd.f32 %v1778, %v2034
      %v2169 = vadd.f32 %v1779, %v2039
      %v2170 = vadd.f32 %v1780, %v2044
      %v2171 = vadd.f32 %v1781, %v2049
      %v2172 = vadd.f32 %v1782, %v2054
      %v2173 = vadd.f32 %v1783, %v2059
      %v2174 = vadd.f32 %v1784, %v2064
      %v2175 = vadd.f32 %v1785, %v2069
      %v2176 = vadd.f32 %v1786, %v2074
      %v2177 = vadd.f32 %v1787, %v2079
      %v2178 = vadd.f32 %v1788, %v2084
      %v2179 = vadd.f32 %v1789, %v2089
      %v2180 = vadd.f32 %v1790, %v2094
      %v2181 = vadd.f32 %v1791, %v2099
      %v2182 = vadd.f32 %v1792, %v2104
      %v2183 = vadd.f32 %v1793, %v2109
      %v2184 = vadd.f32 %v1794, %v2114
      %v2185 = vadd.f32 %v1795, %v2119
      %v2186 = vadd.f32 %v1796, %v2124
      %v2187 = vadd.f32 %v1797, %v2129
      %v2188 = vadd.f32 %v1798, %v2134
      %v2189 = vadd.f32 %v1799, %v2139
      %v2190 = vadd.f32 %v1800, %v2144
      %v2191 = vadd.f32 %v1801, %v2149
      %v2192 = vadd.f32 %v1802, %v2154
      %v2193 = vadd.f32 %v1803, %v2159
      %v2194 = vld [vmem:[%s1413 + $0x2] sm:$0xff]
      %v2195 = vld [vmem:[%s1413 + $0xa] sm:$0xff]
      %v2196 = vld [vmem:[%s1413 + $0x1a] sm:$0xff]
      %v2197 = vld [vmem:[%s1413 + $0x22] sm:$0xff]
      %v2198 = vld [vmem:[%s1413 + $0x32] sm:$0xff]
      %v2199 = vld [vmem:[%s1413 + $0x3a] sm:$0xff]
      %v2200 = vld [vmem:[%s1413 + $0x4a] sm:$0xff]
      %v2201 = vld [vmem:[%s1413 + $0x52] sm:$0xff]
      %v2202 = vld [vmem:[%s1413 + $0x62] sm:$0xff]
      %v2203 = vld [vmem:[%s1413 + $0x6a] sm:$0xff]
      %v2204 = vld [vmem:[%s1413 + $0x7a] sm:$0xff]
      %v2205 = vld [vmem:[%s1413 + $0x82] sm:$0xff]
      %v2206 = vld [vmem:[%s1413 + $0x92] sm:$0xff]
      %v2207 = vld [vmem:[%s1413 + $0x9a] sm:$0xff]
      %v2208 = vld [vmem:[%s1413 + $0xaa] sm:$0xff]
      %v2209 = vld [vmem:[%s1413 + $0xb2] sm:$0xff]
      %v2210 = vld [vmem:[%s1413 + $0xc2] sm:$0xff]
      %v2211 = vld [vmem:[%s1413 + $0xca] sm:$0xff]
      %v2212 = vld [vmem:[%s1413 + $0xda] sm:$0xff]
      %v2213 = vld [vmem:[%s1413 + $0xe2] sm:$0xff]
      %v2214 = vld [vmem:[%s1413 + $0xf2] sm:$0xff]
      %v2215 = vld [vmem:[%s1413 + $0xfa] sm:$0xff]
      %v2216 = vld [vmem:[%s1413 + $0x10a] sm:$0xff]
      %v2217 = vld [vmem:[%s1413 + $0x112] sm:$0xff]
      %v2218 = vld [vmem:[%s1413 + $0x122] sm:$0xff]
      %v2219 = vld [vmem:[%s1413 + $0x12a] sm:$0xff]
      %v2220 = vld [vmem:[%s1413 + $0x13a] sm:$0xff]
      %v2221 = vld [vmem:[%s1413 + $0x142] sm:$0xff]
      %v2222 = vld [vmem:[%s1413 + $0x152] sm:$0xff]
      %v2223 = vld [vmem:[%s1413 + $0x15a] sm:$0xff]
      %v2224 = vld [vmem:[%s1413 + $0x16a] sm:$0xff]
      %v2225 = vld [vmem:[%s1413 + $0x172] sm:$0xff]
      %s2226 = scalar_lea.vmem %s1, 20
      %v2227 = vld [vmem:[%s2226] sm:$0xf]
      %v2229 = vsel %vm373, %v2194, 0
      %v2232 = vsel %vm373, %v2195, 0
      %v2235 = vsel %vm373, %v2196, 0
      %v2238 = vsel %vm373, %v2197, 0
      %v2241 = vsel %vm373, %v2198, 0
      %v2244 = vsel %vm373, %v2199, 0
      %v2247 = vsel %vm373, %v2200, 0
      %v2250 = vsel %vm373, %v2201, 0
      %v2253 = vsel %vm373, %v2202, 0
      %v2256 = vsel %vm373, %v2203, 0
      %v2259 = vsel %vm373, %v2204, 0
      %v2262 = vsel %vm373, %v2205, 0
      %v2265 = vsel %vm373, %v2206, 0
      %v2268 = vsel %vm373, %v2207, 0
      %v2271 = vsel %vm373, %v2208, 0
      %v2274 = vsel %vm373, %v2209, 0
      %v2277 = vsel %vm373, %v2210, 0
      %v2280 = vsel %vm373, %v2211, 0
      %v2283 = vsel %vm373, %v2212, 0
      %v2286 = vsel %vm373, %v2213, 0
      %v2289 = vsel %vm373, %v2214, 0
      %v2292 = vsel %vm373, %v2215, 0
      %v2295 = vsel %vm373, %v2216, 0
      %v2298 = vsel %vm373, %v2217, 0
      %v2301 = vsel %vm373, %v2218, 0
      %v2304 = vsel %vm373, %v2219, 0
      %v2307 = vsel %vm373, %v2220, 0
      %v2310 = vsel %vm373, %v2221, 0
      %v2313 = vsel %vm373, %v2222, 0
      %v2316 = vsel %vm373, %v2223, 0
      %v2319 = vsel %vm373, %v2224, 0
      %v2322 = vsel %vm373, %v2225, 0
      %v2325 = vsel %vm470, %v2227, 0
      %2327 = vmatprep.subr.mxu0 0.0
      %2328 = vmatpush1.msra.mxu0 0.0
      %2329 = vmatprep.subr.mxu0 0.0
      %2330 = vmatpush1.msra.mxu0 0.0
      %2331 = vmatprep.subr.mxu0 0.0
      %2332 = vmatpush1.msra.mxu0 0.0
      %2333 = vmatprep.subr.mxu0 0.0
      %2334 = vmatpush1.msra.mxu0 0.0
      %2335 = vmatprep.subr.mxu0 0.0
      %2336 = vmatpush1.msra.mxu0 0.0
      %2337 = vmatprep.subr.mxu0 0.0
      %2338 = vmatpush1.msra.mxu0 0.0
      %2339 = vmatprep.subr.mxu0 0.0
      %2340 = vmatpush1.msra.mxu0 0.0
      %2341 = vmatprep.subr.mxu0 0.0
      %2342 = vmatpush1.msra.mxu0 0.0
      %2343 = vmatprep.subr.mxu0 0.0
      %2344 = vmatpush1.msra.mxu0 0.0
      %2345 = vmatprep.subr.mxu0 0.0
      %2346 = vmatpush1.msra.mxu0 0.0
      %2347 = vmatprep.subr.mxu0 0.0
      %2348 = vmatpush1.msra.mxu0 0.0
      %2349 = vmatprep.subr.mxu0 0.0
      %2350 = vmatpush1.msra.mxu0 0.0
      %2351 = vmatprep.subr.mxu0 0.0
      %2352 = vmatpush1.msra.mxu0 0.0
      %2353 = vmatprep.subr.mxu0 0.0
      %2354 = vmatpush1.msra.mxu0 0.0
      %2355 = vmatprep.subr.mxu0 0.0
      %2356 = vmatpush1.msra.mxu0 0.0
      %2357 = vmatprep.subr.mxu0 0.0
      %2358 = vmatpush1.msra.mxu0 %v2325
      %2359 = vmatprep.subr.mxu0 0.0
      %2360 = vmatpush2.msra.mxu0 0.0
      %2361 = vmatprep.subr.mxu0 0.0
      %2362 = vmatpush2.msra.mxu0 0.0
      %2363 = vmatprep.subr.mxu0 0.0
      %2364 = vmatpush2.msra.mxu0 0.0
      %2365 = vmatprep.subr.mxu0 0.0
      %2366 = vmatpush2.msra.mxu0 0.0
      %2367 = vmatprep.subr.mxu0 0.0
      %2368 = vmatpush2.msra.mxu0 0.0
      %2369 = vmatprep.subr.mxu0 0.0
      %2370 = vmatpush2.msra.mxu0 0.0
      %2371 = vmatprep.subr.mxu0 0.0
      %2372 = vmatpush2.msra.mxu0 0.0
      %2373 = vmatprep.subr.mxu0 0.0
      %2374 = vmatpush2.msra.mxu0 0.0
      %2375 = vmatprep.subr.mxu0 0.0
      %2376 = vmatpush2.msra.mxu0 0.0
      %2377 = vmatprep.subr.mxu0 0.0
      %2378 = vmatpush2.msra.mxu0 0.0
      %2379 = vmatprep.subr.mxu0 0.0
      %2380 = vmatpush2.msra.mxu0 0.0
      %2381 = vmatprep.subr.mxu0 0.0
      %2382 = vmatpush2.msra.mxu0 0.0
      %2383 = vmatprep.subr.mxu0 0.0
      %2384 = vmatpush2.msra.mxu0 0.0
      %2385 = vmatprep.subr.mxu0 0.0
      %2386 = vmatpush2.msra.mxu0 0.0
      %2387 = vmatprep.subr.mxu0 0.0
      %2388 = vmatpush2.msra.mxu0 0.0
      %2389 = vmatprep.subr.mxu0 0.0
      %2390 = vmatpush2.msra.mxu0 0.0
      %2391 = vmatprep.mubr.f32.mxu0 0.0
      %2392 = vmatmul.mubr.f32.gmra.mxu0 %v2229
      %v2393 = vpop.f32.mrf.mxu0
      %v2394 = vadd.f32 0.0, %v2393
      %v2395 = vpop.f32.mrf.mxu0
      %2396 = vmatprep.mubr.f32.mxu0 0.0
      %2397 = vmatmul.mubr.f32.gmra.mxu0 %v2232
      %v2398 = vpop.f32.mrf.mxu0
      %v2399 = vadd.f32 0.0, %v2398
      %v2400 = vpop.f32.mrf.mxu0
      %2401 = vmatprep.mubr.f32.mxu0 0.0
      %2402 = vmatmul.mubr.f32.gmra.mxu0 %v2235
      %v2403 = vpop.f32.mrf.mxu0
      %v2404 = vadd.f32 0.0, %v2403
      %v2405 = vpop.f32.mrf.mxu0
      %2406 = vmatprep.mubr.f32.mxu0 0.0
      %2407 = vmatmul.mubr.f32.gmra.mxu0 %v2238
      %v2408 = vpop.f32.mrf.mxu0
      %v2409 = vadd.f32 0.0, %v2408
      %v2410 = vpop.f32.mrf.mxu0
      %2411 = vmatprep.mubr.f32.mxu0 0.0
      %2412 = vmatmul.mubr.f32.gmra.mxu0 %v2241
      %v2413 = vpop.f32.mrf.mxu0
      %v2414 = vadd.f32 0.0, %v2413
      %v2415 = vpop.f32.mrf.mxu0
      %2416 = vmatprep.mubr.f32.mxu0 0.0
      %2417 = vmatmul.mubr.f32.gmra.mxu0 %v2244
      %v2418 = vpop.f32.mrf.mxu0
      %v2419 = vadd.f32 0.0, %v2418
      %v2420 = vpop.f32.mrf.mxu0
      %2421 = vmatprep.mubr.f32.mxu0 0.0
      %2422 = vmatmul.mubr.f32.gmra.mxu0 %v2247
      %v2423 = vpop.f32.mrf.mxu0
      %v2424 = vadd.f32 0.0, %v2423
      %v2425 = vpop.f32.mrf.mxu0
      %2426 = vmatprep.mubr.f32.mxu0 0.0
      %2427 = vmatmul.mubr.f32.gmra.mxu0 %v2250
      %v2428 = vpop.f32.mrf.mxu0
      %v2429 = vadd.f32 0.0, %v2428
      %v2430 = vpop.f32.mrf.mxu0
      %2431 = vmatprep.mubr.f32.mxu0 0.0
      %2432 = vmatmul.mubr.f32.gmra.mxu0 %v2253
      %v2433 = vpop.f32.mrf.mxu0
      %v2434 = vadd.f32 0.0, %v2433
      %v2435 = vpop.f32.mrf.mxu0
      %2436 = vmatprep.mubr.f32.mxu0 0.0
      %2437 = vmatmul.mubr.f32.gmra.mxu0 %v2256
      %v2438 = vpop.f32.mrf.mxu0
      %v2439 = vadd.f32 0.0, %v2438
      %v2440 = vpop.f32.mrf.mxu0
      %2441 = vmatprep.mubr.f32.mxu0 0.0
      %2442 = vmatmul.mubr.f32.gmra.mxu0 %v2259
      %v2443 = vpop.f32.mrf.mxu0
      %v2444 = vadd.f32 0.0, %v2443
      %v2445 = vpop.f32.mrf.mxu0
      %2446 = vmatprep.mubr.f32.mxu0 0.0
      %2447 = vmatmul.mubr.f32.gmra.mxu0 %v2262
      %v2448 = vpop.f32.mrf.mxu0
      %v2449 = vadd.f32 0.0, %v2448
      %v2450 = vpop.f32.mrf.mxu0
      %2451 = vmatprep.mubr.f32.mxu0 0.0
      %2452 = vmatmul.mubr.f32.gmra.mxu0 %v2265
      %v2453 = vpop.f32.mrf.mxu0
      %v2454 = vadd.f32 0.0, %v2453
      %v2455 = vpop.f32.mrf.mxu0
      %2456 = vmatprep.mubr.f32.mxu0 0.0
      %2457 = vmatmul.mubr.f32.gmra.mxu0 %v2268
      %v2458 = vpop.f32.mrf.mxu0
      %v2459 = vadd.f32 0.0, %v2458
      %v2460 = vpop.f32.mrf.mxu0
      %2461 = vmatprep.mubr.f32.mxu0 0.0
      %2462 = vmatmul.mubr.f32.gmra.mxu0 %v2271
      %v2463 = vpop.f32.mrf.mxu0
      %v2464 = vadd.f32 0.0, %v2463
      %v2465 = vpop.f32.mrf.mxu0
      %2466 = vmatprep.mubr.f32.mxu0 0.0
      %2467 = vmatmul.mubr.f32.gmra.mxu0 %v2274
      %v2468 = vpop.f32.mrf.mxu0
      %v2469 = vadd.f32 0.0, %v2468
      %v2470 = vpop.f32.mrf.mxu0
      %2471 = vmatprep.mubr.f32.mxu0 0.0
      %2472 = vmatmul.mubr.f32.gmra.mxu0 %v2277
      %v2473 = vpop.f32.mrf.mxu0
      %v2474 = vadd.f32 0.0, %v2473
      %v2475 = vpop.f32.mrf.mxu0
      %2476 = vmatprep.mubr.f32.mxu0 0.0
      %2477 = vmatmul.mubr.f32.gmra.mxu0 %v2280
      %v2478 = vpop.f32.mrf.mxu0
      %v2479 = vadd.f32 0.0, %v2478
      %v2480 = vpop.f32.mrf.mxu0
      %2481 = vmatprep.mubr.f32.mxu0 0.0
      %2482 = vmatmul.mubr.f32.gmra.mxu0 %v2283
      %v2483 = vpop.f32.mrf.mxu0
      %v2484 = vadd.f32 0.0, %v2483
      %v2485 = vpop.f32.mrf.mxu0
      %2486 = vmatprep.mubr.f32.mxu0 0.0
      %2487 = vmatmul.mubr.f32.gmra.mxu0 %v2286
      %v2488 = vpop.f32.mrf.mxu0
      %v2489 = vadd.f32 0.0, %v2488
      %v2490 = vpop.f32.mrf.mxu0
      %2491 = vmatprep.mubr.f32.mxu0 0.0
      %2492 = vmatmul.mubr.f32.gmra.mxu0 %v2289
      %v2493 = vpop.f32.mrf.mxu0
      %v2494 = vadd.f32 0.0, %v2493
      %v2495 = vpop.f32.mrf.mxu0
      %2496 = vmatprep.mubr.f32.mxu0 0.0
      %2497 = vmatmul.mubr.f32.gmra.mxu0 %v2292
      %v2498 = vpop.f32.mrf.mxu0
      %v2499 = vadd.f32 0.0, %v2498
      %v2500 = vpop.f32.mrf.mxu0
      %2501 = vmatprep.mubr.f32.mxu0 0.0
      %2502 = vmatmul.mubr.f32.gmra.mxu0 %v2295
      %v2503 = vpop.f32.mrf.mxu0
      %v2504 = vadd.f32 0.0, %v2503
      %v2505 = vpop.f32.mrf.mxu0
      %2506 = vmatprep.mubr.f32.mxu0 0.0
      %2507 = vmatmul.mubr.f32.gmra.mxu0 %v2298
      %v2508 = vpop.f32.mrf.mxu0
      %v2509 = vadd.f32 0.0, %v2508
      %v2510 = vpop.f32.mrf.mxu0
      %2511 = vmatprep.mubr.f32.mxu0 0.0
      %2512 = vmatmul.mubr.f32.gmra.mxu0 %v2301
      %v2513 = vpop.f32.mrf.mxu0
      %v2514 = vadd.f32 0.0, %v2513
      %v2515 = vpop.f32.mrf.mxu0
      %2516 = vmatprep.mubr.f32.mxu0 0.0
      %2517 = vmatmul.mubr.f32.gmra.mxu0 %v2304
      %v2518 = vpop.f32.mrf.mxu0
      %v2519 = vadd.f32 0.0, %v2518
      %v2520 = vpop.f32.mrf.mxu0
      %2521 = vmatprep.mubr.f32.mxu0 0.0
      %2522 = vmatmul.mubr.f32.gmra.mxu0 %v2307
      %v2523 = vpop.f32.mrf.mxu0
      %v2524 = vadd.f32 0.0, %v2523
      %v2525 = vpop.f32.mrf.mxu0
      %2526 = vmatprep.mubr.f32.mxu0 0.0
      %2527 = vmatmul.mubr.f32.gmra.mxu0 %v2310
      %v2528 = vpop.f32.mrf.mxu0
      %v2529 = vadd.f32 0.0, %v2528
      %v2530 = vpop.f32.mrf.mxu0
      %2531 = vmatprep.mubr.f32.mxu0 0.0
      %2532 = vmatmul.mubr.f32.gmra.mxu0 %v2313
      %v2533 = vpop.f32.mrf.mxu0
      %v2534 = vadd.f32 0.0, %v2533
      %v2535 = vpop.f32.mrf.mxu0
      %2536 = vmatprep.mubr.f32.mxu0 0.0
      %2537 = vmatmul.mubr.f32.gmra.mxu0 %v2316
      %v2538 = vpop.f32.mrf.mxu0
      %v2539 = vadd.f32 0.0, %v2538
      %v2540 = vpop.f32.mrf.mxu0
      %2541 = vmatprep.mubr.f32.mxu0 0.0
      %2542 = vmatmul.mubr.f32.gmra.mxu0 %v2319
      %v2543 = vpop.f32.mrf.mxu0
      %v2544 = vadd.f32 0.0, %v2543
      %v2545 = vpop.f32.mrf.mxu0
      %2546 = vmatprep.mubr.f32.mxu0 0.0
      %2547 = vmatmul.mubr.f32.gmra.mxu0 %v2322
      %v2548 = vpop.f32.mrf.mxu0
      %v2549 = vadd.f32 0.0, %v2548
      %v2550 = vpop.f32.mrf.mxu0
      %2551 = vdwg.mxu0
      %v2552 = vadd.f32 %v2162, %v2394
      %v2553 = vadd.f32 %v2163, %v2399
      %v2554 = vadd.f32 %v2164, %v2404
      %v2555 = vadd.f32 %v2165, %v2409
      %v2556 = vadd.f32 %v2166, %v2414
      %v2557 = vadd.f32 %v2167, %v2419
      %v2558 = vadd.f32 %v2168, %v2424
      %v2559 = vadd.f32 %v2169, %v2429
      %v2560 = vadd.f32 %v2170, %v2434
      %v2561 = vadd.f32 %v2171, %v2439
      %v2562 = vadd.f32 %v2172, %v2444
      %v2563 = vadd.f32 %v2173, %v2449
      %v2564 = vadd.f32 %v2174, %v2454
      %v2565 = vadd.f32 %v2175, %v2459
      %v2566 = vadd.f32 %v2176, %v2464
      %v2567 = vadd.f32 %v2177, %v2469
      %v2568 = vadd.f32 %v2178, %v2474
      %v2569 = vadd.f32 %v2179, %v2479
      %v2570 = vadd.f32 %v2180, %v2484
      %v2571 = vadd.f32 %v2181, %v2489
      %v2572 = vadd.f32 %v2182, %v2494
      %v2573 = vadd.f32 %v2183, %v2499
      %v2574 = vadd.f32 %v2184, %v2504
      %v2575 = vadd.f32 %v2185, %v2509
      %v2576 = vadd.f32 %v2186, %v2514
      %v2577 = vadd.f32 %v2187, %v2519
      %v2578 = vadd.f32 %v2188, %v2524
      %v2579 = vadd.f32 %v2189, %v2529
      %v2580 = vadd.f32 %v2190, %v2534
      %v2581 = vadd.f32 %v2191, %v2539
      %v2582 = vadd.f32 %v2192, %v2544
      %v2583 = vadd.f32 %v2193, %v2549
      %s2584 = scalar_lea.vmem %s300, 48
      %v2585 = vld [vmem:[%s2584] sm:$0xff]
      %v2586 = vld [vmem:[%s2584 + $0x8] sm:$0xff]
      %v2587 = vld [vmem:[%s2584 + $0x18] sm:$0xff]
      %v2588 = vld [vmem:[%s2584 + $0x20] sm:$0xff]
      %v2589 = vld [vmem:[%s2584 + $0x30] sm:$0xff]
      %v2590 = vld [vmem:[%s2584 + $0x38] sm:$0xff]
      %v2591 = vld [vmem:[%s2584 + $0x48] sm:$0xff]
      %v2592 = vld [vmem:[%s2584 + $0x50] sm:$0xff]
      %v2593 = vld [vmem:[%s2584 + $0x60] sm:$0xff]
      %v2594 = vld [vmem:[%s2584 + $0x68] sm:$0xff]
      %v2595 = vld [vmem:[%s2584 + $0x78] sm:$0xff]
      %v2596 = vld [vmem:[%s2584 + $0x80] sm:$0xff]
      %v2597 = vld [vmem:[%s2584 + $0x90] sm:$0xff]
      %v2598 = vld [vmem:[%s2584 + $0x98] sm:$0xff]
      %v2599 = vld [vmem:[%s2584 + $0xa8] sm:$0xff]
      %v2600 = vld [vmem:[%s2584 + $0xb0] sm:$0xff]
      %v2601 = vld [vmem:[%s2584 + $0xc0] sm:$0xff]
      %v2602 = vld [vmem:[%s2584 + $0xc8] sm:$0xff]
      %v2603 = vld [vmem:[%s2584 + $0xd8] sm:$0xff]
      %v2604 = vld [vmem:[%s2584 + $0xe0] sm:$0xff]
      %v2605 = vld [vmem:[%s2584 + $0xf0] sm:$0xff]
      %v2606 = vld [vmem:[%s2584 + $0xf8] sm:$0xff]
      %v2607 = vld [vmem:[%s2584 + $0x108] sm:$0xff]
      %v2608 = vld [vmem:[%s2584 + $0x110] sm:$0xff]
      %v2609 = vld [vmem:[%s2584 + $0x120] sm:$0xff]
      %v2610 = vld [vmem:[%s2584 + $0x128] sm:$0xff]
      %v2611 = vld [vmem:[%s2584 + $0x138] sm:$0xff]
      %v2612 = vld [vmem:[%s2584 + $0x140] sm:$0xff]
      %v2613 = vld [vmem:[%s2584 + $0x150] sm:$0xff]
      %v2614 = vld [vmem:[%s2584 + $0x158] sm:$0xff]
      %v2615 = vld [vmem:[%s2584 + $0x168] sm:$0xff]
      %v2616 = vld [vmem:[%s2584 + $0x170] sm:$0xff]
      %s2617 = scalar_lea.vmem %s1, 24
      %v2618 = vld [vmem:[%s2617] sm:$0xf]
      %v2620 = vsel %vm373, %v2585, 0
      %v2623 = vsel %vm373, %v2586, 0
      %v2626 = vsel %vm373, %v2587, 0
      %v2629 = vsel %vm373, %v2588, 0
      %v2632 = vsel %vm373, %v2589, 0
      %v2635 = vsel %vm373, %v2590, 0
      %v2638 = vsel %vm373, %v2591, 0
      %v2641 = vsel %vm373, %v2592, 0
      %v2644 = vsel %vm373, %v2593, 0
      %v2647 = vsel %vm373, %v2594, 0
      %v2650 = vsel %vm373, %v2595, 0
      %v2653 = vsel %vm373, %v2596, 0
      %v2656 = vsel %vm373, %v2597, 0
      %v2659 = vsel %vm373, %v2598, 0
      %v2662 = vsel %vm373, %v2599, 0
      %v2665 = vsel %vm373, %v2600, 0
      %v2668 = vsel %vm373, %v2601, 0
      %v2671 = vsel %vm373, %v2602, 0
      %v2674 = vsel %vm373, %v2603, 0
      %v2677 = vsel %vm373, %v2604, 0
      %v2680 = vsel %vm373, %v2605, 0
      %v2683 = vsel %vm373, %v2606, 0
      %v2686 = vsel %vm373, %v2607, 0
      %v2689 = vsel %vm373, %v2608, 0
      %v2692 = vsel %vm373, %v2609, 0
      %v2695 = vsel %vm373, %v2610, 0
      %v2698 = vsel %vm373, %v2611, 0
      %v2701 = vsel %vm373, %v2612, 0
      %v2704 = vsel %vm373, %v2613, 0
      %v2707 = vsel %vm373, %v2614, 0
      %v2710 = vsel %vm373, %v2615, 0
      %v2713 = vsel %vm373, %v2616, 0
      %v2716 = vsel %vm470, %v2618, 0
      %2718 = vmatprep.subr.mxu0 0.0
      %2719 = vmatpush1.msra.mxu0 0.0
      %2720 = vmatprep.subr.mxu0 0.0
      %2721 = vmatpush1.msra.mxu0 0.0
      %2722 = vmatprep.subr.mxu0 0.0
      %2723 = vmatpush1.msra.mxu0 0.0
      %2724 = vmatprep.subr.mxu0 0.0
      %2725 = vmatpush1.msra.mxu0 0.0
      %2726 = vmatprep.subr.mxu0 0.0
      %2727 = vmatpush1.msra.mxu0 0.0
      %2728 = vmatprep.subr.mxu0 0.0
      %2729 = vmatpush1.msra.mxu0 0.0
      %2730 = vmatprep.subr.mxu0 0.0
      %2731 = vmatpush1.msra.mxu0 0.0
      %2732 = vmatprep.subr.mxu0 0.0
      %2733 = vmatpush1.msra.mxu0 0.0
      %2734 = vmatprep.subr.mxu0 0.0
      %2735 = vmatpush1.msra.mxu0 0.0
      %2736 = vmatprep.subr.mxu0 0.0
      %2737 = vmatpush1.msra.mxu0 0.0
      %2738 = vmatprep.subr.mxu0 0.0
      %2739 = vmatpush1.msra.mxu0 0.0
      %2740 = vmatprep.subr.mxu0 0.0
      %2741 = vmatpush1.msra.mxu0 0.0
      %2742 = vmatprep.subr.mxu0 0.0
      %2743 = vmatpush1.msra.mxu0 0.0
      %2744 = vmatprep.subr.mxu0 0.0
      %2745 = vmatpush1.msra.mxu0 0.0
      %2746 = vmatprep.subr.mxu0 0.0
      %2747 = vmatpush1.msra.mxu0 0.0
      %2748 = vmatprep.subr.mxu0 0.0
      %2749 = vmatpush1.msra.mxu0 %v2716
      %2750 = vmatprep.subr.mxu0 0.0
      %2751 = vmatpush2.msra.mxu0 0.0
      %2752 = vmatprep.subr.mxu0 0.0
      %2753 = vmatpush2.msra.mxu0 0.0
      %2754 = vmatprep.subr.mxu0 0.0
      %2755 = vmatpush2.msra.mxu0 0.0
      %2756 = vmatprep.subr.mxu0 0.0
      %2757 = vmatpush2.msra.mxu0 0.0
      %2758 = vmatprep.subr.mxu0 0.0
      %2759 = vmatpush2.msra.mxu0 0.0
      %2760 = vmatprep.subr.mxu0 0.0
      %2761 = vmatpush2.msra.mxu0 0.0
      %2762 = vmatprep.subr.mxu0 0.0
      %2763 = vmatpush2.msra.mxu0 0.0
      %2764 = vmatprep.subr.mxu0 0.0
      %2765 = vmatpush2.msra.mxu0 0.0
      %2766 = vmatprep.subr.mxu0 0.0
      %2767 = vmatpush2.msra.mxu0 0.0
      %2768 = vmatprep.subr.mxu0 0.0
      %2769 = vmatpush2.msra.mxu0 0.0
      %2770 = vmatprep.subr.mxu0 0.0
      %2771 = vmatpush2.msra.mxu0 0.0
      %2772 = vmatprep.subr.mxu0 0.0
      %2773 = vmatpush2.msra.mxu0 0.0
      %2774 = vmatprep.subr.mxu0 0.0
      %2775 = vmatpush2.msra.mxu0 0.0
      %2776 = vmatprep.subr.mxu0 0.0
      %2777 = vmatpush2.msra.mxu0 0.0
      %2778 = vmatprep.subr.mxu0 0.0
      %2779 = vmatpush2.msra.mxu0 0.0
      %2780 = vmatprep.subr.mxu0 0.0
      %2781 = vmatpush2.msra.mxu0 0.0
      %2782 = vmatprep.mubr.f32.mxu0 0.0
      %2783 = vmatmul.mubr.f32.gmra.mxu0 %v2620
      %v2784 = vpop.f32.mrf.mxu0
      %v2785 = vadd.f32 0.0, %v2784
      %v2786 = vpop.f32.mrf.mxu0
      %2787 = vmatprep.mubr.f32.mxu0 0.0
      %2788 = vmatmul.mubr.f32.gmra.mxu0 %v2623
      %v2789 = vpop.f32.mrf.mxu0
      %v2790 = vadd.f32 0.0, %v2789
      %v2791 = vpop.f32.mrf.mxu0
      %2792 = vmatprep.mubr.f32.mxu0 0.0
      %2793 = vmatmul.mubr.f32.gmra.mxu0 %v2626
      %v2794 = vpop.f32.mrf.mxu0
      %v2795 = vadd.f32 0.0, %v2794
      %v2796 = vpop.f32.mrf.mxu0
      %2797 = vmatprep.mubr.f32.mxu0 0.0
      %2798 = vmatmul.mubr.f32.gmra.mxu0 %v2629
      %v2799 = vpop.f32.mrf.mxu0
      %v2800 = vadd.f32 0.0, %v2799
      %v2801 = vpop.f32.mrf.mxu0
      %2802 = vmatprep.mubr.f32.mxu0 0.0
      %2803 = vmatmul.mubr.f32.gmra.mxu0 %v2632
      %v2804 = vpop.f32.mrf.mxu0
      %v2805 = vadd.f32 0.0, %v2804
      %v2806 = vpop.f32.mrf.mxu0
      %2807 = vmatprep.mubr.f32.mxu0 0.0
      %2808 = vmatmul.mubr.f32.gmra.mxu0 %v2635
      %v2809 = vpop.f32.mrf.mxu0
      %v2810 = vadd.f32 0.0, %v2809
      %v2811 = vpop.f32.mrf.mxu0
      %2812 = vmatprep.mubr.f32.mxu0 0.0
      %2813 = vmatmul.mubr.f32.gmra.mxu0 %v2638
      %v2814 = vpop.f32.mrf.mxu0
      %v2815 = vadd.f32 0.0, %v2814
      %v2816 = vpop.f32.mrf.mxu0
      %2817 = vmatprep.mubr.f32.mxu0 0.0
      %2818 = vmatmul.mubr.f32.gmra.mxu0 %v2641
      %v2819 = vpop.f32.mrf.mxu0
      %v2820 = vadd.f32 0.0, %v2819
      %v2821 = vpop.f32.mrf.mxu0
      %2822 = vmatprep.mubr.f32.mxu0 0.0
      %2823 = vmatmul.mubr.f32.gmra.mxu0 %v2644
      %v2824 = vpop.f32.mrf.mxu0
      %v2825 = vadd.f32 0.0, %v2824
      %v2826 = vpop.f32.mrf.mxu0
      %2827 = vmatprep.mubr.f32.mxu0 0.0
      %2828 = vmatmul.mubr.f32.gmra.mxu0 %v2647
      %v2829 = vpop.f32.mrf.mxu0
      %v2830 = vadd.f32 0.0, %v2829
      %v2831 = vpop.f32.mrf.mxu0
      %2832 = vmatprep.mubr.f32.mxu0 0.0
      %2833 = vmatmul.mubr.f32.gmra.mxu0 %v2650
      %v2834 = vpop.f32.mrf.mxu0
      %v2835 = vadd.f32 0.0, %v2834
      %v2836 = vpop.f32.mrf.mxu0
      %2837 = vmatprep.mubr.f32.mxu0 0.0
      %2838 = vmatmul.mubr.f32.gmra.mxu0 %v2653
      %v2839 = vpop.f32.mrf.mxu0
      %v2840 = vadd.f32 0.0, %v2839
      %v2841 = vpop.f32.mrf.mxu0
      %2842 = vmatprep.mubr.f32.mxu0 0.0
      %2843 = vmatmul.mubr.f32.gmra.mxu0 %v2656
      %v2844 = vpop.f32.mrf.mxu0
      %v2845 = vadd.f32 0.0, %v2844
      %v2846 = vpop.f32.mrf.mxu0
      %2847 = vmatprep.mubr.f32.mxu0 0.0
      %2848 = vmatmul.mubr.f32.gmra.mxu0 %v2659
      %v2849 = vpop.f32.mrf.mxu0
      %v2850 = vadd.f32 0.0, %v2849
      %v2851 = vpop.f32.mrf.mxu0
      %2852 = vmatprep.mubr.f32.mxu0 0.0
      %2853 = vmatmul.mubr.f32.gmra.mxu0 %v2662
      %v2854 = vpop.f32.mrf.mxu0
      %v2855 = vadd.f32 0.0, %v2854
      %v2856 = vpop.f32.mrf.mxu0
      %2857 = vmatprep.mubr.f32.mxu0 0.0
      %2858 = vmatmul.mubr.f32.gmra.mxu0 %v2665
      %v2859 = vpop.f32.mrf.mxu0
      %v2860 = vadd.f32 0.0, %v2859
      %v2861 = vpop.f32.mrf.mxu0
      %2862 = vmatprep.mubr.f32.mxu0 0.0
      %2863 = vmatmul.mubr.f32.gmra.mxu0 %v2668
      %v2864 = vpop.f32.mrf.mxu0
      %v2865 = vadd.f32 0.0, %v2864
      %v2866 = vpop.f32.mrf.mxu0
      %2867 = vmatprep.mubr.f32.mxu0 0.0
      %2868 = vmatmul.mubr.f32.gmra.mxu0 %v2671
      %v2869 = vpop.f32.mrf.mxu0
      %v2870 = vadd.f32 0.0, %v2869
      %v2871 = vpop.f32.mrf.mxu0
      %2872 = vmatprep.mubr.f32.mxu0 0.0
      %2873 = vmatmul.mubr.f32.gmra.mxu0 %v2674
      %v2874 = vpop.f32.mrf.mxu0
      %v2875 = vadd.f32 0.0, %v2874
      %v2876 = vpop.f32.mrf.mxu0
      %2877 = vmatprep.mubr.f32.mxu0 0.0
      %2878 = vmatmul.mubr.f32.gmra.mxu0 %v2677
      %v2879 = vpop.f32.mrf.mxu0
      %v2880 = vadd.f32 0.0, %v2879
      %v2881 = vpop.f32.mrf.mxu0
      %2882 = vmatprep.mubr.f32.mxu0 0.0
      %2883 = vmatmul.mubr.f32.gmra.mxu0 %v2680
      %v2884 = vpop.f32.mrf.mxu0
      %v2885 = vadd.f32 0.0, %v2884
      %v2886 = vpop.f32.mrf.mxu0
      %2887 = vmatprep.mubr.f32.mxu0 0.0
      %2888 = vmatmul.mubr.f32.gmra.mxu0 %v2683
      %v2889 = vpop.f32.mrf.mxu0
      %v2890 = vadd.f32 0.0, %v2889
      %v2891 = vpop.f32.mrf.mxu0
      %2892 = vmatprep.mubr.f32.mxu0 0.0
      %2893 = vmatmul.mubr.f32.gmra.mxu0 %v2686
      %v2894 = vpop.f32.mrf.mxu0
      %v2895 = vadd.f32 0.0, %v2894
      %v2896 = vpop.f32.mrf.mxu0
      %2897 = vmatprep.mubr.f32.mxu0 0.0
      %2898 = vmatmul.mubr.f32.gmra.mxu0 %v2689
      %v2899 = vpop.f32.mrf.mxu0
      %v2900 = vadd.f32 0.0, %v2899
      %v2901 = vpop.f32.mrf.mxu0
      %2902 = vmatprep.mubr.f32.mxu0 0.0
      %2903 = vmatmul.mubr.f32.gmra.mxu0 %v2692
      %v2904 = vpop.f32.mrf.mxu0
      %v2905 = vadd.f32 0.0, %v2904
      %v2906 = vpop.f32.mrf.mxu0
      %2907 = vmatprep.mubr.f32.mxu0 0.0
      %2908 = vmatmul.mubr.f32.gmra.mxu0 %v2695
      %v2909 = vpop.f32.mrf.mxu0
      %v2910 = vadd.f32 0.0, %v2909
      %v2911 = vpop.f32.mrf.mxu0
      %2912 = vmatprep.mubr.f32.mxu0 0.0
      %2913 = vmatmul.mubr.f32.gmra.mxu0 %v2698
      %v2914 = vpop.f32.mrf.mxu0
      %v2915 = vadd.f32 0.0, %v2914
      %v2916 = vpop.f32.mrf.mxu0
      %2917 = vmatprep.mubr.f32.mxu0 0.0
      %2918 = vmatmul.mubr.f32.gmra.mxu0 %v2701
      %v2919 = vpop.f32.mrf.mxu0
      %v2920 = vadd.f32 0.0, %v2919
      %v2921 = vpop.f32.mrf.mxu0
      %2922 = vmatprep.mubr.f32.mxu0 0.0
      %2923 = vmatmul.mubr.f32.gmra.mxu0 %v2704
      %v2924 = vpop.f32.mrf.mxu0
      %v2925 = vadd.f32 0.0, %v2924
      %v2926 = vpop.f32.mrf.mxu0
      %2927 = vmatprep.mubr.f32.mxu0 0.0
      %2928 = vmatmul.mubr.f32.gmra.mxu0 %v2707
      %v2929 = vpop.f32.mrf.mxu0
      %v2930 = vadd.f32 0.0, %v2929
      %v2931 = vpop.f32.mrf.mxu0
      %2932 = vmatprep.mubr.f32.mxu0 0.0
      %2933 = vmatmul.mubr.f32.gmra.mxu0 %v2710
      %v2934 = vpop.f32.mrf.mxu0
      %v2935 = vadd.f32 0.0, %v2934
      %v2936 = vpop.f32.mrf.mxu0
      %2937 = vmatprep.mubr.f32.mxu0 0.0
      %2938 = vmatmul.mubr.f32.gmra.mxu0 %v2713
      %v2939 = vpop.f32.mrf.mxu0
      %v2940 = vadd.f32 0.0, %v2939
      %v2941 = vpop.f32.mrf.mxu0
      %2942 = vdwg.mxu0
      %v2943 = vadd.f32 %v2552, %v2785
      %v2944 = vadd.f32 %v2553, %v2790
      %v2945 = vadd.f32 %v2554, %v2795
      %v2946 = vadd.f32 %v2555, %v2800
      %v2947 = vadd.f32 %v2556, %v2805
      %v2948 = vadd.f32 %v2557, %v2810
      %v2949 = vadd.f32 %v2558, %v2815
      %v2950 = vadd.f32 %v2559, %v2820
      %v2951 = vadd.f32 %v2560, %v2825
      %v2952 = vadd.f32 %v2561, %v2830
      %v2953 = vadd.f32 %v2562, %v2835
      %v2954 = vadd.f32 %v2563, %v2840
      %v2955 = vadd.f32 %v2564, %v2845
      %v2956 = vadd.f32 %v2565, %v2850
      %v2957 = vadd.f32 %v2566, %v2855
      %v2958 = vadd.f32 %v2567, %v2860
      %v2959 = vadd.f32 %v2568, %v2865
      %v2960 = vadd.f32 %v2569, %v2870
      %v2961 = vadd.f32 %v2570, %v2875
      %v2962 = vadd.f32 %v2571, %v2880
      %v2963 = vadd.f32 %v2572, %v2885
      %v2964 = vadd.f32 %v2573, %v2890
      %v2965 = vadd.f32 %v2574, %v2895
      %v2966 = vadd.f32 %v2575, %v2900
      %v2967 = vadd.f32 %v2576, %v2905
      %v2968 = vadd.f32 %v2577, %v2910
      %v2969 = vadd.f32 %v2578, %v2915
      %v2970 = vadd.f32 %v2579, %v2920
      %v2971 = vadd.f32 %v2580, %v2925
      %v2972 = vadd.f32 %v2581, %v2930
      %v2973 = vadd.f32 %v2582, %v2935
      %v2974 = vadd.f32 %v2583, %v2940
      %v2975 = vld [vmem:[%s2584 + $0x1] sm:$0xff]
      %v2976 = vld [vmem:[%s2584 + $0x9] sm:$0xff]
      %v2977 = vld [vmem:[%s2584 + $0x19] sm:$0xff]
      %v2978 = vld [vmem:[%s2584 + $0x21] sm:$0xff]
      %v2979 = vld [vmem:[%s2584 + $0x31] sm:$0xff]
      %v2980 = vld [vmem:[%s2584 + $0x39] sm:$0xff]
      %v2981 = vld [vmem:[%s2584 + $0x49] sm:$0xff]
      %v2982 = vld [vmem:[%s2584 + $0x51] sm:$0xff]
      %v2983 = vld [vmem:[%s2584 + $0x61] sm:$0xff]
      %v2984 = vld [vmem:[%s2584 + $0x69] sm:$0xff]
      %v2985 = vld [vmem:[%s2584 + $0x79] sm:$0xff]
      %v2986 = vld [vmem:[%s2584 + $0x81] sm:$0xff]
      %v2987 = vld [vmem:[%s2584 + $0x91] sm:$0xff]
      %v2988 = vld [vmem:[%s2584 + $0x99] sm:$0xff]
      %v2989 = vld [vmem:[%s2584 + $0xa9] sm:$0xff]
      %v2990 = vld [vmem:[%s2584 + $0xb1] sm:$0xff]
      %v2991 = vld [vmem:[%s2584 + $0xc1] sm:$0xff]
      %v2992 = vld [vmem:[%s2584 + $0xc9] sm:$0xff]
      %v2993 = vld [vmem:[%s2584 + $0xd9] sm:$0xff]
      %v2994 = vld [vmem:[%s2584 + $0xe1] sm:$0xff]
      %v2995 = vld [vmem:[%s2584 + $0xf1] sm:$0xff]
      %v2996 = vld [vmem:[%s2584 + $0xf9] sm:$0xff]
      %v2997 = vld [vmem:[%s2584 + $0x109] sm:$0xff]
      %v2998 = vld [vmem:[%s2584 + $0x111] sm:$0xff]
      %v2999 = vld [vmem:[%s2584 + $0x121] sm:$0xff]
      %v3000 = vld [vmem:[%s2584 + $0x129] sm:$0xff]
      %v3001 = vld [vmem:[%s2584 + $0x139] sm:$0xff]
      %v3002 = vld [vmem:[%s2584 + $0x141] sm:$0xff]
      %v3003 = vld [vmem:[%s2584 + $0x151] sm:$0xff]
      %v3004 = vld [vmem:[%s2584 + $0x159] sm:$0xff]
      %v3005 = vld [vmem:[%s2584 + $0x169] sm:$0xff]
      %v3006 = vld [vmem:[%s2584 + $0x171] sm:$0xff]
      %s3007 = scalar_lea.vmem %s1, 28
      %v3008 = vld [vmem:[%s3007] sm:$0xf]
      %v3010 = vsel %vm373, %v2975, 0
      %v3013 = vsel %vm373, %v2976, 0
      %v3016 = vsel %vm373, %v2977, 0
      %v3019 = vsel %vm373, %v2978, 0
      %v3022 = vsel %vm373, %v2979, 0
      %v3025 = vsel %vm373, %v2980, 0
      %v3028 = vsel %vm373, %v2981, 0
      %v3031 = vsel %vm373, %v2982, 0
      %v3034 = vsel %vm373, %v2983, 0
      %v3037 = vsel %vm373, %v2984, 0
      %v3040 = vsel %vm373, %v2985, 0
      %v3043 = vsel %vm373, %v2986, 0
      %v3046 = vsel %vm373, %v2987, 0
      %v3049 = vsel %vm373, %v2988, 0
      %v3052 = vsel %vm373, %v2989, 0
      %v3055 = vsel %vm373, %v2990, 0
      %v3058 = vsel %vm373, %v2991, 0
      %v3061 = vsel %vm373, %v2992, 0
      %v3064 = vsel %vm373, %v2993, 0
      %v3067 = vsel %vm373, %v2994, 0
      %v3070 = vsel %vm373, %v2995, 0
      %v3073 = vsel %vm373, %v2996, 0
      %v3076 = vsel %vm373, %v2997, 0
      %v3079 = vsel %vm373, %v2998, 0
      %v3082 = vsel %vm373, %v2999, 0
      %v3085 = vsel %vm373, %v3000, 0
      %v3088 = vsel %vm373, %v3001, 0
      %v3091 = vsel %vm373, %v3002, 0
      %v3094 = vsel %vm373, %v3003, 0
      %v3097 = vsel %vm373, %v3004, 0
      %v3100 = vsel %vm373, %v3005, 0
      %v3103 = vsel %vm373, %v3006, 0
      %v3106 = vsel %vm470, %v3008, 0
      %3108 = vmatprep.subr.mxu0 0.0
      %3109 = vmatpush1.msra.mxu0 0.0
      %3110 = vmatprep.subr.mxu0 0.0
      %3111 = vmatpush1.msra.mxu0 0.0
      %3112 = vmatprep.subr.mxu0 0.0
      %3113 = vmatpush1.msra.mxu0 0.0
      %3114 = vmatprep.subr.mxu0 0.0
      %3115 = vmatpush1.msra.mxu0 0.0
      %3116 = vmatprep.subr.mxu0 0.0
      %3117 = vmatpush1.msra.mxu0 0.0
      %3118 = vmatprep.subr.mxu0 0.0
      %3119 = vmatpush1.msra.mxu0 0.0
      %3120 = vmatprep.subr.mxu0 0.0
      %3121 = vmatpush1.msra.mxu0 0.0
      %3122 = vmatprep.subr.mxu0 0.0
      %3123 = vmatpush1.msra.mxu0 0.0
      %3124 = vmatprep.subr.mxu0 0.0
      %3125 = vmatpush1.msra.mxu0 0.0
      %3126 = vmatprep.subr.mxu0 0.0
      %3127 = vmatpush1.msra.mxu0 0.0
      %3128 = vmatprep.subr.mxu0 0.0
      %3129 = vmatpush1.msra.mxu0 0.0
      %3130 = vmatprep.subr.mxu0 0.0
      %3131 = vmatpush1.msra.mxu0 0.0
      %3132 = vmatprep.subr.mxu0 0.0
      %3133 = vmatpush1.msra.mxu0 0.0
      %3134 = vmatprep.subr.mxu0 0.0
      %3135 = vmatpush1.msra.mxu0 0.0
      %3136 = vmatprep.subr.mxu0 0.0
      %3137 = vmatpush1.msra.mxu0 0.0
      %3138 = vmatprep.subr.mxu0 0.0
      %3139 = vmatpush1.msra.mxu0 %v3106
      %3140 = vmatprep.subr.mxu0 0.0
      %3141 = vmatpush2.msra.mxu0 0.0
      %3142 = vmatprep.subr.mxu0 0.0
      %3143 = vmatpush2.msra.mxu0 0.0
      %3144 = vmatprep.subr.mxu0 0.0
      %3145 = vmatpush2.msra.mxu0 0.0
      %3146 = vmatprep.subr.mxu0 0.0
      %3147 = vmatpush2.msra.mxu0 0.0
      %3148 = vmatprep.subr.mxu0 0.0
      %3149 = vmatpush2.msra.mxu0 0.0
      %3150 = vmatprep.subr.mxu0 0.0
      %3151 = vmatpush2.msra.mxu0 0.0
      %3152 = vmatprep.subr.mxu0 0.0
      %3153 = vmatpush2.msra.mxu0 0.0
      %3154 = vmatprep.subr.mxu0 0.0
      %3155 = vmatpush2.msra.mxu0 0.0
      %3156 = vmatprep.subr.mxu0 0.0
      %3157 = vmatpush2.msra.mxu0 0.0
      %3158 = vmatprep.subr.mxu0 0.0
      %3159 = vmatpush2.msra.mxu0 0.0
      %3160 = vmatprep.subr.mxu0 0.0
      %3161 = vmatpush2.msra.mxu0 0.0
      %3162 = vmatprep.subr.mxu0 0.0
      %3163 = vmatpush2.msra.mxu0 0.0
      %3164 = vmatprep.subr.mxu0 0.0
      %3165 = vmatpush2.msra.mxu0 0.0
      %3166 = vmatprep.subr.mxu0 0.0
      %3167 = vmatpush2.msra.mxu0 0.0
      %3168 = vmatprep.subr.mxu0 0.0
      %3169 = vmatpush2.msra.mxu0 0.0
      %3170 = vmatprep.subr.mxu0 0.0
      %3171 = vmatpush2.msra.mxu0 0.0
      %3172 = vmatprep.mubr.f32.mxu0 0.0
      %3173 = vmatmul.mubr.f32.gmra.mxu0 %v3010
      %v3174 = vpop.f32.mrf.mxu0
      %v3175 = vadd.f32 0.0, %v3174
      %v3176 = vpop.f32.mrf.mxu0
      %3177 = vmatprep.mubr.f32.mxu0 0.0
      %3178 = vmatmul.mubr.f32.gmra.mxu0 %v3013
      %v3179 = vpop.f32.mrf.mxu0
      %v3180 = vadd.f32 0.0, %v3179
      %v3181 = vpop.f32.mrf.mxu0
      %3182 = vmatprep.mubr.f32.mxu0 0.0
      %3183 = vmatmul.mubr.f32.gmra.mxu0 %v3016
      %v3184 = vpop.f32.mrf.mxu0
      %v3185 = vadd.f32 0.0, %v3184
      %v3186 = vpop.f32.mrf.mxu0
      %3187 = vmatprep.mubr.f32.mxu0 0.0
      %3188 = vmatmul.mubr.f32.gmra.mxu0 %v3019
      %v3189 = vpop.f32.mrf.mxu0
      %v3190 = vadd.f32 0.0, %v3189
      %v3191 = vpop.f32.mrf.mxu0
      %3192 = vmatprep.mubr.f32.mxu0 0.0
      %3193 = vmatmul.mubr.f32.gmra.mxu0 %v3022
      %v3194 = vpop.f32.mrf.mxu0
      %v3195 = vadd.f32 0.0, %v3194
      %v3196 = vpop.f32.mrf.mxu0
      %3197 = vmatprep.mubr.f32.mxu0 0.0
      %3198 = vmatmul.mubr.f32.gmra.mxu0 %v3025
      %v3199 = vpop.f32.mrf.mxu0
      %v3200 = vadd.f32 0.0, %v3199
      %v3201 = vpop.f32.mrf.mxu0
      %3202 = vmatprep.mubr.f32.mxu0 0.0
      %3203 = vmatmul.mubr.f32.gmra.mxu0 %v3028
      %v3204 = vpop.f32.mrf.mxu0
      %v3205 = vadd.f32 0.0, %v3204
      %v3206 = vpop.f32.mrf.mxu0
      %3207 = vmatprep.mubr.f32.mxu0 0.0
      %3208 = vmatmul.mubr.f32.gmra.mxu0 %v3031
      %v3209 = vpop.f32.mrf.mxu0
      %v3210 = vadd.f32 0.0, %v3209
      %v3211 = vpop.f32.mrf.mxu0
      %3212 = vmatprep.mubr.f32.mxu0 0.0
      %3213 = vmatmul.mubr.f32.gmra.mxu0 %v3034
      %v3214 = vpop.f32.mrf.mxu0
      %v3215 = vadd.f32 0.0, %v3214
      %v3216 = vpop.f32.mrf.mxu0
      %3217 = vmatprep.mubr.f32.mxu0 0.0
      %3218 = vmatmul.mubr.f32.gmra.mxu0 %v3037
      %v3219 = vpop.f32.mrf.mxu0
      %v3220 = vadd.f32 0.0, %v3219
      %v3221 = vpop.f32.mrf.mxu0
      %3222 = vmatprep.mubr.f32.mxu0 0.0
      %3223 = vmatmul.mubr.f32.gmra.mxu0 %v3040
      %v3224 = vpop.f32.mrf.mxu0
      %v3225 = vadd.f32 0.0, %v3224
      %v3226 = vpop.f32.mrf.mxu0
      %3227 = vmatprep.mubr.f32.mxu0 0.0
      %3228 = vmatmul.mubr.f32.gmra.mxu0 %v3043
      %v3229 = vpop.f32.mrf.mxu0
      %v3230 = vadd.f32 0.0, %v3229
      %v3231 = vpop.f32.mrf.mxu0
      %3232 = vmatprep.mubr.f32.mxu0 0.0
      %3233 = vmatmul.mubr.f32.gmra.mxu0 %v3046
      %v3234 = vpop.f32.mrf.mxu0
      %v3235 = vadd.f32 0.0, %v3234
      %v3236 = vpop.f32.mrf.mxu0
      %3237 = vmatprep.mubr.f32.mxu0 0.0
      %3238 = vmatmul.mubr.f32.gmra.mxu0 %v3049
      %v3239 = vpop.f32.mrf.mxu0
      %v3240 = vadd.f32 0.0, %v3239
      %v3241 = vpop.f32.mrf.mxu0
      %3242 = vmatprep.mubr.f32.mxu0 0.0
      %3243 = vmatmul.mubr.f32.gmra.mxu0 %v3052
      %v3244 = vpop.f32.mrf.mxu0
      %v3245 = vadd.f32 0.0, %v3244
      %v3246 = vpop.f32.mrf.mxu0
      %3247 = vmatprep.mubr.f32.mxu0 0.0
      %3248 = vmatmul.mubr.f32.gmra.mxu0 %v3055
      %v3249 = vpop.f32.mrf.mxu0
      %v3250 = vadd.f32 0.0, %v3249
      %v3251 = vpop.f32.mrf.mxu0
      %3252 = vmatprep.mubr.f32.mxu0 0.0
      %3253 = vmatmul.mubr.f32.gmra.mxu0 %v3058
      %v3254 = vpop.f32.mrf.mxu0
      %v3255 = vadd.f32 0.0, %v3254
      %v3256 = vpop.f32.mrf.mxu0
      %3257 = vmatprep.mubr.f32.mxu0 0.0
      %3258 = vmatmul.mubr.f32.gmra.mxu0 %v3061
      %v3259 = vpop.f32.mrf.mxu0
      %v3260 = vadd.f32 0.0, %v3259
      %v3261 = vpop.f32.mrf.mxu0
      %3262 = vmatprep.mubr.f32.mxu0 0.0
      %3263 = vmatmul.mubr.f32.gmra.mxu0 %v3064
      %v3264 = vpop.f32.mrf.mxu0
      %v3265 = vadd.f32 0.0, %v3264
      %v3266 = vpop.f32.mrf.mxu0
      %3267 = vmatprep.mubr.f32.mxu0 0.0
      %3268 = vmatmul.mubr.f32.gmra.mxu0 %v3067
      %v3269 = vpop.f32.mrf.mxu0
      %v3270 = vadd.f32 0.0, %v3269
      %v3271 = vpop.f32.mrf.mxu0
      %3272 = vmatprep.mubr.f32.mxu0 0.0
      %3273 = vmatmul.mubr.f32.gmra.mxu0 %v3070
      %v3274 = vpop.f32.mrf.mxu0
      %v3275 = vadd.f32 0.0, %v3274
      %v3276 = vpop.f32.mrf.mxu0
      %3277 = vmatprep.mubr.f32.mxu0 0.0
      %3278 = vmatmul.mubr.f32.gmra.mxu0 %v3073
      %v3279 = vpop.f32.mrf.mxu0
      %v3280 = vadd.f32 0.0, %v3279
      %v3281 = vpop.f32.mrf.mxu0
      %3282 = vmatprep.mubr.f32.mxu0 0.0
      %3283 = vmatmul.mubr.f32.gmra.mxu0 %v3076
      %v3284 = vpop.f32.mrf.mxu0
      %v3285 = vadd.f32 0.0, %v3284
      %v3286 = vpop.f32.mrf.mxu0
      %3287 = vmatprep.mubr.f32.mxu0 0.0
      %3288 = vmatmul.mubr.f32.gmra.mxu0 %v3079
      %v3289 = vpop.f32.mrf.mxu0
      %v3290 = vadd.f32 0.0, %v3289
      %v3291 = vpop.f32.mrf.mxu0
      %3292 = vmatprep.mubr.f32.mxu0 0.0
      %3293 = vmatmul.mubr.f32.gmra.mxu0 %v3082
      %v3294 = vpop.f32.mrf.mxu0
      %v3295 = vadd.f32 0.0, %v3294
      %v3296 = vpop.f32.mrf.mxu0
      %3297 = vmatprep.mubr.f32.mxu0 0.0
      %3298 = vmatmul.mubr.f32.gmra.mxu0 %v3085
      %v3299 = vpop.f32.mrf.mxu0
      %v3300 = vadd.f32 0.0, %v3299
      %v3301 = vpop.f32.mrf.mxu0
      %3302 = vmatprep.mubr.f32.mxu0 0.0
      %3303 = vmatmul.mubr.f32.gmra.mxu0 %v3088
      %v3304 = vpop.f32.mrf.mxu0
      %v3305 = vadd.f32 0.0, %v3304
      %v3306 = vpop.f32.mrf.mxu0
      %3307 = vmatprep.mubr.f32.mxu0 0.0
      %3308 = vmatmul.mubr.f32.gmra.mxu0 %v3091
      %v3309 = vpop.f32.mrf.mxu0
      %v3310 = vadd.f32 0.0, %v3309
      %v3311 = vpop.f32.mrf.mxu0
      %3312 = vmatprep.mubr.f32.mxu0 0.0
      %3313 = vmatmul.mubr.f32.gmra.mxu0 %v3094
      %v3314 = vpop.f32.mrf.mxu0
      %v3315 = vadd.f32 0.0, %v3314
      %v3316 = vpop.f32.mrf.mxu0
      %3317 = vmatprep.mubr.f32.mxu0 0.0
      %3318 = vmatmul.mubr.f32.gmra.mxu0 %v3097
      %v3319 = vpop.f32.mrf.mxu0
      %v3320 = vadd.f32 0.0, %v3319
      %v3321 = vpop.f32.mrf.mxu0
      %3322 = vmatprep.mubr.f32.mxu0 0.0
      %3323 = vmatmul.mubr.f32.gmra.mxu0 %v3100
      %v3324 = vpop.f32.mrf.mxu0
      %v3325 = vadd.f32 0.0, %v3324
      %v3326 = vpop.f32.mrf.mxu0
      %3327 = vmatprep.mubr.f32.mxu0 0.0
      %3328 = vmatmul.mubr.f32.gmra.mxu0 %v3103
      %v3329 = vpop.f32.mrf.mxu0
      %v3330 = vadd.f32 0.0, %v3329
      %v3331 = vpop.f32.mrf.mxu0
      %3332 = vdwg.mxu0
      %v3333 = vadd.f32 %v2943, %v3175
      %v3334 = vadd.f32 %v2944, %v3180
      %v3335 = vadd.f32 %v2945, %v3185
      %v3336 = vadd.f32 %v2946, %v3190
      %v3337 = vadd.f32 %v2947, %v3195
      %v3338 = vadd.f32 %v2948, %v3200
      %v3339 = vadd.f32 %v2949, %v3205
      %v3340 = vadd.f32 %v2950, %v3210
      %v3341 = vadd.f32 %v2951, %v3215
      %v3342 = vadd.f32 %v2952, %v3220
      %v3343 = vadd.f32 %v2953, %v3225
      %v3344 = vadd.f32 %v2954, %v3230
      %v3345 = vadd.f32 %v2955, %v3235
      %v3346 = vadd.f32 %v2956, %v3240
      %v3347 = vadd.f32 %v2957, %v3245
      %v3348 = vadd.f32 %v2958, %v3250
      %v3349 = vadd.f32 %v2959, %v3255
      %v3350 = vadd.f32 %v2960, %v3260
      %v3351 = vadd.f32 %v2961, %v3265
      %v3352 = vadd.f32 %v2962, %v3270
      %v3353 = vadd.f32 %v2963, %v3275
      %v3354 = vadd.f32 %v2964, %v3280
      %v3355 = vadd.f32 %v2965, %v3285
      %v3356 = vadd.f32 %v2966, %v3290
      %v3357 = vadd.f32 %v2967, %v3295
      %v3358 = vadd.f32 %v2968, %v3300
      %v3359 = vadd.f32 %v2969, %v3305
      %v3360 = vadd.f32 %v2970, %v3310
      %v3361 = vadd.f32 %v2971, %v3315
      %v3362 = vadd.f32 %v2972, %v3320
      %v3363 = vadd.f32 %v2973, %v3325
      %v3364 = vadd.f32 %v2974, %v3330
      %v3365 = vld [vmem:[%s2584 + $0x2] sm:$0xff]
      %v3366 = vld [vmem:[%s2584 + $0xa] sm:$0xff]
      %v3367 = vld [vmem:[%s2584 + $0x1a] sm:$0xff]
      %v3368 = vld [vmem:[%s2584 + $0x22] sm:$0xff]
      %v3369 = vld [vmem:[%s2584 + $0x32] sm:$0xff]
      %v3370 = vld [vmem:[%s2584 + $0x3a] sm:$0xff]
      %v3371 = vld [vmem:[%s2584 + $0x4a] sm:$0xff]
      %v3372 = vld [vmem:[%s2584 + $0x52] sm:$0xff]
      %v3373 = vld [vmem:[%s2584 + $0x62] sm:$0xff]
      %v3374 = vld [vmem:[%s2584 + $0x6a] sm:$0xff]
      %v3375 = vld [vmem:[%s2584 + $0x7a] sm:$0xff]
      %v3376 = vld [vmem:[%s2584 + $0x82] sm:$0xff]
      %v3377 = vld [vmem:[%s2584 + $0x92] sm:$0xff]
      %v3378 = vld [vmem:[%s2584 + $0x9a] sm:$0xff]
      %v3379 = vld [vmem:[%s2584 + $0xaa] sm:$0xff]
      %v3380 = vld [vmem:[%s2584 + $0xb2] sm:$0xff]
      %v3381 = vld [vmem:[%s2584 + $0xc2] sm:$0xff]
      %v3382 = vld [vmem:[%s2584 + $0xca] sm:$0xff]
      %v3383 = vld [vmem:[%s2584 + $0xda] sm:$0xff]
      %v3384 = vld [vmem:[%s2584 + $0xe2] sm:$0xff]
      %v3385 = vld [vmem:[%s2584 + $0xf2] sm:$0xff]
      %v3386 = vld [vmem:[%s2584 + $0xfa] sm:$0xff]
      %v3387 = vld [vmem:[%s2584 + $0x10a] sm:$0xff]
      %v3388 = vld [vmem:[%s2584 + $0x112] sm:$0xff]
      %v3389 = vld [vmem:[%s2584 + $0x122] sm:$0xff]
      %v3390 = vld [vmem:[%s2584 + $0x12a] sm:$0xff]
      %v3391 = vld [vmem:[%s2584 + $0x13a] sm:$0xff]
      %v3392 = vld [vmem:[%s2584 + $0x142] sm:$0xff]
      %v3393 = vld [vmem:[%s2584 + $0x152] sm:$0xff]
      %v3394 = vld [vmem:[%s2584 + $0x15a] sm:$0xff]
      %v3395 = vld [vmem:[%s2584 + $0x16a] sm:$0xff]
      %v3396 = vld [vmem:[%s2584 + $0x172] sm:$0xff]
      %s3397 = scalar_lea.vmem %s1, 32
      %v3398 = vld [vmem:[%s3397] sm:$0xf]
      %v3400 = vsel %vm373, %v3365, 0
      %v3403 = vsel %vm373, %v3366, 0
      %v3406 = vsel %vm373, %v3367, 0
      %v3409 = vsel %vm373, %v3368, 0
      %v3412 = vsel %vm373, %v3369, 0
      %v3415 = vsel %vm373, %v3370, 0
      %v3418 = vsel %vm373, %v3371, 0
      %v3421 = vsel %vm373, %v3372, 0
      %v3424 = vsel %vm373, %v3373, 0
      %v3427 = vsel %vm373, %v3374, 0
      %v3430 = vsel %vm373, %v3375, 0
      %v3433 = vsel %vm373, %v3376, 0
      %v3436 = vsel %vm373, %v3377, 0
      %v3439 = vsel %vm373, %v3378, 0
      %v3442 = vsel %vm373, %v3379, 0
      %v3445 = vsel %vm373, %v3380, 0
      %v3448 = vsel %vm373, %v3381, 0
      %v3451 = vsel %vm373, %v3382, 0
      %v3454 = vsel %vm373, %v3383, 0
      %v3457 = vsel %vm373, %v3384, 0
      %v3460 = vsel %vm373, %v3385, 0
      %v3463 = vsel %vm373, %v3386, 0
      %v3466 = vsel %vm373, %v3387, 0
      %v3469 = vsel %vm373, %v3388, 0
      %v3472 = vsel %vm373, %v3389, 0
      %v3475 = vsel %vm373, %v3390, 0
      %v3478 = vsel %vm373, %v3391, 0
      %v3481 = vsel %vm373, %v3392, 0
      %v3484 = vsel %vm373, %v3393, 0
      %v3487 = vsel %vm373, %v3394, 0
      %v3490 = vsel %vm373, %v3395, 0
      %v3493 = vsel %vm373, %v3396, 0
      %v3496 = vsel %vm470, %v3398, 0
      %3498 = vmatprep.subr.mxu0 0.0
      %3499 = vmatpush1.msra.mxu0 0.0
      %3500 = vmatprep.subr.mxu0 0.0
      %3501 = vmatpush1.msra.mxu0 0.0
      %3502 = vmatprep.subr.mxu0 0.0
      %3503 = vmatpush1.msra.mxu0 0.0
      %3504 = vmatprep.subr.mxu0 0.0
      %3505 = vmatpush1.msra.mxu0 0.0
      %3506 = vmatprep.subr.mxu0 0.0
      %3507 = vmatpush1.msra.mxu0 0.0
      %3508 = vmatprep.subr.mxu0 0.0
      %3509 = vmatpush1.msra.mxu0 0.0
      %3510 = vmatprep.subr.mxu0 0.0
      %3511 = vmatpush1.msra.mxu0 0.0
      %3512 = vmatprep.subr.mxu0 0.0
      %3513 = vmatpush1.msra.mxu0 0.0
      %3514 = vmatprep.subr.mxu0 0.0
      %3515 = vmatpush1.msra.mxu0 0.0
      %3516 = vmatprep.subr.mxu0 0.0
      %3517 = vmatpush1.msra.mxu0 0.0
      %3518 = vmatprep.subr.mxu0 0.0
      %3519 = vmatpush1.msra.mxu0 0.0
      %3520 = vmatprep.subr.mxu0 0.0
      %3521 = vmatpush1.msra.mxu0 0.0
      %3522 = vmatprep.subr.mxu0 0.0
      %3523 = vmatpush1.msra.mxu0 0.0
      %3524 = vmatprep.subr.mxu0 0.0
      %3525 = vmatpush1.msra.mxu0 0.0
      %3526 = vmatprep.subr.mxu0 0.0
      %3527 = vmatpush1.msra.mxu0 0.0
      %3528 = vmatprep.subr.mxu0 0.0
      %3529 = vmatpush1.msra.mxu0 %v3496
      %3530 = vmatprep.subr.mxu0 0.0
      %3531 = vmatpush2.msra.mxu0 0.0
      %3532 = vmatprep.subr.mxu0 0.0
      %3533 = vmatpush2.msra.mxu0 0.0
      %3534 = vmatprep.subr.mxu0 0.0
      %3535 = vmatpush2.msra.mxu0 0.0
      %3536 = vmatprep.subr.mxu0 0.0
      %3537 = vmatpush2.msra.mxu0 0.0
      %3538 = vmatprep.subr.mxu0 0.0
      %3539 = vmatpush2.msra.mxu0 0.0
      %3540 = vmatprep.subr.mxu0 0.0
      %3541 = vmatpush2.msra.mxu0 0.0
      %3542 = vmatprep.subr.mxu0 0.0
      %3543 = vmatpush2.msra.mxu0 0.0
      %3544 = vmatprep.subr.mxu0 0.0
      %3545 = vmatpush2.msra.mxu0 0.0
      %3546 = vmatprep.subr.mxu0 0.0
      %3547 = vmatpush2.msra.mxu0 0.0
      %3548 = vmatprep.subr.mxu0 0.0
      %3549 = vmatpush2.msra.mxu0 0.0
      %3550 = vmatprep.subr.mxu0 0.0
      %3551 = vmatpush2.msra.mxu0 0.0
      %3552 = vmatprep.subr.mxu0 0.0
      %3553 = vmatpush2.msra.mxu0 0.0
      %3554 = vmatprep.subr.mxu0 0.0
      %3555 = vmatpush2.msra.mxu0 0.0
      %3556 = vmatprep.subr.mxu0 0.0
      %3557 = vmatpush2.msra.mxu0 0.0
      %3558 = vmatprep.subr.mxu0 0.0
      %3559 = vmatpush2.msra.mxu0 0.0
      %3560 = vmatprep.subr.mxu0 0.0
      %3561 = vmatpush2.msra.mxu0 0.0
      %3562 = vmatprep.mubr.f32.mxu0 0.0
      %3563 = vmatmul.mubr.f32.gmra.mxu0 %v3400
      %v3564 = vpop.f32.mrf.mxu0
      %v3565 = vadd.f32 0.0, %v3564
      %v3566 = vpop.f32.mrf.mxu0
      %3567 = vmatprep.mubr.f32.mxu0 0.0
      %3568 = vmatmul.mubr.f32.gmra.mxu0 %v3403
      %v3569 = vpop.f32.mrf.mxu0
      %v3570 = vadd.f32 0.0, %v3569
      %v3571 = vpop.f32.mrf.mxu0
      %3572 = vmatprep.mubr.f32.mxu0 0.0
      %3573 = vmatmul.mubr.f32.gmra.mxu0 %v3406
      %v3574 = vpop.f32.mrf.mxu0
      %v3575 = vadd.f32 0.0, %v3574
      %v3576 = vpop.f32.mrf.mxu0
      %3577 = vmatprep.mubr.f32.mxu0 0.0
      %3578 = vmatmul.mubr.f32.gmra.mxu0 %v3409
      %v3579 = vpop.f32.mrf.mxu0
      %v3580 = vadd.f32 0.0, %v3579
      %v3581 = vpop.f32.mrf.mxu0
      %3582 = vmatprep.mubr.f32.mxu0 0.0
      %3583 = vmatmul.mubr.f32.gmra.mxu0 %v3412
      %v3584 = vpop.f32.mrf.mxu0
      %v3585 = vadd.f32 0.0, %v3584
      %v3586 = vpop.f32.mrf.mxu0
      %3587 = vmatprep.mubr.f32.mxu0 0.0
      %3588 = vmatmul.mubr.f32.gmra.mxu0 %v3415
      %v3589 = vpop.f32.mrf.mxu0
      %v3590 = vadd.f32 0.0, %v3589
      %v3591 = vpop.f32.mrf.mxu0
      %3592 = vmatprep.mubr.f32.mxu0 0.0
      %3593 = vmatmul.mubr.f32.gmra.mxu0 %v3418
      %v3594 = vpop.f32.mrf.mxu0
      %v3595 = vadd.f32 0.0, %v3594
      %v3596 = vpop.f32.mrf.mxu0
      %3597 = vmatprep.mubr.f32.mxu0 0.0
      %3598 = vmatmul.mubr.f32.gmra.mxu0 %v3421
      %v3599 = vpop.f32.mrf.mxu0
      %v3600 = vadd.f32 0.0, %v3599
      %v3601 = vpop.f32.mrf.mxu0
      %3602 = vmatprep.mubr.f32.mxu0 0.0
      %3603 = vmatmul.mubr.f32.gmra.mxu0 %v3424
      %v3604 = vpop.f32.mrf.mxu0
      %v3605 = vadd.f32 0.0, %v3604
      %v3606 = vpop.f32.mrf.mxu0
      %3607 = vmatprep.mubr.f32.mxu0 0.0
      %3608 = vmatmul.mubr.f32.gmra.mxu0 %v3427
      %v3609 = vpop.f32.mrf.mxu0
      %v3610 = vadd.f32 0.0, %v3609
      %v3611 = vpop.f32.mrf.mxu0
      %3612 = vmatprep.mubr.f32.mxu0 0.0
      %3613 = vmatmul.mubr.f32.gmra.mxu0 %v3430
      %v3614 = vpop.f32.mrf.mxu0
      %v3615 = vadd.f32 0.0, %v3614
      %v3616 = vpop.f32.mrf.mxu0
      %3617 = vmatprep.mubr.f32.mxu0 0.0
      %3618 = vmatmul.mubr.f32.gmra.mxu0 %v3433
      %v3619 = vpop.f32.mrf.mxu0
      %v3620 = vadd.f32 0.0, %v3619
      %v3621 = vpop.f32.mrf.mxu0
      %3622 = vmatprep.mubr.f32.mxu0 0.0
      %3623 = vmatmul.mubr.f32.gmra.mxu0 %v3436
      %v3624 = vpop.f32.mrf.mxu0
      %v3625 = vadd.f32 0.0, %v3624
      %v3626 = vpop.f32.mrf.mxu0
      %3627 = vmatprep.mubr.f32.mxu0 0.0
      %3628 = vmatmul.mubr.f32.gmra.mxu0 %v3439
      %v3629 = vpop.f32.mrf.mxu0
      %v3630 = vadd.f32 0.0, %v3629
      %v3631 = vpop.f32.mrf.mxu0
      %3632 = vmatprep.mubr.f32.mxu0 0.0
      %3633 = vmatmul.mubr.f32.gmra.mxu0 %v3442
      %v3634 = vpop.f32.mrf.mxu0
      %v3635 = vadd.f32 0.0, %v3634
      %v3636 = vpop.f32.mrf.mxu0
      %3637 = vmatprep.mubr.f32.mxu0 0.0
      %3638 = vmatmul.mubr.f32.gmra.mxu0 %v3445
      %v3639 = vpop.f32.mrf.mxu0
      %v3640 = vadd.f32 0.0, %v3639
      %v3641 = vpop.f32.mrf.mxu0
      %3642 = vmatprep.mubr.f32.mxu0 0.0
      %3643 = vmatmul.mubr.f32.gmra.mxu0 %v3448
      %v3644 = vpop.f32.mrf.mxu0
      %v3645 = vadd.f32 0.0, %v3644
      %v3646 = vpop.f32.mrf.mxu0
      %3647 = vmatprep.mubr.f32.mxu0 0.0
      %3648 = vmatmul.mubr.f32.gmra.mxu0 %v3451
      %v3649 = vpop.f32.mrf.mxu0
      %v3650 = vadd.f32 0.0, %v3649
      %v3651 = vpop.f32.mrf.mxu0
      %3652 = vmatprep.mubr.f32.mxu0 0.0
      %3653 = vmatmul.mubr.f32.gmra.mxu0 %v3454
      %v3654 = vpop.f32.mrf.mxu0
      %v3655 = vadd.f32 0.0, %v3654
      %v3656 = vpop.f32.mrf.mxu0
      %3657 = vmatprep.mubr.f32.mxu0 0.0
      %3658 = vmatmul.mubr.f32.gmra.mxu0 %v3457
      %v3659 = vpop.f32.mrf.mxu0
      %v3660 = vadd.f32 0.0, %v3659
      %v3661 = vpop.f32.mrf.mxu0
      %3662 = vmatprep.mubr.f32.mxu0 0.0
      %3663 = vmatmul.mubr.f32.gmra.mxu0 %v3460
      %v3664 = vpop.f32.mrf.mxu0
      %v3665 = vadd.f32 0.0, %v3664
      %v3666 = vpop.f32.mrf.mxu0
      %3667 = vmatprep.mubr.f32.mxu0 0.0
      %3668 = vmatmul.mubr.f32.gmra.mxu0 %v3463
      %v3669 = vpop.f32.mrf.mxu0
      %v3670 = vadd.f32 0.0, %v3669
      %v3671 = vpop.f32.mrf.mxu0
      %3672 = vmatprep.mubr.f32.mxu0 0.0
      %3673 = vmatmul.mubr.f32.gmra.mxu0 %v3466
      %v3674 = vpop.f32.mrf.mxu0
      %v3675 = vadd.f32 0.0, %v3674
      %v3676 = vpop.f32.mrf.mxu0
      %3677 = vmatprep.mubr.f32.mxu0 0.0
      %3678 = vmatmul.mubr.f32.gmra.mxu0 %v3469
      %v3679 = vpop.f32.mrf.mxu0
      %v3680 = vadd.f32 0.0, %v3679
      %v3681 = vpop.f32.mrf.mxu0
      %3682 = vmatprep.mubr.f32.mxu0 0.0
      %3683 = vmatmul.mubr.f32.gmra.mxu0 %v3472
      %v3684 = vpop.f32.mrf.mxu0
      %v3685 = vadd.f32 0.0, %v3684
      %v3686 = vpop.f32.mrf.mxu0
      %3687 = vmatprep.mubr.f32.mxu0 0.0
      %3688 = vmatmul.mubr.f32.gmra.mxu0 %v3475
      %v3689 = vpop.f32.mrf.mxu0
      %v3690 = vadd.f32 0.0, %v3689
      %v3691 = vpop.f32.mrf.mxu0
      %3692 = vmatprep.mubr.f32.mxu0 0.0
      %3693 = vmatmul.mubr.f32.gmra.mxu0 %v3478
      %v3694 = vpop.f32.mrf.mxu0
      %v3695 = vadd.f32 0.0, %v3694
      %v3696 = vpop.f32.mrf.mxu0
      %3697 = vmatprep.mubr.f32.mxu0 0.0
      %3698 = vmatmul.mubr.f32.gmra.mxu0 %v3481
      %v3699 = vpop.f32.mrf.mxu0
      %v3700 = vadd.f32 0.0, %v3699
      %v3701 = vpop.f32.mrf.mxu0
      %3702 = vmatprep.mubr.f32.mxu0 0.0
      %3703 = vmatmul.mubr.f32.gmra.mxu0 %v3484
      %v3704 = vpop.f32.mrf.mxu0
      %v3705 = vadd.f32 0.0, %v3704
      %v3706 = vpop.f32.mrf.mxu0
      %3707 = vmatprep.mubr.f32.mxu0 0.0
      %3708 = vmatmul.mubr.f32.gmra.mxu0 %v3487
      %v3709 = vpop.f32.mrf.mxu0
      %v3710 = vadd.f32 0.0, %v3709
      %v3711 = vpop.f32.mrf.mxu0
      %3712 = vmatprep.mubr.f32.mxu0 0.0
      %3713 = vmatmul.mubr.f32.gmra.mxu0 %v3490
      %v3714 = vpop.f32.mrf.mxu0
      %v3715 = vadd.f32 0.0, %v3714
      %v3716 = vpop.f32.mrf.mxu0
      %3717 = vmatprep.mubr.f32.mxu0 0.0
      %3718 = vmatmul.mubr.f32.gmra.mxu0 %v3493
      %v3719 = vpop.f32.mrf.mxu0
      %v3720 = vadd.f32 0.0, %v3719
      %v3721 = vpop.f32.mrf.mxu0
      %3722 = vdwg.mxu0
      %v3723 = vadd.f32 %v3333, %v3565
      %v3724 = vadd.f32 %v3334, %v3570
      %v3725 = vadd.f32 %v3335, %v3575
      %v3726 = vadd.f32 %v3336, %v3580
      %v3727 = vadd.f32 %v3337, %v3585
      %v3728 = vadd.f32 %v3338, %v3590
      %v3729 = vadd.f32 %v3339, %v3595
      %v3730 = vadd.f32 %v3340, %v3600
      %v3731 = vadd.f32 %v3341, %v3605
      %v3732 = vadd.f32 %v3342, %v3610
      %v3733 = vadd.f32 %v3343, %v3615
      %v3734 = vadd.f32 %v3344, %v3620
      %v3735 = vadd.f32 %v3345, %v3625
      %v3736 = vadd.f32 %v3346, %v3630
      %v3737 = vadd.f32 %v3347, %v3635
      %v3738 = vadd.f32 %v3348, %v3640
      %v3739 = vadd.f32 %v3349, %v3645
      %v3740 = vadd.f32 %v3350, %v3650
      %v3741 = vadd.f32 %v3351, %v3655
      %v3742 = vadd.f32 %v3352, %v3660
      %v3743 = vadd.f32 %v3353, %v3665
      %v3744 = vadd.f32 %v3354, %v3670
      %v3745 = vadd.f32 %v3355, %v3675
      %v3746 = vadd.f32 %v3356, %v3680
      %v3747 = vadd.f32 %v3357, %v3685
      %v3748 = vadd.f32 %v3358, %v3690
      %v3749 = vadd.f32 %v3359, %v3695
      %v3750 = vadd.f32 %v3360, %v3700
      %v3751 = vadd.f32 %v3361, %v3705
      %v3752 = vadd.f32 %v3362, %v3710
      %v3753 = vadd.f32 %v3363, %v3715
      %v3754 = vadd.f32 %v3364, %v3720
      %v3755 = vld [vmem:[%s2] sm:$0x1]
      %v3757 = vlaneseq
      %v3758 = vshrl.u32 %v3757, 7
      %v3759 = vsub.s32 0, %v3758
      %v3760 = vrot.slane %v3755, %v3759
      %v3762 = vadd.f32 %v3723, %v3760
      %v3763 = vadd.f32 %v3724, %v3760
      %v3764 = vadd.f32 %v3725, %v3760
      %v3765 = vadd.f32 %v3726, %v3760
      %v3766 = vadd.f32 %v3727, %v3760
      %v3767 = vadd.f32 %v3728, %v3760
      %v3768 = vadd.f32 %v3729, %v3760
      %v3769 = vadd.f32 %v3730, %v3760
      %v3770 = vadd.f32 %v3731, %v3760
      %v3771 = vadd.f32 %v3732, %v3760
      %v3772 = vadd.f32 %v3733, %v3760
      %v3773 = vadd.f32 %v3734, %v3760
      %v3774 = vadd.f32 %v3735, %v3760
      %v3775 = vadd.f32 %v3736, %v3760
      %v3776 = vadd.f32 %v3737, %v3760
      %v3777 = vadd.f32 %v3738, %v3760
      %v3778 = vadd.f32 %v3739, %v3760
      %v3779 = vadd.f32 %v3740, %v3760
      %v3780 = vadd.f32 %v3741, %v3760
      %v3781 = vadd.f32 %v3742, %v3760
      %v3782 = vadd.f32 %v3743, %v3760
      %v3783 = vadd.f32 %v3744, %v3760
      %v3784 = vadd.f32 %v3745, %v3760
      %v3785 = vadd.f32 %v3746, %v3760
      %v3786 = vadd.f32 %v3747, %v3760
      %v3787 = vadd.f32 %v3748, %v3760
      %v3788 = vadd.f32 %v3749, %v3760
      %v3789 = vadd.f32 %v3750, %v3760
      %v3790 = vadd.f32 %v3751, %v3760
      %v3791 = vadd.f32 %v3752, %v3760
      %v3792 = vadd.f32 %v3753, %v3760
      %v3793 = vadd.f32 %v3754, %v3760
      %v3794 = vmax.f32 %v3762, 0.0
      %v3795 = vmax.f32 %v3763, 0.0
      %v3796 = vmax.f32 %v3764, 0.0
      %v3797 = vmax.f32 %v3765, 0.0
      %v3798 = vmax.f32 %v3766, 0.0
      %v3799 = vmax.f32 %v3767, 0.0
      %v3800 = vmax.f32 %v3768, 0.0
      %v3801 = vmax.f32 %v3769, 0.0
      %v3802 = vmax.f32 %v3770, 0.0
      %v3803 = vmax.f32 %v3771, 0.0
      %v3804 = vmax.f32 %v3772, 0.0
      %v3805 = vmax.f32 %v3773, 0.0
      %v3806 = vmax.f32 %v3774, 0.0
      %v3807 = vmax.f32 %v3775, 0.0
      %v3808 = vmax.f32 %v3776, 0.0
      %v3809 = vmax.f32 %v3777, 0.0
      %v3810 = vmax.f32 %v3778, 0.0
      %v3811 = vmax.f32 %v3779, 0.0
      %v3812 = vmax.f32 %v3780, 0.0
      %v3813 = vmax.f32 %v3781, 0.0
      %v3814 = vmax.f32 %v3782, 0.0
      %v3815 = vmax.f32 %v3783, 0.0
      %v3816 = vmax.f32 %v3784, 0.0
      %v3817 = vmax.f32 %v3785, 0.0
      %v3818 = vmax.f32 %v3786, 0.0
      %v3819 = vmax.f32 %v3787, 0.0
      %v3820 = vmax.f32 %v3788, 0.0
      %v3821 = vmax.f32 %v3789, 0.0
      %v3822 = vmax.f32 %v3790, 0.0
      %v3823 = vmax.f32 %v3791, 0.0
      %v3824 = vmax.f32 %v3792, 0.0
      %v3825 = vmax.f32 %v3793, 0.0
      %v3826 = vld [vmem:[%s5] sm:$0xff]
      %v3827 = vld [vmem:[%s5 + $0x8] sm:$0xff]
      %v3828 = vld [vmem:[%s5 + $0x10] sm:$0xff]
      %v3829 = vld [vmem:[%s5 + $0x18] sm:$0xff]
      %v3830 = vld [vmem:[%s5 + $0x20] sm:$0xff]
      %v3831 = vld [vmem:[%s5 + $0x28] sm:$0xff]
      %v3832 = vld [vmem:[%s5 + $0x30] sm:$0xff]
      %v3833 = vld [vmem:[%s5 + $0x38] sm:$0xff]
      %v3834 = vld [vmem:[%s5 + $0x40] sm:$0xff]
      %v3835 = vld [vmem:[%s5 + $0x48] sm:$0xff]
      %v3836 = vld [vmem:[%s5 + $0x50] sm:$0xff]
      %v3837 = vld [vmem:[%s5 + $0x58] sm:$0xff]
      %v3838 = vld [vmem:[%s5 + $0x60] sm:$0xff]
      %v3839 = vld [vmem:[%s5 + $0x68] sm:$0xff]
      %v3840 = vld [vmem:[%s5 + $0x70] sm:$0xff]
      %v3841 = vld [vmem:[%s5 + $0x78] sm:$0xff]
      %3842 = vmatprep.subr.mxu0 0.0
      %3843 = vmatpush1.msra.mxu0 %v3809
      %3844 = vmatprep.subr.mxu0 0.0
      %3845 = vmatpush1.msra.mxu0 %v3808
      %3846 = vmatprep.subr.mxu0 0.0
      %3847 = vmatpush1.msra.mxu0 %v3807
      %3848 = vmatprep.subr.mxu0 0.0
      %3849 = vmatpush1.msra.mxu0 %v3806
      %3850 = vmatprep.subr.mxu0 0.0
      %3851 = vmatpush1.msra.mxu0 %v3805
      %3852 = vmatprep.subr.mxu0 0.0
      %3853 = vmatpush1.msra.mxu0 %v3804
      %3854 = vmatprep.subr.mxu0 0.0
      %3855 = vmatpush1.msra.mxu0 %v3803
      %3856 = vmatprep.subr.mxu0 0.0
      %3857 = vmatpush1.msra.mxu0 %v3802
      %3858 = vmatprep.subr.mxu0 0.0
      %3859 = vmatpush1.msra.mxu0 %v3801
      %3860 = vmatprep.subr.mxu0 0.0
      %3861 = vmatpush1.msra.mxu0 %v3800
      %3862 = vmatprep.subr.mxu0 0.0
      %3863 = vmatpush1.msra.mxu0 %v3799
      %3864 = vmatprep.subr.mxu0 0.0
      %3865 = vmatpush1.msra.mxu0 %v3798
      %3866 = vmatprep.subr.mxu0 0.0
      %3867 = vmatpush1.msra.mxu0 %v3797
      %3868 = vmatprep.subr.mxu0 0.0
      %3869 = vmatpush1.msra.mxu0 %v3796
      %3870 = vmatprep.subr.mxu0 0.0
      %3871 = vmatpush1.msra.mxu0 %v3795
      %3872 = vmatprep.subr.mxu0 0.0
      %3873 = vmatpush1.msra.mxu0 %v3794
      %3874 = vmatprep.subr.mxu0 0.0
      %3875 = vmatpush2.msra.mxu0 %v3825
      %3876 = vmatprep.subr.mxu0 0.0
      %3877 = vmatpush2.msra.mxu0 %v3824
      %3878 = vmatprep.subr.mxu0 0.0
      %3879 = vmatpush2.msra.mxu0 %v3823
      %3880 = vmatprep.subr.mxu0 0.0
      %3881 = vmatpush2.msra.mxu0 %v3822
      %3882 = vmatprep.subr.mxu0 0.0
      %3883 = vmatpush2.msra.mxu0 %v3821
      %3884 = vmatprep.subr.mxu0 0.0
      %3885 = vmatpush2.msra.mxu0 %v3820
      %3886 = vmatprep.subr.mxu0 0.0
      %3887 = vmatpush2.msra.mxu0 %v3819
      %3888 = vmatprep.subr.mxu0 0.0
      %3889 = vmatpush2.msra.mxu0 %v3818
      %3890 = vmatprep.subr.mxu0 0.0
      %3891 = vmatpush2.msra.mxu0 %v3817
      %3892 = vmatprep.subr.mxu0 0.0
      %3893 = vmatpush2.msra.mxu0 %v3816
      %3894 = vmatprep.subr.mxu0 0.0
      %3895 = vmatpush2.msra.mxu0 %v3815
      %3896 = vmatprep.subr.mxu0 0.0
      %3897 = vmatpush2.msra.mxu0 %v3814
      %3898 = vmatprep.subr.mxu0 0.0
      %3899 = vmatpush2.msra.mxu0 %v3813
      %3900 = vmatprep.subr.mxu0 0.0
      %3901 = vmatpush2.msra.mxu0 %v3812
      %3902 = vmatprep.subr.mxu0 0.0
      %3903 = vmatpush2.msra.mxu0 %v3811
      %3904 = vmatprep.subr.mxu0 0.0
      %3905 = vmatpush2.msra.mxu0 %v3810
      %3906 = vmatprep.mubr.f32.mxu0 %v3827
      %3907 = vmatmul.mubr.f32.gmra.mxu0 %v3826
      %v3908 = vpop.f32.mrf.mxu0
      %v3909 = vadd.f32 0.0, %v3908
      %v3910 = vpop.f32.mrf.mxu0
      %3911 = vmatprep.mubr.f32.mxu0 %v3829
      %3912 = vmatmul.mubr.f32.gmra.mxu0 %v3828
      %v3913 = vpop.f32.mrf.mxu0
      %v3914 = vadd.f32 0.0, %v3913
      %v3915 = vpop.f32.mrf.mxu0
      %3916 = vmatprep.mubr.f32.mxu0 %v3831
      %3917 = vmatmul.mubr.f32.gmra.mxu0 %v3830
      %v3918 = vpop.f32.mrf.mxu0
      %v3919 = vadd.f32 0.0, %v3918
      %v3920 = vpop.f32.mrf.mxu0
      %3921 = vmatprep.mubr.f32.mxu0 %v3833
      %3922 = vmatmul.mubr.f32.gmra.mxu0 %v3832
      %v3923 = vpop.f32.mrf.mxu0
      %v3924 = vadd.f32 0.0, %v3923
      %v3925 = vpop.f32.mrf.mxu0
      %3926 = vmatprep.mubr.f32.mxu0 %v3835
      %3927 = vmatmul.mubr.f32.gmra.mxu0 %v3834
      %v3928 = vpop.f32.mrf.mxu0
      %v3929 = vadd.f32 0.0, %v3928
      %v3930 = vpop.f32.mrf.mxu0
      %3931 = vmatprep.mubr.f32.mxu0 %v3837
      %3932 = vmatmul.mubr.f32.gmra.mxu0 %v3836
      %v3933 = vpop.f32.mrf.mxu0
      %v3934 = vadd.f32 0.0, %v3933
      %v3935 = vpop.f32.mrf.mxu0
      %3936 = vmatprep.mubr.f32.mxu0 %v3839
      %3937 = vmatmul.mubr.f32.gmra.mxu0 %v3838
      %v3938 = vpop.f32.mrf.mxu0
      %v3939 = vadd.f32 0.0, %v3938
      %v3940 = vpop.f32.mrf.mxu0
      %3941 = vmatprep.mubr.f32.mxu0 %v3841
      %3942 = vmatmul.mubr.f32.gmra.mxu0 %v3840
      %v3943 = vpop.f32.mrf.mxu0
      %v3944 = vadd.f32 0.0, %v3943
      %v3945 = vpop.f32.mrf.mxu0
      %3946 = vdwg.mxu0
      %vm3947 = vcmask 64512
      %3948 = vst.msk [vmem:[#allocation2] sm:$0xff] %vm3947, 0.0
      %vm3949 = vcmask 58368
      %3950 = vst.msk [vmem:[#allocation2 + $0x8] sm:$0x3] %vm3949, 0.0
      %3951 = vst.msk [vmem:[#allocation2 + $0x10] sm:$0xff] %vm3947, 0.0
      %3952 = vst.msk [vmem:[#allocation2 + $0x18] sm:$0x3] %vm3949, 0.0
      %3953 = vst.msk [vmem:[#allocation2 + $0x20] sm:$0xff] %vm3947, 0.0
      %3954 = vst.msk [vmem:[#allocation2 + $0x28] sm:$0x3] %vm3949, 0.0
      %3955 = vst.msk [vmem:[#allocation2 + $0x30] sm:$0xff] %vm3947, 0.0
      %3956 = vst.msk [vmem:[#allocation2 + $0x38] sm:$0x3] %vm3949, 0.0
      %3957 = vst.msk [vmem:[#allocation2 + $0x40] sm:$0xff] %vm3947, 0.0
      %3958 = vst.msk [vmem:[#allocation2 + $0x48] sm:$0x3] %vm3949, 0.0
      %3959 = vst.msk [vmem:[#allocation2 + $0x50] sm:$0xff] %vm3947, 0.0
      %3960 = vst.msk [vmem:[#allocation2 + $0x58] sm:$0x3] %vm3949, 0.0
      %3961 = vst.msk [vmem:[#allocation2 + $0x60] sm:$0xff] %vm3947, 0.0
      %3962 = vst.msk [vmem:[#allocation2 + $0x68] sm:$0x3] %vm3949, 0.0
      %3963 = vst.msk [vmem:[#allocation2 + $0x70] sm:$0xff] %vm3947, 0.0
      %3964 = vst.msk [vmem:[#allocation2 + $0x78] sm:$0x3] %vm3949, 0.0
      %3965 = vst.msk [vmem:[#allocation2 + $0x80] sm:$0xff] %vm3947, 0.0
      %3966 = vst.msk [vmem:[#allocation2 + $0x88] sm:$0x3] %vm3949, 0.0
      %3967 = vst.msk [vmem:[#allocation2 + $0x90] sm:$0xff] %vm3947, 0.0
      %3968 = vst.msk [vmem:[#allocation2 + $0x98] sm:$0x3] %vm3949, 0.0
      %s3969 = scalar_lea.vmem [#allocation2], 16
      %3970 = vst.msk [vmem:[%s3969 + $0x1] sm:$0xff] %vm3947, %v3909
      %3971 = vst.msk [vmem:[%s3969 + $0x11] sm:$0xff] %vm3947, %v3914
      %3972 = vst.msk [vmem:[%s3969 + $0x21] sm:$0xff] %vm3947, %v3919
      %3973 = vst.msk [vmem:[%s3969 + $0x31] sm:$0xff] %vm3947, %v3924
      %3974 = vst.msk [vmem:[%s3969 + $0x41] sm:$0xff] %vm3947, %v3929
      %3975 = vst.msk [vmem:[%s3969 + $0x51] sm:$0xff] %vm3947, %v3934
      %3976 = vst.msk [vmem:[%s3969 + $0x61] sm:$0xff] %vm3947, %v3939
      %3977 = vst.msk [vmem:[%s3969 + $0x71] sm:$0xff] %vm3947, %v3944
      %v3978 = vld [vmem:[#allocation2] sm:$0xff]
      %v3979 = vld [vmem:[#allocation2 + $0x10] sm:$0xff]
      %v3980 = vld [vmem:[#allocation2 + $0x20] sm:$0xff]
      %v3981 = vld [vmem:[#allocation2 + $0x30] sm:$0xff]
      %v3982 = vld [vmem:[#allocation2 + $0x40] sm:$0xff]
      %v3983 = vld [vmem:[#allocation2 + $0x50] sm:$0xff]
      %v3984 = vld [vmem:[#allocation2 + $0x60] sm:$0xff]
      %v3985 = vld [vmem:[#allocation2 + $0x70] sm:$0xff]
      %v3986 = vld [vmem:[%s3] sm:$0xff]
      %v3987 = vld [vmem:[#allocation2 + $0x1] sm:$0xff]
      %v3988 = vld [vmem:[#allocation2 + $0x11] sm:$0xff]
      %v3989 = vld [vmem:[#allocation2 + $0x21] sm:$0xff]
      %v3990 = vld [vmem:[#allocation2 + $0x31] sm:$0xff]
      %v3991 = vld [vmem:[#allocation2 + $0x41] sm:$0xff]
      %v3992 = vld [vmem:[#allocation2 + $0x51] sm:$0xff]
      %v3993 = vld [vmem:[#allocation2 + $0x61] sm:$0xff]
      %v3994 = vld [vmem:[#allocation2 + $0x71] sm:$0xff]
      %s3995 = scalar_lea.vmem %s3, 8
      %v3996 = vld [vmem:[%s3995] sm:$0xff]
      %v3998 = vsel %vm3947, %v3987, 0
      %v4001 = vsel %vm3947, %v3988, 0
      %v4004 = vsel %vm3947, %v3989, 0
      %v4007 = vsel %vm3947, %v3990, 0
      %v4010 = vsel %vm3947, %v3991, 0
      %v4013 = vsel %vm3947, %v3992, 0
      %v4016 = vsel %vm3947, %v3993, 0
      %v4019 = vsel %vm3947, %v3994, 0
      %4021 = vmatprep.subr.mxu0 0.0
      %4022 = vmatpush1.msra.mxu0 0.0
      %4023 = vmatprep.subr.mxu0 0.0
      %4024 = vmatpush1.msra.mxu0 0.0
      %4025 = vmatprep.subr.mxu0 0.0
      %4026 = vmatpush1.msra.mxu0 0.0
      %4027 = vmatprep.subr.mxu0 0.0
      %4028 = vmatpush1.msra.mxu0 0.0
      %4029 = vmatprep.subr.mxu0 0.0
      %4030 = vmatpush1.msra.mxu0 0.0
      %4031 = vmatprep.subr.mxu0 0.0
      %4032 = vmatpush1.msra.mxu0 0.0
      %4033 = vmatprep.subr.mxu0 0.0
      %4034 = vmatpush1.msra.mxu0 0.0
      %4035 = vmatprep.subr.mxu0 0.0
      %4036 = vmatpush1.msra.mxu0 0.0
      %4037 = vmatprep.subr.mxu0 0.0
      %4038 = vmatpush1.msra.mxu0 0.0
      %4039 = vmatprep.subr.mxu0 0.0
      %4040 = vmatpush1.msra.mxu0 0.0
      %4041 = vmatprep.subr.mxu0 0.0
      %4042 = vmatpush1.msra.mxu0 0.0
      %4043 = vmatprep.subr.mxu0 0.0
      %4044 = vmatpush1.msra.mxu0 0.0
      %4045 = vmatprep.subr.mxu0 0.0
      %4046 = vmatpush1.msra.mxu0 0.0
      %4047 = vmatprep.subr.mxu0 0.0
      %4048 = vmatpush1.msra.mxu0 0.0
      %4049 = vmatprep.subr.mxu0 0.0
      %4050 = vmatpush1.msra.mxu0 0.0
      %4051 = vmatprep.subr.mxu0 0.0
      %4052 = vmatpush1.msra.mxu0 %v3996
      %4053 = vmatprep.subr.mxu0 0.0
      %4054 = vmatpush2.msra.mxu0 0.0
      %4055 = vmatprep.subr.mxu0 0.0
      %4056 = vmatpush2.msra.mxu0 0.0
      %4057 = vmatprep.subr.mxu0 0.0
      %4058 = vmatpush2.msra.mxu0 0.0
      %4059 = vmatprep.subr.mxu0 0.0
      %4060 = vmatpush2.msra.mxu0 0.0
      %4061 = vmatprep.subr.mxu0 0.0
      %4062 = vmatpush2.msra.mxu0 0.0
      %4063 = vmatprep.subr.mxu0 0.0
      %4064 = vmatpush2.msra.mxu0 0.0
      %4065 = vmatprep.subr.mxu0 0.0
      %4066 = vmatpush2.msra.mxu0 0.0
      %4067 = vmatprep.subr.mxu0 0.0
      %4068 = vmatpush2.msra.mxu0 0.0
      %4069 = vmatprep.subr.mxu0 0.0
      %4070 = vmatpush2.msra.mxu0 0.0
      %4071 = vmatprep.subr.mxu0 0.0
      %4072 = vmatpush2.msra.mxu0 0.0
      %4073 = vmatprep.subr.mxu0 0.0
      %4074 = vmatpush2.msra.mxu0 0.0
      %4075 = vmatprep.subr.mxu0 0.0
      %4076 = vmatpush2.msra.mxu0 0.0
      %4077 = vmatprep.subr.mxu0 0.0
      %4078 = vmatpush2.msra.mxu0 0.0
      %4079 = vmatprep.subr.mxu0 0.0
      %4080 = vmatpush2.msra.mxu0 0.0
      %4081 = vmatprep.subr.mxu0 0.0
      %4082 = vmatpush2.msra.mxu0 0.0
      %4083 = vmatprep.subr.mxu0 0.0
      %4084 = vmatpush2.msra.mxu0 0.0
      %4085 = vmatprep.mubr.f32.mxu0 0.0
      %4086 = vmatmul.mubr.f32.gmra.mxu0 %v3998
      %v4087 = vpop.f32.mrf.mxu0
      %v4088 = vadd.f32 0.0, %v4087
      %v4089 = vpop.f32.mrf.mxu0
      %4090 = vmatprep.mubr.f32.mxu0 0.0
      %4091 = vmatmul.mubr.f32.gmra.mxu0 %v4001
      %v4092 = vpop.f32.mrf.mxu0
      %v4093 = vadd.f32 0.0, %v4092
      %v4094 = vpop.f32.mrf.mxu0
      %4095 = vmatprep.mubr.f32.mxu0 0.0
      %4096 = vmatmul.mubr.f32.gmra.mxu0 %v4004
      %v4097 = vpop.f32.mrf.mxu0
      %v4098 = vadd.f32 0.0, %v4097
      %v4099 = vpop.f32.mrf.mxu0
      %4100 = vmatprep.mubr.f32.mxu0 0.0
      %4101 = vmatmul.mubr.f32.gmra.mxu0 %v4007
      %v4102 = vpop.f32.mrf.mxu0
      %v4103 = vadd.f32 0.0, %v4102
      %v4104 = vpop.f32.mrf.mxu0
      %4105 = vmatprep.mubr.f32.mxu0 0.0
      %4106 = vmatmul.mubr.f32.gmra.mxu0 %v4010
      %v4107 = vpop.f32.mrf.mxu0
      %v4108 = vadd.f32 0.0, %v4107
      %v4109 = vpop.f32.mrf.mxu0
      %4110 = vmatprep.mubr.f32.mxu0 0.0
      %4111 = vmatmul.mubr.f32.gmra.mxu0 %v4013
      %v4112 = vpop.f32.mrf.mxu0
      %v4113 = vadd.f32 0.0, %v4112
      %v4114 = vpop.f32.mrf.mxu0
      %4115 = vmatprep.mubr.f32.mxu0 0.0
      %4116 = vmatmul.mubr.f32.gmra.mxu0 %v4016
      %v4117 = vpop.f32.mrf.mxu0
      %v4118 = vadd.f32 0.0, %v4117
      %v4119 = vpop.f32.mrf.mxu0
      %4120 = vmatprep.mubr.f32.mxu0 0.0
      %4121 = vmatmul.mubr.f32.gmra.mxu0 %v4019
      %v4122 = vpop.f32.mrf.mxu0
      %v4123 = vadd.f32 0.0, %v4122
      %v4124 = vpop.f32.mrf.mxu0
      %4125 = vdwg.mxu0
      %v4127 = vsel %vm3947, %v3978, 0
      %v4130 = vsel %vm3947, %v3979, 0
      %v4133 = vsel %vm3947, %v3980, 0
      %v4136 = vsel %vm3947, %v3981, 0
      %v4139 = vsel %vm3947, %v3982, 0
      %v4142 = vsel %vm3947, %v3983, 0
      %v4145 = vsel %vm3947, %v3984, 0
      %v4148 = vsel %vm3947, %v3985, 0
      %4150 = vmatprep.subr.mxu0 0.0
      %4151 = vmatpush1.msra.mxu0 0.0
      %4152 = vmatprep.subr.mxu0 0.0
      %4153 = vmatpush1.msra.mxu0 0.0
      %4154 = vmatprep.subr.mxu0 0.0
      %4155 = vmatpush1.msra.mxu0 0.0
      %4156 = vmatprep.subr.mxu0 0.0
      %4157 = vmatpush1.msra.mxu0 0.0
      %4158 = vmatprep.subr.mxu0 0.0
      %4159 = vmatpush1.msra.mxu0 0.0
      %4160 = vmatprep.subr.mxu0 0.0
      %4161 = vmatpush1.msra.mxu0 0.0
      %4162 = vmatprep.subr.mxu0 0.0
      %4163 = vmatpush1.msra.mxu0 0.0
      %4164 = vmatprep.subr.mxu0 0.0
      %4165 = vmatpush1.msra.mxu0 0.0
      %4166 = vmatprep.subr.mxu0 0.0
      %4167 = vmatpush1.msra.mxu0 0.0
      %4168 = vmatprep.subr.mxu0 0.0
      %4169 = vmatpush1.msra.mxu0 0.0
      %4170 = vmatprep.subr.mxu0 0.0
      %4171 = vmatpush1.msra.mxu0 0.0
      %4172 = vmatprep.subr.mxu0 0.0
      %4173 = vmatpush1.msra.mxu0 0.0
      %4174 = vmatprep.subr.mxu0 0.0
      %4175 = vmatpush1.msra.mxu0 0.0
      %4176 = vmatprep.subr.mxu0 0.0
      %4177 = vmatpush1.msra.mxu0 0.0
      %4178 = vmatprep.subr.mxu0 0.0
      %4179 = vmatpush1.msra.mxu0 0.0
      %4180 = vmatprep.subr.mxu0 0.0
      %4181 = vmatpush1.msra.mxu0 %v3986
      %4182 = vmatprep.subr.mxu0 0.0
      %4183 = vmatpush2.msra.mxu0 0.0
      %4184 = vmatprep.subr.mxu0 0.0
      %4185 = vmatpush2.msra.mxu0 0.0
      %4186 = vmatprep.subr.mxu0 0.0
      %4187 = vmatpush2.msra.mxu0 0.0
      %4188 = vmatprep.subr.mxu0 0.0
      %4189 = vmatpush2.msra.mxu0 0.0
      %4190 = vmatprep.subr.mxu0 0.0
      %4191 = vmatpush2.msra.mxu0 0.0
      %4192 = vmatprep.subr.mxu0 0.0
      %4193 = vmatpush2.msra.mxu0 0.0
      %4194 = vmatprep.subr.mxu0 0.0
      %4195 = vmatpush2.msra.mxu0 0.0
      %4196 = vmatprep.subr.mxu0 0.0
      %4197 = vmatpush2.msra.mxu0 0.0
      %4198 = vmatprep.subr.mxu0 0.0
      %4199 = vmatpush2.msra.mxu0 0.0
      %4200 = vmatprep.subr.mxu0 0.0
      %4201 = vmatpush2.msra.mxu0 0.0
      %4202 = vmatprep.subr.mxu0 0.0
      %4203 = vmatpush2.msra.mxu0 0.0
      %4204 = vmatprep.subr.mxu0 0.0
      %4205 = vmatpush2.msra.mxu0 0.0
      %4206 = vmatprep.subr.mxu0 0.0
      %4207 = vmatpush2.msra.mxu0 0.0
      %4208 = vmatprep.subr.mxu0 0.0
      %4209 = vmatpush2.msra.mxu0 0.0
      %4210 = vmatprep.subr.mxu0 0.0
      %4211 = vmatpush2.msra.mxu0 0.0
      %4212 = vmatprep.subr.mxu0 0.0
      %4213 = vmatpush2.msra.mxu0 0.0
      %4214 = vmatprep.mubr.f32.mxu0 0.0
      %4215 = vmatmul.mubr.f32.gmra.mxu0 %v4127
      %v4216 = vpop.f32.mrf.mxu0
      %v4217 = vadd.f32 %v4088, %v4216
      %v4218 = vpop.f32.mrf.mxu0
      %4219 = vmatprep.mubr.f32.mxu0 0.0
      %4220 = vmatmul.mubr.f32.gmra.mxu0 %v4130
      %v4221 = vpop.f32.mrf.mxu0
      %v4222 = vadd.f32 %v4093, %v4221
      %v4223 = vpop.f32.mrf.mxu0
      %4224 = vmatprep.mubr.f32.mxu0 0.0
      %4225 = vmatmul.mubr.f32.gmra.mxu0 %v4133
      %v4226 = vpop.f32.mrf.mxu0
      %v4227 = vadd.f32 %v4098, %v4226
      %v4228 = vpop.f32.mrf.mxu0
      %4229 = vmatprep.mubr.f32.mxu0 0.0
      %4230 = vmatmul.mubr.f32.gmra.mxu0 %v4136
      %v4231 = vpop.f32.mrf.mxu0
      %v4232 = vadd.f32 %v4103, %v4231
      %v4233 = vpop.f32.mrf.mxu0
      %4234 = vmatprep.mubr.f32.mxu0 0.0
      %4235 = vmatmul.mubr.f32.gmra.mxu0 %v4139
      %v4236 = vpop.f32.mrf.mxu0
      %v4237 = vadd.f32 %v4108, %v4236
      %v4238 = vpop.f32.mrf.mxu0
      %4239 = vmatprep.mubr.f32.mxu0 0.0
      %4240 = vmatmul.mubr.f32.gmra.mxu0 %v4142
      %v4241 = vpop.f32.mrf.mxu0
      %v4242 = vadd.f32 %v4113, %v4241
      %v4243 = vpop.f32.mrf.mxu0
      %4244 = vmatprep.mubr.f32.mxu0 0.0
      %4245 = vmatmul.mubr.f32.gmra.mxu0 %v4145
      %v4246 = vpop.f32.mrf.mxu0
      %v4247 = vadd.f32 %v4118, %v4246
      %v4248 = vpop.f32.mrf.mxu0
      %4249 = vmatprep.mubr.f32.mxu0 0.0
      %4250 = vmatmul.mubr.f32.gmra.mxu0 %v4148
      %v4251 = vpop.f32.mrf.mxu0
      %v4252 = vadd.f32 %v4123, %v4251
      %v4253 = vpop.f32.mrf.mxu0
      %4254 = vdwg.mxu0
      %v4255 = vld [vmem:[#allocation2 + $0x2] sm:$0xff]
      %v4256 = vld [vmem:[#allocation2 + $0x12] sm:$0xff]
      %v4257 = vld [vmem:[#allocation2 + $0x22] sm:$0xff]
      %v4258 = vld [vmem:[#allocation2 + $0x32] sm:$0xff]
      %v4259 = vld [vmem:[#allocation2 + $0x42] sm:$0xff]
      %v4260 = vld [vmem:[#allocation2 + $0x52] sm:$0xff]
      %v4261 = vld [vmem:[#allocation2 + $0x62] sm:$0xff]
      %v4262 = vld [vmem:[#allocation2 + $0x72] sm:$0xff]
      %s4263 = scalar_lea.vmem %s3, 16
      %v4264 = vld [vmem:[%s4263] sm:$0xff]
      %v4266 = vsel %vm3947, %v4255, 0
      %v4269 = vsel %vm3947, %v4256, 0
      %v4272 = vsel %vm3947, %v4257, 0
      %v4275 = vsel %vm3947, %v4258, 0
      %v4278 = vsel %vm3947, %v4259, 0
      %v4281 = vsel %vm3947, %v4260, 0
      %v4284 = vsel %vm3947, %v4261, 0
      %v4287 = vsel %vm3947, %v4262, 0
      %4289 = vmatprep.subr.mxu0 0.0
      %4290 = vmatpush1.msra.mxu0 0.0
      %4291 = vmatprep.subr.mxu0 0.0
      %4292 = vmatpush1.msra.mxu0 0.0
      %4293 = vmatprep.subr.mxu0 0.0
      %4294 = vmatpush1.msra.mxu0 0.0
      %4295 = vmatprep.subr.mxu0 0.0
      %4296 = vmatpush1.msra.mxu0 0.0
      %4297 = vmatprep.subr.mxu0 0.0
      %4298 = vmatpush1.msra.mxu0 0.0
      %4299 = vmatprep.subr.mxu0 0.0
      %4300 = vmatpush1.msra.mxu0 0.0
      %4301 = vmatprep.subr.mxu0 0.0
      %4302 = vmatpush1.msra.mxu0 0.0
      %4303 = vmatprep.subr.mxu0 0.0
      %4304 = vmatpush1.msra.mxu0 0.0
      %4305 = vmatprep.subr.mxu0 0.0
      %4306 = vmatpush1.msra.mxu0 0.0
      %4307 = vmatprep.subr.mxu0 0.0
      %4308 = vmatpush1.msra.mxu0 0.0
      %4309 = vmatprep.subr.mxu0 0.0
      %4310 = vmatpush1.msra.mxu0 0.0
      %4311 = vmatprep.subr.mxu0 0.0
      %4312 = vmatpush1.msra.mxu0 0.0
      %4313 = vmatprep.subr.mxu0 0.0
      %4314 = vmatpush1.msra.mxu0 0.0
      %4315 = vmatprep.subr.mxu0 0.0
      %4316 = vmatpush1.msra.mxu0 0.0
      %4317 = vmatprep.subr.mxu0 0.0
      %4318 = vmatpush1.msra.mxu0 0.0
      %4319 = vmatprep.subr.mxu0 0.0
      %4320 = vmatpush1.msra.mxu0 %v4264
      %4321 = vmatprep.subr.mxu0 0.0
      %4322 = vmatpush2.msra.mxu0 0.0
      %4323 = vmatprep.subr.mxu0 0.0
      %4324 = vmatpush2.msra.mxu0 0.0
      %4325 = vmatprep.subr.mxu0 0.0
      %4326 = vmatpush2.msra.mxu0 0.0
      %4327 = vmatprep.subr.mxu0 0.0
      %4328 = vmatpush2.msra.mxu0 0.0
      %4329 = vmatprep.subr.mxu0 0.0
      %4330 = vmatpush2.msra.mxu0 0.0
      %4331 = vmatprep.subr.mxu0 0.0
      %4332 = vmatpush2.msra.mxu0 0.0
      %4333 = vmatprep.subr.mxu0 0.0
      %4334 = vmatpush2.msra.mxu0 0.0
      %4335 = vmatprep.subr.mxu0 0.0
      %4336 = vmatpush2.msra.mxu0 0.0
      %4337 = vmatprep.subr.mxu0 0.0
      %4338 = vmatpush2.msra.mxu0 0.0
      %4339 = vmatprep.subr.mxu0 0.0
      %4340 = vmatpush2.msra.mxu0 0.0
      %4341 = vmatprep.subr.mxu0 0.0
      %4342 = vmatpush2.msra.mxu0 0.0
      %4343 = vmatprep.subr.mxu0 0.0
      %4344 = vmatpush2.msra.mxu0 0.0
      %4345 = vmatprep.subr.mxu0 0.0
      %4346 = vmatpush2.msra.mxu0 0.0
      %4347 = vmatprep.subr.mxu0 0.0
      %4348 = vmatpush2.msra.mxu0 0.0
      %4349 = vmatprep.subr.mxu0 0.0
      %4350 = vmatpush2.msra.mxu0 0.0
      %4351 = vmatprep.subr.mxu0 0.0
      %4352 = vmatpush2.msra.mxu0 0.0
      %4353 = vmatprep.mubr.f32.mxu0 0.0
      %4354 = vmatmul.mubr.f32.gmra.mxu0 %v4266
      %v4355 = vpop.f32.mrf.mxu0
      %v4356 = vadd.f32 0.0, %v4355
      %v4357 = vpop.f32.mrf.mxu0
      %4358 = vmatprep.mubr.f32.mxu0 0.0
      %4359 = vmatmul.mubr.f32.gmra.mxu0 %v4269
      %v4360 = vpop.f32.mrf.mxu0
      %v4361 = vadd.f32 0.0, %v4360
      %v4362 = vpop.f32.mrf.mxu0
      %4363 = vmatprep.mubr.f32.mxu0 0.0
      %4364 = vmatmul.mubr.f32.gmra.mxu0 %v4272
      %v4365 = vpop.f32.mrf.mxu0
      %v4366 = vadd.f32 0.0, %v4365
      %v4367 = vpop.f32.mrf.mxu0
      %4368 = vmatprep.mubr.f32.mxu0 0.0
      %4369 = vmatmul.mubr.f32.gmra.mxu0 %v4275
      %v4370 = vpop.f32.mrf.mxu0
      %v4371 = vadd.f32 0.0, %v4370
      %v4372 = vpop.f32.mrf.mxu0
      %4373 = vmatprep.mubr.f32.mxu0 0.0
      %4374 = vmatmul.mubr.f32.gmra.mxu0 %v4278
      %v4375 = vpop.f32.mrf.mxu0
      %v4376 = vadd.f32 0.0, %v4375
      %v4377 = vpop.f32.mrf.mxu0
      %4378 = vmatprep.mubr.f32.mxu0 0.0
      %4379 = vmatmul.mubr.f32.gmra.mxu0 %v4281
      %v4380 = vpop.f32.mrf.mxu0
      %v4381 = vadd.f32 0.0, %v4380
      %v4382 = vpop.f32.mrf.mxu0
      %4383 = vmatprep.mubr.f32.mxu0 0.0
      %4384 = vmatmul.mubr.f32.gmra.mxu0 %v4284
      %v4385 = vpop.f32.mrf.mxu0
      %v4386 = vadd.f32 0.0, %v4385
      %v4387 = vpop.f32.mrf.mxu0
      %4388 = vmatprep.mubr.f32.mxu0 0.0
      %4389 = vmatmul.mubr.f32.gmra.mxu0 %v4287
      %v4390 = vpop.f32.mrf.mxu0
      %v4391 = vadd.f32 0.0, %v4390
      %v4392 = vpop.f32.mrf.mxu0
      %4393 = vdwg.mxu0
      %v4394 = vadd.f32 %v4217, %v4356
      %v4395 = vadd.f32 %v4222, %v4361
      %v4396 = vadd.f32 %v4227, %v4366
      %v4397 = vadd.f32 %v4232, %v4371
      %v4398 = vadd.f32 %v4237, %v4376
      %v4399 = vadd.f32 %v4242, %v4381
      %v4400 = vadd.f32 %v4247, %v4386
      %v4401 = vadd.f32 %v4252, %v4391
      %v4402 = vld [vmem:[%s3969] sm:$0xff]
      %v4403 = vld [vmem:[%s3969 + $0x10] sm:$0xff]
      %v4404 = vld [vmem:[%s3969 + $0x20] sm:$0xff]
      %v4405 = vld [vmem:[%s3969 + $0x30] sm:$0xff]
      %v4406 = vld [vmem:[%s3969 + $0x40] sm:$0xff]
      %v4407 = vld [vmem:[%s3969 + $0x50] sm:$0xff]
      %v4408 = vld [vmem:[%s3969 + $0x60] sm:$0xff]
      %v4409 = vld [vmem:[%s3969 + $0x70] sm:$0xff]
      %s4410 = scalar_lea.vmem %s3, 24
      %v4411 = vld [vmem:[%s4410] sm:$0xff]
      %v4413 = vsel %vm3947, %v4402, 0
      %v4416 = vsel %vm3947, %v4403, 0
      %v4419 = vsel %vm3947, %v4404, 0
      %v4422 = vsel %vm3947, %v4405, 0
      %v4425 = vsel %vm3947, %v4406, 0
      %v4428 = vsel %vm3947, %v4407, 0
      %v4431 = vsel %vm3947, %v4408, 0
      %v4434 = vsel %vm3947, %v4409, 0
      %4436 = vmatprep.subr.mxu0 0.0
      %4437 = vmatpush1.msra.mxu0 0.0
      %4438 = vmatprep.subr.mxu0 0.0
      %4439 = vmatpush1.msra.mxu0 0.0
      %4440 = vmatprep.subr.mxu0 0.0
      %4441 = vmatpush1.msra.mxu0 0.0
      %4442 = vmatprep.subr.mxu0 0.0
      %4443 = vmatpush1.msra.mxu0 0.0
      %4444 = vmatprep.subr.mxu0 0.0
      %4445 = vmatpush1.msra.mxu0 0.0
      %4446 = vmatprep.subr.mxu0 0.0
      %4447 = vmatpush1.msra.mxu0 0.0
      %4448 = vmatprep.subr.mxu0 0.0
      %4449 = vmatpush1.msra.mxu0 0.0
      %4450 = vmatprep.subr.mxu0 0.0
      %4451 = vmatpush1.msra.mxu0 0.0
      %4452 = vmatprep.subr.mxu0 0.0
      %4453 = vmatpush1.msra.mxu0 0.0
      %4454 = vmatprep.subr.mxu0 0.0
      %4455 = vmatpush1.msra.mxu0 0.0
      %4456 = vmatprep.subr.mxu0 0.0
      %4457 = vmatpush1.msra.mxu0 0.0
      %4458 = vmatprep.subr.mxu0 0.0
      %4459 = vmatpush1.msra.mxu0 0.0
      %4460 = vmatprep.subr.mxu0 0.0
      %4461 = vmatpush1.msra.mxu0 0.0
      %4462 = vmatprep.subr.mxu0 0.0
      %4463 = vmatpush1.msra.mxu0 0.0
      %4464 = vmatprep.subr.mxu0 0.0
      %4465 = vmatpush1.msra.mxu0 0.0
      %4466 = vmatprep.subr.mxu0 0.0
      %4467 = vmatpush1.msra.mxu0 %v4411
      %4468 = vmatprep.subr.mxu0 0.0
      %4469 = vmatpush2.msra.mxu0 0.0
      %4470 = vmatprep.subr.mxu0 0.0
      %4471 = vmatpush2.msra.mxu0 0.0
      %4472 = vmatprep.subr.mxu0 0.0
      %4473 = vmatpush2.msra.mxu0 0.0
      %4474 = vmatprep.subr.mxu0 0.0
      %4475 = vmatpush2.msra.mxu0 0.0
      %4476 = vmatprep.subr.mxu0 0.0
      %4477 = vmatpush2.msra.mxu0 0.0
      %4478 = vmatprep.subr.mxu0 0.0
      %4479 = vmatpush2.msra.mxu0 0.0
      %4480 = vmatprep.subr.mxu0 0.0
      %4481 = vmatpush2.msra.mxu0 0.0
      %4482 = vmatprep.subr.mxu0 0.0
      %4483 = vmatpush2.msra.mxu0 0.0
      %4484 = vmatprep.subr.mxu0 0.0
      %4485 = vmatpush2.msra.mxu0 0.0
      %4486 = vmatprep.subr.mxu0 0.0
      %4487 = vmatpush2.msra.mxu0 0.0
      %4488 = vmatprep.subr.mxu0 0.0
      %4489 = vmatpush2.msra.mxu0 0.0
      %4490 = vmatprep.subr.mxu0 0.0
      %4491 = vmatpush2.msra.mxu0 0.0
      %4492 = vmatprep.subr.mxu0 0.0
      %4493 = vmatpush2.msra.mxu0 0.0
      %4494 = vmatprep.subr.mxu0 0.0
      %4495 = vmatpush2.msra.mxu0 0.0
      %4496 = vmatprep.subr.mxu0 0.0
      %4497 = vmatpush2.msra.mxu0 0.0
      %4498 = vmatprep.subr.mxu0 0.0
      %4499 = vmatpush2.msra.mxu0 0.0
      %4500 = vmatprep.mubr.f32.mxu0 0.0
      %4501 = vmatmul.mubr.f32.gmra.mxu0 %v4413
      %v4502 = vpop.f32.mrf.mxu0
      %v4503 = vadd.f32 0.0, %v4502
      %v4504 = vpop.f32.mrf.mxu0
      %4505 = vmatprep.mubr.f32.mxu0 0.0
      %4506 = vmatmul.mubr.f32.gmra.mxu0 %v4416
      %v4507 = vpop.f32.mrf.mxu0
      %v4508 = vadd.f32 0.0, %v4507
      %v4509 = vpop.f32.mrf.mxu0
      %4510 = vmatprep.mubr.f32.mxu0 0.0
      %4511 = vmatmul.mubr.f32.gmra.mxu0 %v4419
      %v4512 = vpop.f32.mrf.mxu0
      %v4513 = vadd.f32 0.0, %v4512
      %v4514 = vpop.f32.mrf.mxu0
      %4515 = vmatprep.mubr.f32.mxu0 0.0
      %4516 = vmatmul.mubr.f32.gmra.mxu0 %v4422
      %v4517 = vpop.f32.mrf.mxu0
      %v4518 = vadd.f32 0.0, %v4517
      %v4519 = vpop.f32.mrf.mxu0
      %4520 = vmatprep.mubr.f32.mxu0 0.0
      %4521 = vmatmul.mubr.f32.gmra.mxu0 %v4425
      %v4522 = vpop.f32.mrf.mxu0
      %v4523 = vadd.f32 0.0, %v4522
      %v4524 = vpop.f32.mrf.mxu0
      %4525 = vmatprep.mubr.f32.mxu0 0.0
      %4526 = vmatmul.mubr.f32.gmra.mxu0 %v4428
      %v4527 = vpop.f32.mrf.mxu0
      %v4528 = vadd.f32 0.0, %v4527
      %v4529 = vpop.f32.mrf.mxu0
      %4530 = vmatprep.mubr.f32.mxu0 0.0
      %4531 = vmatmul.mubr.f32.gmra.mxu0 %v4431
      %v4532 = vpop.f32.mrf.mxu0
      %v4533 = vadd.f32 0.0, %v4532
      %v4534 = vpop.f32.mrf.mxu0
      %4535 = vmatprep.mubr.f32.mxu0 0.0
      %4536 = vmatmul.mubr.f32.gmra.mxu0 %v4434
      %v4537 = vpop.f32.mrf.mxu0
      %v4538 = vadd.f32 0.0, %v4537
      %v4539 = vpop.f32.mrf.mxu0
      %4540 = vdwg.mxu0
      %v4541 = vadd.f32 %v4394, %v4503
      %v4542 = vadd.f32 %v4395, %v4508
      %v4543 = vadd.f32 %v4396, %v4513
      %v4544 = vadd.f32 %v4397, %v4518
      %v4545 = vadd.f32 %v4398, %v4523
      %v4546 = vadd.f32 %v4399, %v4528
      %v4547 = vadd.f32 %v4400, %v4533
      %v4548 = vadd.f32 %v4401, %v4538
      %v4549 = vld [vmem:[%s3969 + $0x1] sm:$0xff]
      %v4550 = vld [vmem:[%s3969 + $0x11] sm:$0xff]
      %v4551 = vld [vmem:[%s3969 + $0x21] sm:$0xff]
      %v4552 = vld [vmem:[%s3969 + $0x31] sm:$0xff]
      %v4553 = vld [vmem:[%s3969 + $0x41] sm:$0xff]
      %v4554 = vld [vmem:[%s3969 + $0x51] sm:$0xff]
      %v4555 = vld [vmem:[%s3969 + $0x61] sm:$0xff]
      %v4556 = vld [vmem:[%s3969 + $0x71] sm:$0xff]
      %s4557 = scalar_lea.vmem %s3, 32
      %v4558 = vld [vmem:[%s4557] sm:$0xff]
      %v4560 = vsel %vm3947, %v4549, 0
      %v4563 = vsel %vm3947, %v4550, 0
      %v4566 = vsel %vm3947, %v4551, 0
      %v4569 = vsel %vm3947, %v4552, 0
      %v4572 = vsel %vm3947, %v4553, 0
      %v4575 = vsel %vm3947, %v4554, 0
      %v4578 = vsel %vm3947, %v4555, 0
      %v4581 = vsel %vm3947, %v4556, 0
      %4583 = vmatprep.subr.mxu0 0.0
      %4584 = vmatpush1.msra.mxu0 0.0
      %4585 = vmatprep.subr.mxu0 0.0
      %4586 = vmatpush1.msra.mxu0 0.0
      %4587 = vmatprep.subr.mxu0 0.0
      %4588 = vmatpush1.msra.mxu0 0.0
      %4589 = vmatprep.subr.mxu0 0.0
      %4590 = vmatpush1.msra.mxu0 0.0
      %4591 = vmatprep.subr.mxu0 0.0
      %4592 = vmatpush1.msra.mxu0 0.0
      %4593 = vmatprep.subr.mxu0 0.0
      %4594 = vmatpush1.msra.mxu0 0.0
      %4595 = vmatprep.subr.mxu0 0.0
      %4596 = vmatpush1.msra.mxu0 0.0
      %4597 = vmatprep.subr.mxu0 0.0
      %4598 = vmatpush1.msra.mxu0 0.0
      %4599 = vmatprep.subr.mxu0 0.0
      %4600 = vmatpush1.msra.mxu0 0.0
      %4601 = vmatprep.subr.mxu0 0.0
      %4602 = vmatpush1.msra.mxu0 0.0
      %4603 = vmatprep.subr.mxu0 0.0
      %4604 = vmatpush1.msra.mxu0 0.0
      %4605 = vmatprep.subr.mxu0 0.0
      %4606 = vmatpush1.msra.mxu0 0.0
      %4607 = vmatprep.subr.mxu0 0.0
      %4608 = vmatpush1.msra.mxu0 0.0
      %4609 = vmatprep.subr.mxu0 0.0
      %4610 = vmatpush1.msra.mxu0 0.0
      %4611 = vmatprep.subr.mxu0 0.0
      %4612 = vmatpush1.msra.mxu0 0.0
      %4613 = vmatprep.subr.mxu0 0.0
      %4614 = vmatpush1.msra.mxu0 %v4558
      %4615 = vmatprep.subr.mxu0 0.0
      %4616 = vmatpush2.msra.mxu0 0.0
      %4617 = vmatprep.subr.mxu0 0.0
      %4618 = vmatpush2.msra.mxu0 0.0
      %4619 = vmatprep.subr.mxu0 0.0
      %4620 = vmatpush2.msra.mxu0 0.0
      %4621 = vmatprep.subr.mxu0 0.0
      %4622 = vmatpush2.msra.mxu0 0.0
      %4623 = vmatprep.subr.mxu0 0.0
      %4624 = vmatpush2.msra.mxu0 0.0
      %4625 = vmatprep.subr.mxu0 0.0
      %4626 = vmatpush2.msra.mxu0 0.0
      %4627 = vmatprep.subr.mxu0 0.0
      %4628 = vmatpush2.msra.mxu0 0.0
      %4629 = vmatprep.subr.mxu0 0.0
      %4630 = vmatpush2.msra.mxu0 0.0
      %4631 = vmatprep.subr.mxu0 0.0
      %4632 = vmatpush2.msra.mxu0 0.0
      %4633 = vmatprep.subr.mxu0 0.0
      %4634 = vmatpush2.msra.mxu0 0.0
      %4635 = vmatprep.subr.mxu0 0.0
      %4636 = vmatpush2.msra.mxu0 0.0
      %4637 = vmatprep.subr.mxu0 0.0
      %4638 = vmatpush2.msra.mxu0 0.0
      %4639 = vmatprep.subr.mxu0 0.0
      %4640 = vmatpush2.msra.mxu0 0.0
      %4641 = vmatprep.subr.mxu0 0.0
      %4642 = vmatpush2.msra.mxu0 0.0
      %4643 = vmatprep.subr.mxu0 0.0
      %4644 = vmatpush2.msra.mxu0 0.0
      %4645 = vmatprep.subr.mxu0 0.0
      %4646 = vmatpush2.msra.mxu0 0.0
      %4647 = vmatprep.mubr.f32.mxu0 0.0
      %4648 = vmatmul.mubr.f32.gmra.mxu0 %v4560
      %v4649 = vpop.f32.mrf.mxu0
      %v4650 = vadd.f32 0.0, %v4649
      %v4651 = vpop.f32.mrf.mxu0
      %4652 = vmatprep.mubr.f32.mxu0 0.0
      %4653 = vmatmul.mubr.f32.gmra.mxu0 %v4563
      %v4654 = vpop.f32.mrf.mxu0
      %v4655 = vadd.f32 0.0, %v4654
      %v4656 = vpop.f32.mrf.mxu0
      %4657 = vmatprep.mubr.f32.mxu0 0.0
      %4658 = vmatmul.mubr.f32.gmra.mxu0 %v4566
      %v4659 = vpop.f32.mrf.mxu0
      %v4660 = vadd.f32 0.0, %v4659
      %v4661 = vpop.f32.mrf.mxu0
      %4662 = vmatprep.mubr.f32.mxu0 0.0
      %4663 = vmatmul.mubr.f32.gmra.mxu0 %v4569
      %v4664 = vpop.f32.mrf.mxu0
      %v4665 = vadd.f32 0.0, %v4664
      %v4666 = vpop.f32.mrf.mxu0
      %4667 = vmatprep.mubr.f32.mxu0 0.0
      %4668 = vmatmul.mubr.f32.gmra.mxu0 %v4572
      %v4669 = vpop.f32.mrf.mxu0
      %v4670 = vadd.f32 0.0, %v4669
      %v4671 = vpop.f32.mrf.mxu0
      %4672 = vmatprep.mubr.f32.mxu0 0.0
      %4673 = vmatmul.mubr.f32.gmra.mxu0 %v4575
      %v4674 = vpop.f32.mrf.mxu0
      %v4675 = vadd.f32 0.0, %v4674
      %v4676 = vpop.f32.mrf.mxu0
      %4677 = vmatprep.mubr.f32.mxu0 0.0
      %4678 = vmatmul.mubr.f32.gmra.mxu0 %v4578
      %v4679 = vpop.f32.mrf.mxu0
      %v4680 = vadd.f32 0.0, %v4679
      %v4681 = vpop.f32.mrf.mxu0
      %4682 = vmatprep.mubr.f32.mxu0 0.0
      %4683 = vmatmul.mubr.f32.gmra.mxu0 %v4581
      %v4684 = vpop.f32.mrf.mxu0
      %v4685 = vadd.f32 0.0, %v4684
      %v4686 = vpop.f32.mrf.mxu0
      %4687 = vdwg.mxu0
      %v4688 = vadd.f32 %v4541, %v4650
      %v4689 = vadd.f32 %v4542, %v4655
      %v4690 = vadd.f32 %v4543, %v4660
      %v4691 = vadd.f32 %v4544, %v4665
      %v4692 = vadd.f32 %v4545, %v4670
      %v4693 = vadd.f32 %v4546, %v4675
      %v4694 = vadd.f32 %v4547, %v4680
      %v4695 = vadd.f32 %v4548, %v4685
      %v4696 = vld [vmem:[%s3969 + $0x2] sm:$0xff]
      %v4697 = vld [vmem:[%s3969 + $0x12] sm:$0xff]
      %v4698 = vld [vmem:[%s3969 + $0x22] sm:$0xff]
      %v4699 = vld [vmem:[%s3969 + $0x32] sm:$0xff]
      %v4700 = vld [vmem:[%s3969 + $0x42] sm:$0xff]
      %v4701 = vld [vmem:[%s3969 + $0x52] sm:$0xff]
      %v4702 = vld [vmem:[%s3969 + $0x62] sm:$0xff]
      %v4703 = vld [vmem:[%s3969 + $0x72] sm:$0xff]
      %s4704 = scalar_lea.vmem %s3, 40
      %v4705 = vld [vmem:[%s4704] sm:$0xff]
      %v4707 = vsel %vm3947, %v4696, 0
      %v4710 = vsel %vm3947, %v4697, 0
      %v4713 = vsel %vm3947, %v4698, 0
      %v4716 = vsel %vm3947, %v4699, 0
      %v4719 = vsel %vm3947, %v4700, 0
      %v4722 = vsel %vm3947, %v4701, 0
      %v4725 = vsel %vm3947, %v4702, 0
      %v4728 = vsel %vm3947, %v4703, 0
      %4730 = vmatprep.subr.mxu0 0.0
      %4731 = vmatpush1.msra.mxu0 0.0
      %4732 = vmatprep.subr.mxu0 0.0
      %4733 = vmatpush1.msra.mxu0 0.0
      %4734 = vmatprep.subr.mxu0 0.0
      %4735 = vmatpush1.msra.mxu0 0.0
      %4736 = vmatprep.subr.mxu0 0.0
      %4737 = vmatpush1.msra.mxu0 0.0
      %4738 = vmatprep.subr.mxu0 0.0
      %4739 = vmatpush1.msra.mxu0 0.0
      %4740 = vmatprep.subr.mxu0 0.0
      %4741 = vmatpush1.msra.mxu0 0.0
      %4742 = vmatprep.subr.mxu0 0.0
      %4743 = vmatpush1.msra.mxu0 0.0
      %4744 = vmatprep.subr.mxu0 0.0
      %4745 = vmatpush1.msra.mxu0 0.0
      %4746 = vmatprep.subr.mxu0 0.0
      %4747 = vmatpush1.msra.mxu0 0.0
      %4748 = vmatprep.subr.mxu0 0.0
      %4749 = vmatpush1.msra.mxu0 0.0
      %4750 = vmatprep.subr.mxu0 0.0
      %4751 = vmatpush1.msra.mxu0 0.0
      %4752 = vmatprep.subr.mxu0 0.0
      %4753 = vmatpush1.msra.mxu0 0.0
      %4754 = vmatprep.subr.mxu0 0.0
      %4755 = vmatpush1.msra.mxu0 0.0
      %4756 = vmatprep.subr.mxu0 0.0
      %4757 = vmatpush1.msra.mxu0 0.0
      %4758 = vmatprep.subr.mxu0 0.0
      %4759 = vmatpush1.msra.mxu0 0.0
      %4760 = vmatprep.subr.mxu0 0.0
      %4761 = vmatpush1.msra.mxu0 %v4705
      %4762 = vmatprep.subr.mxu0 0.0
      %4763 = vmatpush2.msra.mxu0 0.0
      %4764 = vmatprep.subr.mxu0 0.0
      %4765 = vmatpush2.msra.mxu0 0.0
      %4766 = vmatprep.subr.mxu0 0.0
      %4767 = vmatpush2.msra.mxu0 0.0
      %4768 = vmatprep.subr.mxu0 0.0
      %4769 = vmatpush2.msra.mxu0 0.0
      %4770 = vmatprep.subr.mxu0 0.0
      %4771 = vmatpush2.msra.mxu0 0.0
      %4772 = vmatprep.subr.mxu0 0.0
      %4773 = vmatpush2.msra.mxu0 0.0
      %4774 = vmatprep.subr.mxu0 0.0
      %4775 = vmatpush2.msra.mxu0 0.0
      %4776 = vmatprep.subr.mxu0 0.0
      %4777 = vmatpush2.msra.mxu0 0.0
      %4778 = vmatprep.subr.mxu0 0.0
      %4779 = vmatpush2.msra.mxu0 0.0
      %4780 = vmatprep.subr.mxu0 0.0
      %4781 = vmatpush2.msra.mxu0 0.0
      %4782 = vmatprep.subr.mxu0 0.0
      %4783 = vmatpush2.msra.mxu0 0.0
      %4784 = vmatprep.subr.mxu0 0.0
      %4785 = vmatpush2.msra.mxu0 0.0
      %4786 = vmatprep.subr.mxu0 0.0
      %4787 = vmatpush2.msra.mxu0 0.0
      %4788 = vmatprep.subr.mxu0 0.0
      %4789 = vmatpush2.msra.mxu0 0.0
      %4790 = vmatprep.subr.mxu0 0.0
      %4791 = vmatpush2.msra.mxu0 0.0
      %4792 = vmatprep.subr.mxu0 0.0
      %4793 = vmatpush2.msra.mxu0 0.0
      %4794 = vmatprep.mubr.f32.mxu0 0.0
      %4795 = vmatmul.mubr.f32.gmra.mxu0 %v4707
      %v4796 = vpop.f32.mrf.mxu0
      %v4797 = vadd.f32 0.0, %v4796
      %v4798 = vpop.f32.mrf.mxu0
      %4799 = vmatprep.mubr.f32.mxu0 0.0
      %4800 = vmatmul.mubr.f32.gmra.mxu0 %v4710
      %v4801 = vpop.f32.mrf.mxu0
      %v4802 = vadd.f32 0.0, %v4801
      %v4803 = vpop.f32.mrf.mxu0
      %4804 = vmatprep.mubr.f32.mxu0 0.0
      %4805 = vmatmul.mubr.f32.gmra.mxu0 %v4713
      %v4806 = vpop.f32.mrf.mxu0
      %v4807 = vadd.f32 0.0, %v4806
      %v4808 = vpop.f32.mrf.mxu0
      %4809 = vmatprep.mubr.f32.mxu0 0.0
      %4810 = vmatmul.mubr.f32.gmra.mxu0 %v4716
      %v4811 = vpop.f32.mrf.mxu0
      %v4812 = vadd.f32 0.0, %v4811
      %v4813 = vpop.f32.mrf.mxu0
      %4814 = vmatprep.mubr.f32.mxu0 0.0
      %4815 = vmatmul.mubr.f32.gmra.mxu0 %v4719
      %v4816 = vpop.f32.mrf.mxu0
      %v4817 = vadd.f32 0.0, %v4816
      %v4818 = vpop.f32.mrf.mxu0
      %4819 = vmatprep.mubr.f32.mxu0 0.0
      %4820 = vmatmul.mubr.f32.gmra.mxu0 %v4722
      %v4821 = vpop.f32.mrf.mxu0
      %v4822 = vadd.f32 0.0, %v4821
      %v4823 = vpop.f32.mrf.mxu0
      %4824 = vmatprep.mubr.f32.mxu0 0.0
      %4825 = vmatmul.mubr.f32.gmra.mxu0 %v4725
      %v4826 = vpop.f32.mrf.mxu0
      %v4827 = vadd.f32 0.0, %v4826
      %v4828 = vpop.f32.mrf.mxu0
      %4829 = vmatprep.mubr.f32.mxu0 0.0
      %4830 = vmatmul.mubr.f32.gmra.mxu0 %v4728
      %v4831 = vpop.f32.mrf.mxu0
      %v4832 = vadd.f32 0.0, %v4831
      %v4833 = vpop.f32.mrf.mxu0
      %4834 = vdwg.mxu0
      %v4835 = vadd.f32 %v4688, %v4797
      %v4836 = vadd.f32 %v4689, %v4802
      %v4837 = vadd.f32 %v4690, %v4807
      %v4838 = vadd.f32 %v4691, %v4812
      %v4839 = vadd.f32 %v4692, %v4817
      %v4840 = vadd.f32 %v4693, %v4822
      %v4841 = vadd.f32 %v4694, %v4827
      %v4842 = vadd.f32 %v4695, %v4832
      %s4843 = scalar_lea.vmem [#allocation2], 32
      %v4844 = vld [vmem:[%s4843] sm:$0xff]
      %v4845 = vld [vmem:[%s4843 + $0x10] sm:$0xff]
      %v4846 = vld [vmem:[%s4843 + $0x20] sm:$0xff]
      %v4847 = vld [vmem:[%s4843 + $0x30] sm:$0xff]
      %v4848 = vld [vmem:[%s4843 + $0x40] sm:$0xff]
      %v4849 = vld [vmem:[%s4843 + $0x50] sm:$0xff]
      %v4850 = vld [vmem:[%s4843 + $0x60] sm:$0xff]
      %v4851 = vld [vmem:[%s4843 + $0x70] sm:$0xff]
      %s4852 = scalar_lea.vmem %s3, 48
      %v4853 = vld [vmem:[%s4852] sm:$0xff]
      %v4855 = vsel %vm3947, %v4844, 0
      %v4858 = vsel %vm3947, %v4845, 0
      %v4861 = vsel %vm3947, %v4846, 0
      %v4864 = vsel %vm3947, %v4847, 0
      %v4867 = vsel %vm3947, %v4848, 0
      %v4870 = vsel %vm3947, %v4849, 0
      %v4873 = vsel %vm3947, %v4850, 0
      %v4876 = vsel %vm3947, %v4851, 0
      %4878 = vmatprep.subr.mxu0 0.0
      %4879 = vmatpush1.msra.mxu0 0.0
      %4880 = vmatprep.subr.mxu0 0.0
      %4881 = vmatpush1.msra.mxu0 0.0
      %4882 = vmatprep.subr.mxu0 0.0
      %4883 = vmatpush1.msra.mxu0 0.0
      %4884 = vmatprep.subr.mxu0 0.0
      %4885 = vmatpush1.msra.mxu0 0.0
      %4886 = vmatprep.subr.mxu0 0.0
      %4887 = vmatpush1.msra.mxu0 0.0
      %4888 = vmatprep.subr.mxu0 0.0
      %4889 = vmatpush1.msra.mxu0 0.0
      %4890 = vmatprep.subr.mxu0 0.0
      %4891 = vmatpush1.msra.mxu0 0.0
      %4892 = vmatprep.subr.mxu0 0.0
      %4893 = vmatpush1.msra.mxu0 0.0
      %4894 = vmatprep.subr.mxu0 0.0
      %4895 = vmatpush1.msra.mxu0 0.0
      %4896 = vmatprep.subr.mxu0 0.0
      %4897 = vmatpush1.msra.mxu0 0.0
      %4898 = vmatprep.subr.mxu0 0.0
      %4899 = vmatpush1.msra.mxu0 0.0
      %4900 = vmatprep.subr.mxu0 0.0
      %4901 = vmatpush1.msra.mxu0 0.0
      %4902 = vmatprep.subr.mxu0 0.0
      %4903 = vmatpush1.msra.mxu0 0.0
      %4904 = vmatprep.subr.mxu0 0.0
      %4905 = vmatpush1.msra.mxu0 0.0
      %4906 = vmatprep.subr.mxu0 0.0
      %4907 = vmatpush1.msra.mxu0 0.0
      %4908 = vmatprep.subr.mxu0 0.0
      %4909 = vmatpush1.msra.mxu0 %v4853
      %4910 = vmatprep.subr.mxu0 0.0
      %4911 = vmatpush2.msra.mxu0 0.0
      %4912 = vmatprep.subr.mxu0 0.0
      %4913 = vmatpush2.msra.mxu0 0.0
      %4914 = vmatprep.subr.mxu0 0.0
      %4915 = vmatpush2.msra.mxu0 0.0
      %4916 = vmatprep.subr.mxu0 0.0
      %4917 = vmatpush2.msra.mxu0 0.0
      %4918 = vmatprep.subr.mxu0 0.0
      %4919 = vmatpush2.msra.mxu0 0.0
      %4920 = vmatprep.subr.mxu0 0.0
      %4921 = vmatpush2.msra.mxu0 0.0
      %4922 = vmatprep.subr.mxu0 0.0
      %4923 = vmatpush2.msra.mxu0 0.0
      %4924 = vmatprep.subr.mxu0 0.0
      %4925 = vmatpush2.msra.mxu0 0.0
      %4926 = vmatprep.subr.mxu0 0.0
      %4927 = vmatpush2.msra.mxu0 0.0
      %4928 = vmatprep.subr.mxu0 0.0
      %4929 = vmatpush2.msra.mxu0 0.0
      %4930 = vmatprep.subr.mxu0 0.0
      %4931 = vmatpush2.msra.mxu0 0.0
      %4932 = vmatprep.subr.mxu0 0.0
      %4933 = vmatpush2.msra.mxu0 0.0
      %4934 = vmatprep.subr.mxu0 0.0
      %4935 = vmatpush2.msra.mxu0 0.0
      %4936 = vmatprep.subr.mxu0 0.0
      %4937 = vmatpush2.msra.mxu0 0.0
      %4938 = vmatprep.subr.mxu0 0.0
      %4939 = vmatpush2.msra.mxu0 0.0
      %4940 = vmatprep.subr.mxu0 0.0
      %4941 = vmatpush2.msra.mxu0 0.0
      %4942 = vmatprep.mubr.f32.mxu0 0.0
      %4943 = vmatmul.mubr.f32.gmra.mxu0 %v4855
      %v4944 = vpop.f32.mrf.mxu0
      %v4945 = vadd.f32 0.0, %v4944
      %v4946 = vpop.f32.mrf.mxu0
      %4947 = vmatprep.mubr.f32.mxu0 0.0
      %4948 = vmatmul.mubr.f32.gmra.mxu0 %v4858
      %v4949 = vpop.f32.mrf.mxu0
      %v4950 = vadd.f32 0.0, %v4949
      %v4951 = vpop.f32.mrf.mxu0
      %4952 = vmatprep.mubr.f32.mxu0 0.0
      %4953 = vmatmul.mubr.f32.gmra.mxu0 %v4861
      %v4954 = vpop.f32.mrf.mxu0
      %v4955 = vadd.f32 0.0, %v4954
      %v4956 = vpop.f32.mrf.mxu0
      %4957 = vmatprep.mubr.f32.mxu0 0.0
      %4958 = vmatmul.mubr.f32.gmra.mxu0 %v4864
      %v4959 = vpop.f32.mrf.mxu0
      %v4960 = vadd.f32 0.0, %v4959
      %v4961 = vpop.f32.mrf.mxu0
      %4962 = vmatprep.mubr.f32.mxu0 0.0
      %4963 = vmatmul.mubr.f32.gmra.mxu0 %v4867
      %v4964 = vpop.f32.mrf.mxu0
      %v4965 = vadd.f32 0.0, %v4964
      %v4966 = vpop.f32.mrf.mxu0
      %4967 = vmatprep.mubr.f32.mxu0 0.0
      %4968 = vmatmul.mubr.f32.gmra.mxu0 %v4870
      %v4969 = vpop.f32.mrf.mxu0
      %v4970 = vadd.f32 0.0, %v4969
      %v4971 = vpop.f32.mrf.mxu0
      %4972 = vmatprep.mubr.f32.mxu0 0.0
      %4973 = vmatmul.mubr.f32.gmra.mxu0 %v4873
      %v4974 = vpop.f32.mrf.mxu0
      %v4975 = vadd.f32 0.0, %v4974
      %v4976 = vpop.f32.mrf.mxu0
      %4977 = vmatprep.mubr.f32.mxu0 0.0
      %4978 = vmatmul.mubr.f32.gmra.mxu0 %v4876
      %v4979 = vpop.f32.mrf.mxu0
      %v4980 = vadd.f32 0.0, %v4979
      %v4981 = vpop.f32.mrf.mxu0
      %4982 = vdwg.mxu0
      %v4983 = vadd.f32 %v4835, %v4945
      %v4984 = vadd.f32 %v4836, %v4950
      %v4985 = vadd.f32 %v4837, %v4955
      %v4986 = vadd.f32 %v4838, %v4960
      %v4987 = vadd.f32 %v4839, %v4965
      %v4988 = vadd.f32 %v4840, %v4970
      %v4989 = vadd.f32 %v4841, %v4975
      %v4990 = vadd.f32 %v4842, %v4980
      %v4991 = vld [vmem:[%s4843 + $0x1] sm:$0xff]
      %v4992 = vld [vmem:[%s4843 + $0x11] sm:$0xff]
      %v4993 = vld [vmem:[%s4843 + $0x21] sm:$0xff]
      %v4994 = vld [vmem:[%s4843 + $0x31] sm:$0xff]
      %v4995 = vld [vmem:[%s4843 + $0x41] sm:$0xff]
      %v4996 = vld [vmem:[%s4843 + $0x51] sm:$0xff]
      %v4997 = vld [vmem:[%s4843 + $0x61] sm:$0xff]
      %v4998 = vld [vmem:[%s4843 + $0x71] sm:$0xff]
      %s4999 = scalar_lea.vmem %s3, 56
      %v5000 = vld [vmem:[%s4999] sm:$0xff]
      %v5002 = vsel %vm3947, %v4991, 0
      %v5005 = vsel %vm3947, %v4992, 0
      %v5008 = vsel %vm3947, %v4993, 0
      %v5011 = vsel %vm3947, %v4994, 0
      %v5014 = vsel %vm3947, %v4995, 0
      %v5017 = vsel %vm3947, %v4996, 0
      %v5020 = vsel %vm3947, %v4997, 0
      %v5023 = vsel %vm3947, %v4998, 0
      %5025 = vmatprep.subr.mxu0 0.0
      %5026 = vmatpush1.msra.mxu0 0.0
      %5027 = vmatprep.subr.mxu0 0.0
      %5028 = vmatpush1.msra.mxu0 0.0
      %5029 = vmatprep.subr.mxu0 0.0
      %5030 = vmatpush1.msra.mxu0 0.0
      %5031 = vmatprep.subr.mxu0 0.0
      %5032 = vmatpush1.msra.mxu0 0.0
      %5033 = vmatprep.subr.mxu0 0.0
      %5034 = vmatpush1.msra.mxu0 0.0
      %5035 = vmatprep.subr.mxu0 0.0
      %5036 = vmatpush1.msra.mxu0 0.0
      %5037 = vmatprep.subr.mxu0 0.0
      %5038 = vmatpush1.msra.mxu0 0.0
      %5039 = vmatprep.subr.mxu0 0.0
      %5040 = vmatpush1.msra.mxu0 0.0
      %5041 = vmatprep.subr.mxu0 0.0
      %5042 = vmatpush1.msra.mxu0 0.0
      %5043 = vmatprep.subr.mxu0 0.0
      %5044 = vmatpush1.msra.mxu0 0.0
      %5045 = vmatprep.subr.mxu0 0.0
      %5046 = vmatpush1.msra.mxu0 0.0
      %5047 = vmatprep.subr.mxu0 0.0
      %5048 = vmatpush1.msra.mxu0 0.0
      %5049 = vmatprep.subr.mxu0 0.0
      %5050 = vmatpush1.msra.mxu0 0.0
      %5051 = vmatprep.subr.mxu0 0.0
      %5052 = vmatpush1.msra.mxu0 0.0
      %5053 = vmatprep.subr.mxu0 0.0
      %5054 = vmatpush1.msra.mxu0 0.0
      %5055 = vmatprep.subr.mxu0 0.0
      %5056 = vmatpush1.msra.mxu0 %v5000
      %5057 = vmatprep.subr.mxu0 0.0
      %5058 = vmatpush2.msra.mxu0 0.0
      %5059 = vmatprep.subr.mxu0 0.0
      %5060 = vmatpush2.msra.mxu0 0.0
      %5061 = vmatprep.subr.mxu0 0.0
      %5062 = vmatpush2.msra.mxu0 0.0
      %5063 = vmatprep.subr.mxu0 0.0
      %5064 = vmatpush2.msra.mxu0 0.0
      %5065 = vmatprep.subr.mxu0 0.0
      %5066 = vmatpush2.msra.mxu0 0.0
      %5067 = vmatprep.subr.mxu0 0.0
      %5068 = vmatpush2.msra.mxu0 0.0
      %5069 = vmatprep.subr.mxu0 0.0
      %5070 = vmatpush2.msra.mxu0 0.0
      %5071 = vmatprep.subr.mxu0 0.0
      %5072 = vmatpush2.msra.mxu0 0.0
      %5073 = vmatprep.subr.mxu0 0.0
      %5074 = vmatpush2.msra.mxu0 0.0
      %5075 = vmatprep.subr.mxu0 0.0
      %5076 = vmatpush2.msra.mxu0 0.0
      %5077 = vmatprep.subr.mxu0 0.0
      %5078 = vmatpush2.msra.mxu0 0.0
      %5079 = vmatprep.subr.mxu0 0.0
      %5080 = vmatpush2.msra.mxu0 0.0
      %5081 = vmatprep.subr.mxu0 0.0
      %5082 = vmatpush2.msra.mxu0 0.0
      %5083 = vmatprep.subr.mxu0 0.0
      %5084 = vmatpush2.msra.mxu0 0.0
      %5085 = vmatprep.subr.mxu0 0.0
      %5086 = vmatpush2.msra.mxu0 0.0
      %5087 = vmatprep.subr.mxu0 0.0
      %5088 = vmatpush2.msra.mxu0 0.0
      %5089 = vmatprep.mubr.f32.mxu0 0.0
      %5090 = vmatmul.mubr.f32.gmra.mxu0 %v5002
      %v5091 = vpop.f32.mrf.mxu0
      %v5092 = vadd.f32 0.0, %v5091
      %v5093 = vpop.f32.mrf.mxu0
      %5094 = vmatprep.mubr.f32.mxu0 0.0
      %5095 = vmatmul.mubr.f32.gmra.mxu0 %v5005
      %v5096 = vpop.f32.mrf.mxu0
      %v5097 = vadd.f32 0.0, %v5096
      %v5098 = vpop.f32.mrf.mxu0
      %5099 = vmatprep.mubr.f32.mxu0 0.0
      %5100 = vmatmul.mubr.f32.gmra.mxu0 %v5008
      %v5101 = vpop.f32.mrf.mxu0
      %v5102 = vadd.f32 0.0, %v5101
      %v5103 = vpop.f32.mrf.mxu0
      %5104 = vmatprep.mubr.f32.mxu0 0.0
      %5105 = vmatmul.mubr.f32.gmra.mxu0 %v5011
      %v5106 = vpop.f32.mrf.mxu0
      %v5107 = vadd.f32 0.0, %v5106
      %v5108 = vpop.f32.mrf.mxu0
      %5109 = vmatprep.mubr.f32.mxu0 0.0
      %5110 = vmatmul.mubr.f32.gmra.mxu0 %v5014
      %v5111 = vpop.f32.mrf.mxu0
      %v5112 = vadd.f32 0.0, %v5111
      %v5113 = vpop.f32.mrf.mxu0
      %5114 = vmatprep.mubr.f32.mxu0 0.0
      %5115 = vmatmul.mubr.f32.gmra.mxu0 %v5017
      %v5116 = vpop.f32.mrf.mxu0
      %v5117 = vadd.f32 0.0, %v5116
      %v5118 = vpop.f32.mrf.mxu0
      %5119 = vmatprep.mubr.f32.mxu0 0.0
      %5120 = vmatmul.mubr.f32.gmra.mxu0 %v5020
      %v5121 = vpop.f32.mrf.mxu0
      %v5122 = vadd.f32 0.0, %v5121
      %v5123 = vpop.f32.mrf.mxu0
      %5124 = vmatprep.mubr.f32.mxu0 0.0
      %5125 = vmatmul.mubr.f32.gmra.mxu0 %v5023
      %v5126 = vpop.f32.mrf.mxu0
      %v5127 = vadd.f32 0.0, %v5126
      %v5128 = vpop.f32.mrf.mxu0
      %5129 = vdwg.mxu0
      %v5130 = vadd.f32 %v4983, %v5092
      %v5131 = vadd.f32 %v4984, %v5097
      %v5132 = vadd.f32 %v4985, %v5102
      %v5133 = vadd.f32 %v4986, %v5107
      %v5134 = vadd.f32 %v4987, %v5112
      %v5135 = vadd.f32 %v4988, %v5117
      %v5136 = vadd.f32 %v4989, %v5122
      %v5137 = vadd.f32 %v4990, %v5127
      %v5138 = vld [vmem:[%s4843 + $0x2] sm:$0xff]
      %v5139 = vld [vmem:[%s4843 + $0x12] sm:$0xff]
      %v5140 = vld [vmem:[%s4843 + $0x22] sm:$0xff]
      %v5141 = vld [vmem:[%s4843 + $0x32] sm:$0xff]
      %v5142 = vld [vmem:[%s4843 + $0x42] sm:$0xff]
      %v5143 = vld [vmem:[%s4843 + $0x52] sm:$0xff]
      %v5144 = vld [vmem:[%s4843 + $0x62] sm:$0xff]
      %v5145 = vld [vmem:[%s4843 + $0x72] sm:$0xff]
      %s5146 = scalar_lea.vmem %s3, 64
      %v5147 = vld [vmem:[%s5146] sm:$0xff]
      %v5149 = vsel %vm3947, %v5138, 0
      %v5152 = vsel %vm3947, %v5139, 0
      %v5155 = vsel %vm3947, %v5140, 0
      %v5158 = vsel %vm3947, %v5141, 0
      %v5161 = vsel %vm3947, %v5142, 0
      %v5164 = vsel %vm3947, %v5143, 0
      %v5167 = vsel %vm3947, %v5144, 0
      %v5170 = vsel %vm3947, %v5145, 0
      %5172 = vmatprep.subr.mxu0 0.0
      %5173 = vmatpush1.msra.mxu0 0.0
      %5174 = vmatprep.subr.mxu0 0.0
      %5175 = vmatpush1.msra.mxu0 0.0
      %5176 = vmatprep.subr.mxu0 0.0
      %5177 = vmatpush1.msra.mxu0 0.0
      %5178 = vmatprep.subr.mxu0 0.0
      %5179 = vmatpush1.msra.mxu0 0.0
      %5180 = vmatprep.subr.mxu0 0.0
      %5181 = vmatpush1.msra.mxu0 0.0
      %5182 = vmatprep.subr.mxu0 0.0
      %5183 = vmatpush1.msra.mxu0 0.0
      %5184 = vmatprep.subr.mxu0 0.0
      %5185 = vmatpush1.msra.mxu0 0.0
      %5186 = vmatprep.subr.mxu0 0.0
      %5187 = vmatpush1.msra.mxu0 0.0
      %5188 = vmatprep.subr.mxu0 0.0
      %5189 = vmatpush1.msra.mxu0 0.0
      %5190 = vmatprep.subr.mxu0 0.0
      %5191 = vmatpush1.msra.mxu0 0.0
      %5192 = vmatprep.subr.mxu0 0.0
      %5193 = vmatpush1.msra.mxu0 0.0
      %5194 = vmatprep.subr.mxu0 0.0
      %5195 = vmatpush1.msra.mxu0 0.0
      %5196 = vmatprep.subr.mxu0 0.0
      %5197 = vmatpush1.msra.mxu0 0.0
      %5198 = vmatprep.subr.mxu0 0.0
      %5199 = vmatpush1.msra.mxu0 0.0
      %5200 = vmatprep.subr.mxu0 0.0
      %5201 = vmatpush1.msra.mxu0 0.0
      %5202 = vmatprep.subr.mxu0 0.0
      %5203 = vmatpush1.msra.mxu0 %v5147
      %5204 = vmatprep.subr.mxu0 0.0
      %5205 = vmatpush2.msra.mxu0 0.0
      %5206 = vmatprep.subr.mxu0 0.0
      %5207 = vmatpush2.msra.mxu0 0.0
      %5208 = vmatprep.subr.mxu0 0.0
      %5209 = vmatpush2.msra.mxu0 0.0
      %5210 = vmatprep.subr.mxu0 0.0
      %5211 = vmatpush2.msra.mxu0 0.0
      %5212 = vmatprep.subr.mxu0 0.0
      %5213 = vmatpush2.msra.mxu0 0.0
      %5214 = vmatprep.subr.mxu0 0.0
      %5215 = vmatpush2.msra.mxu0 0.0
      %5216 = vmatprep.subr.mxu0 0.0
      %5217 = vmatpush2.msra.mxu0 0.0
      %5218 = vmatprep.subr.mxu0 0.0
      %5219 = vmatpush2.msra.mxu0 0.0
      %5220 = vmatprep.subr.mxu0 0.0
      %5221 = vmatpush2.msra.mxu0 0.0
      %5222 = vmatprep.subr.mxu0 0.0
      %5223 = vmatpush2.msra.mxu0 0.0
      %5224 = vmatprep.subr.mxu0 0.0
      %5225 = vmatpush2.msra.mxu0 0.0
      %5226 = vmatprep.subr.mxu0 0.0
      %5227 = vmatpush2.msra.mxu0 0.0
      %5228 = vmatprep.subr.mxu0 0.0
      %5229 = vmatpush2.msra.mxu0 0.0
      %5230 = vmatprep.subr.mxu0 0.0
      %5231 = vmatpush2.msra.mxu0 0.0
      %5232 = vmatprep.subr.mxu0 0.0
      %5233 = vmatpush2.msra.mxu0 0.0
      %5234 = vmatprep.subr.mxu0 0.0
      %5235 = vmatpush2.msra.mxu0 0.0
      %5236 = vmatprep.mubr.f32.mxu0 0.0
      %5237 = vmatmul.mubr.f32.gmra.mxu0 %v5149
      %v5238 = vpop.f32.mrf.mxu0
      %v5239 = vadd.f32 0.0, %v5238
      %v5240 = vpop.f32.mrf.mxu0
      %5241 = vmatprep.mubr.f32.mxu0 0.0
      %5242 = vmatmul.mubr.f32.gmra.mxu0 %v5152
      %v5243 = vpop.f32.mrf.mxu0
      %v5244 = vadd.f32 0.0, %v5243
      %v5245 = vpop.f32.mrf.mxu0
      %5246 = vmatprep.mubr.f32.mxu0 0.0
      %5247 = vmatmul.mubr.f32.gmra.mxu0 %v5155
      %v5248 = vpop.f32.mrf.mxu0
      %v5249 = vadd.f32 0.0, %v5248
      %v5250 = vpop.f32.mrf.mxu0
      %5251 = vmatprep.mubr.f32.mxu0 0.0
      %5252 = vmatmul.mubr.f32.gmra.mxu0 %v5158
      %v5253 = vpop.f32.mrf.mxu0
      %v5254 = vadd.f32 0.0, %v5253
      %v5255 = vpop.f32.mrf.mxu0
      %5256 = vmatprep.mubr.f32.mxu0 0.0
      %5257 = vmatmul.mubr.f32.gmra.mxu0 %v5161
      %v5258 = vpop.f32.mrf.mxu0
      %v5259 = vadd.f32 0.0, %v5258
      %v5260 = vpop.f32.mrf.mxu0
      %5261 = vmatprep.mubr.f32.mxu0 0.0
      %5262 = vmatmul.mubr.f32.gmra.mxu0 %v5164
      %v5263 = vpop.f32.mrf.mxu0
      %v5264 = vadd.f32 0.0, %v5263
      %v5265 = vpop.f32.mrf.mxu0
      %5266 = vmatprep.mubr.f32.mxu0 0.0
      %5267 = vmatmul.mubr.f32.gmra.mxu0 %v5167
      %v5268 = vpop.f32.mrf.mxu0
      %v5269 = vadd.f32 0.0, %v5268
      %v5270 = vpop.f32.mrf.mxu0
      %5271 = vmatprep.mubr.f32.mxu0 0.0
      %5272 = vmatmul.mubr.f32.gmra.mxu0 %v5170
      %v5273 = vpop.f32.mrf.mxu0
      %v5274 = vadd.f32 0.0, %v5273
      %v5275 = vpop.f32.mrf.mxu0
      %5276 = vdwg.mxu0
      %v5277 = vadd.f32 %v5130, %v5239
      %v5278 = vadd.f32 %v5131, %v5244
      %v5279 = vadd.f32 %v5132, %v5249
      %v5280 = vadd.f32 %v5133, %v5254
      %v5281 = vadd.f32 %v5134, %v5259
      %v5282 = vadd.f32 %v5135, %v5264
      %v5283 = vadd.f32 %v5136, %v5269
      %v5284 = vadd.f32 %v5137, %v5274
      %v5285 = vld [vmem:[%s4] sm:$0x1]
      %v5287 = vlaneseq
      %v5288 = vshrl.u32 %v5287, 7
      %v5289 = vsub.s32 0, %v5288
      %v5290 = vrot.slane %v5285, %v5289
      %v5292 = vadd.f32 %v5277, %v5290
      %v5293 = vadd.f32 %v5278, %v5290
      %v5294 = vadd.f32 %v5279, %v5290
      %v5295 = vadd.f32 %v5280, %v5290
      %v5296 = vadd.f32 %v5281, %v5290
      %v5297 = vadd.f32 %v5282, %v5290
      %v5298 = vadd.f32 %v5283, %v5290
      %v5299 = vadd.f32 %v5284, %v5290
      %v5300 = vld [vmem:[%s1413 + $0x1] sm:$0xff]
      %v5301 = vld [vmem:[%s1413 + $0x9] sm:$0xff]
      %v5302 = vld [vmem:[%s1413 + $0x19] sm:$0xff]
      %v5303 = vld [vmem:[%s1413 + $0x21] sm:$0xff]
      %v5304 = vld [vmem:[%s1413 + $0x31] sm:$0xff]
      %v5305 = vld [vmem:[%s1413 + $0x39] sm:$0xff]
      %v5306 = vld [vmem:[%s1413 + $0x49] sm:$0xff]
      %v5307 = vld [vmem:[%s1413 + $0x51] sm:$0xff]
      %v5308 = vld [vmem:[%s1413 + $0x61] sm:$0xff]
      %v5309 = vld [vmem:[%s1413 + $0x69] sm:$0xff]
      %v5310 = vld [vmem:[%s1413 + $0x79] sm:$0xff]
      %v5311 = vld [vmem:[%s1413 + $0x81] sm:$0xff]
      %v5312 = vld [vmem:[%s1413 + $0x91] sm:$0xff]
      %v5313 = vld [vmem:[%s1413 + $0x99] sm:$0xff]
      %v5314 = vld [vmem:[%s1413 + $0xa9] sm:$0xff]
      %v5315 = vld [vmem:[%s1413 + $0xb1] sm:$0xff]
      %v5316 = vld [vmem:[%s1413 + $0xc1] sm:$0xff]
      %v5317 = vld [vmem:[%s1413 + $0xc9] sm:$0xff]
      %v5318 = vld [vmem:[%s1413 + $0xd9] sm:$0xff]
      %v5319 = vld [vmem:[%s1413 + $0xe1] sm:$0xff]
      %v5320 = vld [vmem:[%s1413 + $0xf1] sm:$0xff]
      %v5321 = vld [vmem:[%s1413 + $0xf9] sm:$0xff]
      %v5322 = vld [vmem:[%s1413 + $0x109] sm:$0xff]
      %v5323 = vld [vmem:[%s1413 + $0x111] sm:$0xff]
      %v5324 = vld [vmem:[%s1413 + $0x121] sm:$0xff]
      %v5325 = vld [vmem:[%s1413 + $0x129] sm:$0xff]
      %v5326 = vld [vmem:[%s1413 + $0x139] sm:$0xff]
      %v5327 = vld [vmem:[%s1413 + $0x141] sm:$0xff]
      %v5328 = vld [vmem:[%s1413 + $0x151] sm:$0xff]
      %v5329 = vld [vmem:[%s1413 + $0x159] sm:$0xff]
      %v5330 = vld [vmem:[%s1413 + $0x169] sm:$0xff]
      %v5331 = vld [vmem:[%s1413 + $0x171] sm:$0xff]
      %5332 = vmatprep.subr.mxu0 0.0
      %5333 = vmatpush1.msra.mxu0 %v5315
      %5334 = vmatprep.subr.mxu0 0.0
      %5335 = vmatpush1.msra.mxu0 %v5314
      %5336 = vmatprep.subr.mxu0 0.0
      %5337 = vmatpush1.msra.mxu0 %v5313
      %5338 = vmatprep.subr.mxu0 0.0
      %5339 = vmatpush1.msra.mxu0 %v5312
      %5340 = vmatprep.subr.mxu0 0.0
      %5341 = vmatpush1.msra.mxu0 %v5311
      %5342 = vmatprep.subr.mxu0 0.0
      %5343 = vmatpush1.msra.mxu0 %v5310
      %5344 = vmatprep.subr.mxu0 0.0
      %5345 = vmatpush1.msra.mxu0 %v5309
      %5346 = vmatprep.subr.mxu0 0.0
      %5347 = vmatpush1.msra.mxu0 %v5308
      %5348 = vmatprep.subr.mxu0 0.0
      %5349 = vmatpush1.msra.mxu0 %v5307
      %5350 = vmatprep.subr.mxu0 0.0
      %5351 = vmatpush1.msra.mxu0 %v5306
      %5352 = vmatprep.subr.mxu0 0.0
      %5353 = vmatpush1.msra.mxu0 %v5305
      %5354 = vmatprep.subr.mxu0 0.0
      %5355 = vmatpush1.msra.mxu0 %v5304
      %5356 = vmatprep.subr.mxu0 0.0
      %5357 = vmatpush1.msra.mxu0 %v5303
      %5358 = vmatprep.subr.mxu0 0.0
      %5359 = vmatpush1.msra.mxu0 %v5302
      %5360 = vmatprep.subr.mxu0 0.0
      %5361 = vmatpush1.msra.mxu0 %v5301
      %5362 = vmatprep.subr.mxu0 0.0
      %5363 = vmatpush1.msra.mxu0 %v5300
      %5364 = vmatprep.subr.mxu0 0.0
      %5365 = vmatpush2.msra.mxu0 %v5331
      %5366 = vmatprep.subr.mxu0 0.0
      %5367 = vmatpush2.msra.mxu0 %v5330
      %5368 = vmatprep.subr.mxu0 0.0
      %5369 = vmatpush2.msra.mxu0 %v5329
      %5370 = vmatprep.subr.mxu0 0.0
      %5371 = vmatpush2.msra.mxu0 %v5328
      %5372 = vmatprep.subr.mxu0 0.0
      %5373 = vmatpush2.msra.mxu0 %v5327
      %5374 = vmatprep.subr.mxu0 0.0
      %5375 = vmatpush2.msra.mxu0 %v5326
      %5376 = vmatprep.subr.mxu0 0.0
      %5377 = vmatpush2.msra.mxu0 %v5325
      %5378 = vmatprep.subr.mxu0 0.0
      %5379 = vmatpush2.msra.mxu0 %v5324
      %5380 = vmatprep.subr.mxu0 0.0
      %5381 = vmatpush2.msra.mxu0 %v5323
      %5382 = vmatprep.subr.mxu0 0.0
      %5383 = vmatpush2.msra.mxu0 %v5322
      %5384 = vmatprep.subr.mxu0 0.0
      %5385 = vmatpush2.msra.mxu0 %v5321
      %5386 = vmatprep.subr.mxu0 0.0
      %5387 = vmatpush2.msra.mxu0 %v5320
      %5388 = vmatprep.subr.mxu0 0.0
      %5389 = vmatpush2.msra.mxu0 %v5319
      %5390 = vmatprep.subr.mxu0 0.0
      %5391 = vmatpush2.msra.mxu0 %v5318
      %5392 = vmatprep.subr.mxu0 0.0
      %5393 = vmatpush2.msra.mxu0 %v5317
      %5394 = vmatprep.subr.mxu0 0.0
      %5395 = vmatpush2.msra.mxu0 %v5316
      %5396 = vmatprep.mubr.f32.mxu0 %v3827
      %5397 = vmatmul.mubr.f32.gmra.mxu0 %v3826
      %v5398 = vpop.f32.mrf.mxu0
      %v5399 = vadd.f32 0.0, %v5398
      %v5400 = vpop.f32.mrf.mxu0
      %5401 = vmatprep.mubr.f32.mxu0 %v3829
      %5402 = vmatmul.mubr.f32.gmra.mxu0 %v3828
      %v5403 = vpop.f32.mrf.mxu0
      %v5404 = vadd.f32 0.0, %v5403
      %v5405 = vpop.f32.mrf.mxu0
      %5406 = vmatprep.mubr.f32.mxu0 %v3831
      %5407 = vmatmul.mubr.f32.gmra.mxu0 %v3830
      %v5408 = vpop.f32.mrf.mxu0
      %v5409 = vadd.f32 0.0, %v5408
      %v5410 = vpop.f32.mrf.mxu0
      %5411 = vmatprep.mubr.f32.mxu0 %v3833
      %5412 = vmatmul.mubr.f32.gmra.mxu0 %v3832
      %v5413 = vpop.f32.mrf.mxu0
      %v5414 = vadd.f32 0.0, %v5413
      %v5415 = vpop.f32.mrf.mxu0
      %5416 = vmatprep.mubr.f32.mxu0 %v3835
      %5417 = vmatmul.mubr.f32.gmra.mxu0 %v3834
      %v5418 = vpop.f32.mrf.mxu0
      %v5419 = vadd.f32 0.0, %v5418
      %v5420 = vpop.f32.mrf.mxu0
      %5421 = vmatprep.mubr.f32.mxu0 %v3837
      %5422 = vmatmul.mubr.f32.gmra.mxu0 %v3836
      %v5423 = vpop.f32.mrf.mxu0
      %v5424 = vadd.f32 0.0, %v5423
      %v5425 = vpop.f32.mrf.mxu0
      %5426 = vmatprep.mubr.f32.mxu0 %v3839
      %5427 = vmatmul.mubr.f32.gmra.mxu0 %v3838
      %v5428 = vpop.f32.mrf.mxu0
      %v5429 = vadd.f32 0.0, %v5428
      %v5430 = vpop.f32.mrf.mxu0
      %5431 = vmatprep.mubr.f32.mxu0 %v3841
      %5432 = vmatmul.mubr.f32.gmra.mxu0 %v3840
      %v5433 = vpop.f32.mrf.mxu0
      %v5434 = vadd.f32 0.0, %v5433
      %v5435 = vpop.f32.mrf.mxu0
      %5436 = vdwg.mxu0
      %v5437 = vld [vmem:[%s6] sm:$0xf]
      %v5438 = vld [vmem:[%s7] sm:$0x1]
      %v5440 = vlaneseq
      %v5441 = vshrl.u32 %v5440, 7
      %v5442 = vsub.s32 0, %v5441
      %v5443 = vrot.slane %v5438, %v5442
      %v5446 = vsel %vm373, %v5399, 0
      %v5449 = vsel %vm373, %v5404, 0
      %v5452 = vsel %vm373, %v5409, 0
      %v5455 = vsel %vm373, %v5414, 0
      %v5458 = vsel %vm373, %v5419, 0
      %v5461 = vsel %vm373, %v5424, 0
      %v5464 = vsel %vm373, %v5429, 0
      %v5467 = vsel %vm373, %v5434, 0
      %v5470 = vsel %vm470, %v5437, 0
      %5472 = vmatprep.subr.mxu0 0.0
      %5473 = vmatpush1.msra.mxu0 0.0
      %5474 = vmatprep.subr.mxu0 0.0
      %5475 = vmatpush1.msra.mxu0 0.0
      %5476 = vmatprep.subr.mxu0 0.0
      %5477 = vmatpush1.msra.mxu0 0.0
      %5478 = vmatprep.subr.mxu0 0.0
      %5479 = vmatpush1.msra.mxu0 0.0
      %5480 = vmatprep.subr.mxu0 0.0
      %5481 = vmatpush1.msra.mxu0 0.0
      %5482 = vmatprep.subr.mxu0 0.0
      %5483 = vmatpush1.msra.mxu0 0.0
      %5484 = vmatprep.subr.mxu0 0.0
      %5485 = vmatpush1.msra.mxu0 0.0
      %5486 = vmatprep.subr.mxu0 0.0
      %5487 = vmatpush1.msra.mxu0 0.0
      %5488 = vmatprep.subr.mxu0 0.0
      %5489 = vmatpush1.msra.mxu0 0.0
      %5490 = vmatprep.subr.mxu0 0.0
      %5491 = vmatpush1.msra.mxu0 0.0
      %5492 = vmatprep.subr.mxu0 0.0
      %5493 = vmatpush1.msra.mxu0 0.0
      %5494 = vmatprep.subr.mxu0 0.0
      %5495 = vmatpush1.msra.mxu0 0.0
      %5496 = vmatprep.subr.mxu0 0.0
      %5497 = vmatpush1.msra.mxu0 0.0
      %5498 = vmatprep.subr.mxu0 0.0
      %5499 = vmatpush1.msra.mxu0 0.0
      %5500 = vmatprep.subr.mxu0 0.0
      %5501 = vmatpush1.msra.mxu0 0.0
      %5502 = vmatprep.subr.mxu0 0.0
      %5503 = vmatpush1.msra.mxu0 %v5470
      %5504 = vmatprep.subr.mxu0 0.0
      %5505 = vmatpush2.msra.mxu0 0.0
      %5506 = vmatprep.subr.mxu0 0.0
      %5507 = vmatpush2.msra.mxu0 0.0
      %5508 = vmatprep.subr.mxu0 0.0
      %5509 = vmatpush2.msra.mxu0 0.0
      %5510 = vmatprep.subr.mxu0 0.0
      %5511 = vmatpush2.msra.mxu0 0.0
      %5512 = vmatprep.subr.mxu0 0.0
      %5513 = vmatpush2.msra.mxu0 0.0
      %5514 = vmatprep.subr.mxu0 0.0
      %5515 = vmatpush2.msra.mxu0 0.0
      %5516 = vmatprep.subr.mxu0 0.0
      %5517 = vmatpush2.msra.mxu0 0.0
      %5518 = vmatprep.subr.mxu0 0.0
      %5519 = vmatpush2.msra.mxu0 0.0
      %5520 = vmatprep.subr.mxu0 0.0
      %5521 = vmatpush2.msra.mxu0 0.0
      %5522 = vmatprep.subr.mxu0 0.0
      %5523 = vmatpush2.msra.mxu0 0.0
      %5524 = vmatprep.subr.mxu0 0.0
      %5525 = vmatpush2.msra.mxu0 0.0
      %5526 = vmatprep.subr.mxu0 0.0
      %5527 = vmatpush2.msra.mxu0 0.0
      %5528 = vmatprep.subr.mxu0 0.0
      %5529 = vmatpush2.msra.mxu0 0.0
      %5530 = vmatprep.subr.mxu0 0.0
      %5531 = vmatpush2.msra.mxu0 0.0
      %5532 = vmatprep.subr.mxu0 0.0
      %5533 = vmatpush2.msra.mxu0 0.0
      %5534 = vmatprep.subr.mxu0 0.0
      %5535 = vmatpush2.msra.mxu0 0.0
      %5536 = vmatprep.mubr.f32.mxu0 0.0
      %5537 = vmatmul.mubr.f32.gmra.mxu0 %v5446
      %v5538 = vpop.f32.mrf.mxu0
      %v5539 = vadd.f32 %v5443, %v5538
      %v5540 = vpop.f32.mrf.mxu0
      %5541 = vmatprep.mubr.f32.mxu0 0.0
      %5542 = vmatmul.mubr.f32.gmra.mxu0 %v5449
      %v5543 = vpop.f32.mrf.mxu0
      %v5544 = vadd.f32 %v5443, %v5543
      %v5545 = vpop.f32.mrf.mxu0
      %5546 = vmatprep.mubr.f32.mxu0 0.0
      %5547 = vmatmul.mubr.f32.gmra.mxu0 %v5452
      %v5548 = vpop.f32.mrf.mxu0
      %v5549 = vadd.f32 %v5443, %v5548
      %v5550 = vpop.f32.mrf.mxu0
      %5551 = vmatprep.mubr.f32.mxu0 0.0
      %5552 = vmatmul.mubr.f32.gmra.mxu0 %v5455
      %v5553 = vpop.f32.mrf.mxu0
      %v5554 = vadd.f32 %v5443, %v5553
      %v5555 = vpop.f32.mrf.mxu0
      %5556 = vmatprep.mubr.f32.mxu0 0.0
      %5557 = vmatmul.mubr.f32.gmra.mxu0 %v5458
      %v5558 = vpop.f32.mrf.mxu0
      %v5559 = vadd.f32 %v5443, %v5558
      %v5560 = vpop.f32.mrf.mxu0
      %5561 = vmatprep.mubr.f32.mxu0 0.0
      %5562 = vmatmul.mubr.f32.gmra.mxu0 %v5461
      %v5563 = vpop.f32.mrf.mxu0
      %v5564 = vadd.f32 %v5443, %v5563
      %v5565 = vpop.f32.mrf.mxu0
      %5566 = vmatprep.mubr.f32.mxu0 0.0
      %5567 = vmatmul.mubr.f32.gmra.mxu0 %v5464
      %v5568 = vpop.f32.mrf.mxu0
      %v5569 = vadd.f32 %v5443, %v5568
      %v5570 = vpop.f32.mrf.mxu0
      %5571 = vmatprep.mubr.f32.mxu0 0.0
      %5572 = vmatmul.mubr.f32.gmra.mxu0 %v5467
      %v5573 = vpop.f32.mrf.mxu0
      %v5574 = vadd.f32 %v5443, %v5573
      %v5575 = vpop.f32.mrf.mxu0
      %5576 = vdwg.mxu0
      %v5577 = vadd.f32 %v5292, %v5539
      %v5578 = vadd.f32 %v5293, %v5544
      %v5579 = vadd.f32 %v5294, %v5549
      %v5580 = vadd.f32 %v5295, %v5554
      %v5581 = vadd.f32 %v5296, %v5559
      %v5582 = vadd.f32 %v5297, %v5564
      %v5583 = vadd.f32 %v5298, %v5569
      %v5584 = vadd.f32 %v5299, %v5574
      %v5585 = vmax.f32 %v5577, 0.0
      %v5586 = vmax.f32 %v5578, 0.0
      %v5587 = vmax.f32 %v5579, 0.0
      %v5588 = vmax.f32 %v5580, 0.0
      %v5589 = vmax.f32 %v5581, 0.0
      %v5590 = vmax.f32 %v5582, 0.0
      %v5591 = vmax.f32 %v5583, 0.0
      %v5592 = vmax.f32 %v5584, 0.0
      %5593 = vst.msk [vmem:[%s305] sm:$0xff] %vm3947, %v5585
      %5594 = vst.msk [vmem:[%s305 + $0x8] sm:$0xff] %vm3947, %v5586
      %5595 = vst.msk [vmem:[%s305 + $0x10] sm:$0xff] %vm3947, %v5587
      %5596 = vst.msk [vmem:[%s305 + $0x18] sm:$0xff] %vm3947, %v5588
      %5597 = vst.msk [vmem:[%s305 + $0x20] sm:$0xff] %vm3947, %v5589
      %5598 = vst.msk [vmem:[%s305 + $0x28] sm:$0xff] %vm3947, %v5590
      %5599 = vst.msk [vmem:[%s305 + $0x30] sm:$0xff] %vm3947, %v5591
      %5600 = vst.msk [vmem:[%s305 + $0x38] sm:$0xff] %vm3947, %v5592
      %p5601 = scmp.lt.s32.totalorder %s19, 1
      %s5602 = scalar_select %p5601, %s19, 1
      %s5603 = smul.addr %s5602, 8
      %s5604 = smul.addr %s5603, 8
      %s5605 = scalar_lea.vmem %s8, %s5604
      // Predicated region
      $region53: #{residual_block_forward.1} parent=51 // pred_check
        %p5606 = pneg %p210
      $region54: #{residual_block_forward.1} parent=51 // pred_check_branch
        %5608 = sbr.rel (%p5606) target = $region56
      $region55: #{residual_block_forward.1} parent=51 // pred_region
        _
      $region56: #{residual_block_forward.1} parent=51 // pred_fallthru
        _
    $region52: #{residual_block_forward.1} parent=5 // pred_fallthru
      _
    %p5609 = scmp.le.s32.totalorder 2, %s14
    // Predicated region
    $region57: #{residual_block_forward.1} parent=5 // pred_check
      %p5610 = pneg %p5609
    $region58: #{residual_block_forward.1} parent=5 // pred_check_branch
      %5612 = sbr.rel (%p5610) target = $region60
    $region59: #{residual_block_forward.1} parent=5 // pred_region
      %s5613 = ssub.s32 %s14, 2
      // Predicated region
      $region61: #{residual_block_forward.1} parent=59 // pred_check
        %p5614 = pneg %p216
      $region62: #{residual_block_forward.1} parent=59 // pred_check_branch
        %5616 = sbr.rel (%p5614) target = $region64
      $region63: #{residual_block_forward.1} parent=59 // pred_region
        %p5617 = scmp.lt.s32.totalorder %s20, 1
        %s5618 = scalar_select %p5617, %s20, 1
        %s5619 = smul.addr %s5618, 8
        %s5620 = smul.addr %s5619, 8
        %s5621 = scalar_lea.vmem %s8, %s5620
      $region64: #{residual_block_forward.1} parent=59 // pred_fallthru
        _
    $region60: #{residual_block_forward.1} parent=5 // pred_fallthru
      _
  $region6: #{residual_block_forward.1} parent=0 // loop_footer
    %s18 = sadd.s32 1, %s14
  $region7: #{residual_block_forward.1} parent=0 // loop_footer_branch
    %13 = sbr.rel target = $region3
  $region8: #{residual_block_forward.1} parent=0 // loop_exit
    _

</llo_original>
